<compile_context>
chip_gen: v6e
topology: v6e:2x2x1
jax: 0.10.0
libtpu: 0.0.40
codegen_flags: <defaults>
</compile_context>

<pallas_src>
import math
from functools import partial

import numpy as np
import jax
import jax.numpy as jnp
from jax.experimental import pallas as pl
from jax.experimental.pallas import tpu as pltpu


def _round_up(x, m):
    return ((x + m - 1) // m) * m


_VMEM_LIMIT = 32 * 1024 * 1024  # generous headroom, safe on v5e/v6e/v7x


# -----------------------------------------------------------------------------
# Kernel 1: padded x_cat assembly + fused qkv projection + token_trans
# -----------------------------------------------------------------------------
def pre_linears_kernel(prompts_ref, pixels_ref, wqkv_ref, wtt_ref, btt_ref,
                       qkv_ref, cp_ref, xcat_ref, *,
                       batch, n_prompt, n_pixel, n_pad):
    c = prompts_ref.shape[-1]
    pad_rows = n_pad - n_prompt - n_pixel
    # Assemble [prompts ; pixels ; zero-pad] per batch directly in VMEM scratch
    # (avoids the jnp.concatenate HBM materialization of the previous version).
    for b in range(batch):
        base = b * n_pad
        xcat_ref[base:base + n_prompt, :] = \
            prompts_ref[b * n_prompt:(b + 1) * n_prompt, :]
        xcat_ref[base + n_prompt:base + n_prompt + n_pixel, :] = \
            pixels_ref[b * n_pixel:(b + 1) * n_pixel, :]
        if pad_rows > 0:
            xcat_ref[base + n_prompt + n_pixel:base + n_pad, :] = \
                jnp.zeros((pad_rows, c), dtype=xcat_ref.dtype)

    # One big MXU matmul for every batch/token at once (bf16 operands, f32 acc).
    x_bf = xcat_ref[...].astype(jnp.bfloat16)                  # (B*Npad, C)
    qkv_ref[...] = jnp.dot(x_bf, wqkv_ref[...],
                           preferred_element_type=jnp.float32).astype(qkv_ref.dtype)

    # token_trans fused in (prompts of all batches as one tall matmul).
    tp_bf = prompts_ref[...].astype(jnp.bfloat16)              # (B*nT, C)
    cp = jnp.dot(tp_bf, wtt_ref[...],
                 preferred_element_type=jnp.float32) + btt_ref[...]
    cp_ref[...] = cp.astype(cp_ref.dtype)


def pre_linears(prompts_flat, pixels_flat, wqkv_bf16, wtt_bf16, btt,
                *, batch, n_prompt, n_pixel, n_pad):
    BnT, C = prompts_flat.shape
    three_c = wqkv_bf16.shape[1]
    P = wtt_bf16.shape[1]
    kern = partial(pre_linears_kernel, batch=batch, n_prompt=n_prompt,
                   n_pixel=n_pixel, n_pad=n_pad)
    return pl.pallas_call(
        kern,
        out_shape=(jax.ShapeDtypeStruct((batch * n_pad, three_c), jnp.bfloat16),
                   jax.ShapeDtypeStruct((BnT, P), jnp.float32)),
        grid=(1,),
        in_specs=[
            pl.BlockSpec((BnT, C), lambda i: (0, 0)),
            pl.BlockSpec((batch * n_pixel, C), lambda i: (0, 0)),
            pl.BlockSpec((C, three_c), lambda i: (0, 0)),
            pl.BlockSpec((C, P), lambda i: (0, 0)),
            pl.BlockSpec((1, P), lambda i: (0, 0)),
        ],
        out_specs=(pl.BlockSpec((batch * n_pad, three_c), lambda i: (0, 0)),
                   pl.BlockSpec((BnT, P), lambda i: (0, 0))),
        scratch_shapes=[pltpu.VMEM((batch * n_pad, C), jnp.float32)],
        compiler_params=pltpu.CompilerParams(
            dimension_semantics=("arbitrary",),
            vmem_limit_bytes=_VMEM_LIMIT),
    )(prompts_flat, pixels_flat, wqkv_bf16, wtt_bf16, btt)


# -----------------------------------------------------------------------------
# Kernel 2: spatial attention core (all heads batched, padded lane-dense scores)
# -----------------------------------------------------------------------------
def spa_core_kernel(q_ref, k_ref, v_ref, raw_ref, attn_ref, y_ref, *,
                    scale, n_real):
    q = q_ref[...]                                   # (H, N, hd)  bf16
    k = k_ref[...]                                   # (H, Npad, hd) bf16
    v = v_ref[...]                                   # (H, Npad, hd) bf16

    # Head-batched score matmul, f32 accumulation, lane-dense (Npad) last dim.
    raw = jnp.einsum('hnd,hmd->hnm', q, k,
                     preferred_element_type=jnp.float32)       # (H, N, Npad)
    raw_ref[...] = raw

    npad = raw.shape[-1]
    col = jax.lax.broadcasted_iota(jnp.int32, (1, 1, npad), 2)
    neg = jnp.where(col >= n_real, jnp.float32(-1e30), jnp.float32(0.0))
    s = raw * scale + neg                            # mask padded key columns
    s = s - jnp.max(s, axis=-1, keepdims=True)
    e = jnp.exp(s)
    a = e * pl.reciprocal(jnp.sum(e, axis=-1, keepdims=True), approx=True)
    attn_ref[...] = a

    y = jnp.einsum('hnm,hmd->hnd', a.astype(v.dtype), v,
                   preferred_element_type=jnp.float32)         # (H, N, hd)
    y_ref[...] = y.astype(y_ref.dtype)


def spatial_attention_core(q, k, v, *, scale, n_real):
    B, H, N, hd = q.shape
    Npad = k.shape[2]
    kern = partial(spa_core_kernel, scale=scale, n_real=n_real)
    return pl.pallas_call(
        kern,
        out_shape=(jax.ShapeDtypeStruct((B, H, N, Npad), jnp.float32),
                   jax.ShapeDtypeStruct((B, H, N, Npad), jnp.float32),
                   jax.ShapeDtypeStruct((B, H, N, hd), jnp.bfloat16)),
        grid=(B,),
        in_specs=[
            pl.BlockSpec((None, H, N, hd), lambda b: (b, 0, 0, 0)),
            pl.BlockSpec((None, H, Npad, hd), lambda b: (b, 0, 0, 0)),
            pl.BlockSpec((None, H, Npad, hd), lambda b: (b, 0, 0, 0)),
        ],
        out_specs=(
            pl.BlockSpec((None, H, N, Npad), lambda b: (b, 0, 0, 0)),
            pl.BlockSpec((None, H, N, Npad), lambda b: (b, 0, 0, 0)),
            pl.BlockSpec((None, H, N, hd), lambda b: (b, 0, 0, 0)),
        ),
        compiler_params=pltpu.CompilerParams(
            dimension_semantics=("parallel",),
            vmem_limit_bytes=_VMEM_LIMIT),
    )(q, k, v)


# -----------------------------------------------------------------------------
# Kernel 3: windowed channel attention (all G windows per batch in one step)
# -----------------------------------------------------------------------------
def chan_attn_kernel(q_ref, k_ref, raw_ref, attn_ref, *, chan_scale):
    q = q_ref[...].astype(jnp.float32)               # (G, T, hw)
    k = k_ref[...].astype(jnp.float32)               # (G, C, hw)
    raw = jnp.einsum('gtx,gcx->gtc', q, k,
                     preferred_element_type=jnp.float32)       # (G, T, C)
    raw_ref[...] = raw
    s = raw * chan_scale
    s = s - jnp.max(s, axis=-1, keepdims=True)
    e = jnp.exp(s)
    attn_ref[...] = e * pl.reciprocal(jnp.sum(e, axis=-1, keepdims=True),
                                      approx=True)
    # NOTE: the PyTorch module also computes `chan_x = attn @ v` but never uses
    # it in any returned value -> the dead matmul + HBM writeback is dropped.


def channel_attention(q, k, chan_scale):
    B, G, T, HW = q.shape
    C = k.shape[2]
    kern = partial(chan_attn_kernel, chan_scale=chan_scale)
    return pl.pallas_call(
        kern,
        out_shape=(jax.ShapeDtypeStruct((B, G, T, C), jnp.float32),
                   jax.ShapeDtypeStruct((B, G, T, C), jnp.float32)),
        grid=(B,),
        in_specs=[
            pl.BlockSpec((None, G, T, HW), lambda b: (b, 0, 0, 0)),
            pl.BlockSpec((None, G, C, HW), lambda b: (b, 0, 0, 0)),
        ],
        out_specs=(
            pl.BlockSpec((None, G, T, C), lambda b: (b, 0, 0, 0)),
            pl.BlockSpec((None, G, T, C), lambda b: (b, 0, 0, 0)),
        ),
        compiler_params=pltpu.CompilerParams(
            dimension_semantics=("parallel",),
            vmem_limit_bytes=_VMEM_LIMIT),
    )(q, k)


# -----------------------------------------------------------------------------
# Kernel 4: fused output projection + token_trans1 + residual add
# -----------------------------------------------------------------------------
def post_linears_kernel(ypix_ref, yprm_ref, cp_ref, wproj_ref, bproj_ref,
                        wtt1_ref, btt1_ref, xout_ref, tp_ref):
    wproj = wproj_ref[...]                           # (C, C) bf16
    bproj = bproj_ref[...]                           # (1, C) f32

    # proj() over all pixel tokens of all batches in one matmul.
    xout = jnp.dot(ypix_ref[...], wproj,
                   preferred_element_type=jnp.float32) + bproj
    xout_ref[...] = xout.astype(xout_ref.dtype)

    # proj() over the prompt tokens (residual for token_trans1).
    prompt_part = jnp.dot(yprm_ref[...], wproj,
                          preferred_element_type=jnp.float32) + bproj

    # token_trans1(chan_prompts) + residual
    tp = jnp.dot(cp_ref[...], wtt1_ref[...],
                 preferred_element_type=jnp.float32) + btt1_ref[...]
    tp_ref[...] = (prompt_part + tp).astype(tp_ref.dtype)


def post_linears(y_pixel, y_prompt, cp, wproj, bproj, wtt1, btt1):
    Mpix, C = y_pixel.shape
    Mprm = y_prompt.shape[0]
    P = cp.shape[1]
    return pl.pallas_call(
        post_linears_kernel,
        out_shape=(jax.ShapeDtypeStruct((Mpix, C), jnp.float32),
                   jax.ShapeDtypeStruct((Mprm, C), jnp.float32)),
        grid=(1,),
        in_specs=[
            pl.BlockSpec((Mpix, C), lambda i: (0, 0)),
            pl.BlockSpec((Mprm, C), lambda i: (0, 0)),
            pl.BlockSpec((Mprm, P), lambda i: (0, 0)),
            pl.BlockSpec((C, C), lambda i: (0, 0)),
            pl.BlockSpec((1, C), lambda i: (0, 0)),
            pl.BlockSpec((P, C), lambda i: (0, 0)),
            pl.BlockSpec((1, C), lambda i: (0, 0)),
        ],
        out_specs=(pl.BlockSpec((Mpix, C), lambda i: (0, 0)),
                   pl.BlockSpec((Mprm, C), lambda i: (0, 0))),
        compiler_params=pltpu.CompilerParams(
            dimension_semantics=("arbitrary",),
            vmem_limit_bytes=_VMEM_LIMIT),
    )(y_pixel, y_prompt, cp, wproj, bproj, wtt1, btt1)


# -----------------------------------------------------------------------------
# Full forward (glue in plain JAX, compute in Pallas)
# -----------------------------------------------------------------------------
def attention_forward(x, task_prompts, params, *, num_heads, chan_nheads, resolution):
    B, _, C = x.shape
    _, nT, _ = task_prompts.shape
    H = num_heads
    hd = C // H
    scale = hd ** (-0.5)
    res_h, res_w = resolution
    P = res_h * res_w
    chan_scale = (P // chan_nheads) ** (-0.5)
    N = nT + P
    Npad = _round_up(N, 128)               # lane-dense score last dim

    cdt = jnp.bfloat16
    wqkv = params["w_qkv_t"].astype(cdt)
    wproj = params["w_proj_t"].astype(cdt)
    wtt = params["w_tt_t"].astype(cdt)
    wtt1 = params["w_tt1_t"].astype(cdt)

    prompts_flat = task_prompts.reshape(B * nT, C)
    pixels = x[:, -P:, :]
    pixels_flat = pixels.reshape(B * P, C)

    # --- kernel 1: qkv projection (padded tokens) + token_trans --------------
    qkv_flat, chan_prompts_flat = pre_linears(
        prompts_flat, pixels_flat, wqkv, wtt, params["b_tt"],
        batch=B, n_prompt=nT, n_pixel=P, n_pad=Npad)

    # head-major q/k/v (tiny tensors; XLA glue, as in the torch .reshape/.permute)
    qkv5 = qkv_flat.reshape(B, Npad, 3, H, hd)
    qkv5 = jnp.transpose(qkv5, (2, 0, 3, 1, 4))      # (3, B, H, Npad, hd)
    q = qkv5[0, :, :, :N, :]                          # (B, H, N, hd)
    k = qkv5[1]                                       # (B, H, Npad, hd)
    v = qkv5[2]

    # --- kernel 2: spatial attention core ------------------------------------
    raw_pad, attn_pad, y_heads = spatial_attention_core(q, k, v, scale=scale, n_real=N)
    raw_spa = raw_pad[:, :, :, :N]
    spa_attn = attn_pad[:, :, :, :N]

    # (B,H,N,hd) -> (B,N,C)  (matches torch `(attn@v).transpose(1,2).reshape`)
    y_cat = jnp.transpose(y_heads, (0, 2, 1, 3)).reshape(B, N, C)
    y_prompt = y_cat[:, :nT, :].reshape(B * nT, C)
    y_pixel = y_cat[:, nT:, :].reshape(B * P, C)

    # --- kernel 3: windowed channel attention ---------------------------------
    chan_prompts = chan_prompts_flat.reshape(B, nT, P)
    nh = nw = int(math.isqrt(chan_nheads))
    win_h, win_w = res_h // nh, res_w // nw
    G, hw = nh * nw, win_h * win_w

    def window_split(t):  # 'b t (nh h nw w) -> b (nh nw) t (h w)'
        Bt, Tt, _ = t.shape
        t = t.reshape(Bt, Tt, nh, win_h, nw, win_w)
        t = jnp.transpose(t, (0, 2, 4, 1, 3, 5))
        return t.reshape(Bt, G, Tt, hw)

    q_c = window_split(chan_prompts)                          # (B, G, nT, hw)
    k_c = window_split(jnp.transpose(pixels, (0, 2, 1)))      # (B, G, C, hw)  (v == k)

    raw_chan, chan_attn = channel_attention(q_c, k_c, chan_scale)

    def head_to_grid(t):  # 'b (nh nw) t c -> b t c nh nw'
        Bt, Gt, Tt, Ct = t.shape
        t = t.reshape(Bt, nh, nw, Tt, Ct)
        return jnp.transpose(t, (0, 3, 4, 1, 2))

    raw_chan_r = head_to_grid(raw_chan)
    chan_attn_r = head_to_grid(chan_attn)

    # --- kernel 4: proj + token_trans1 + residual ------------------------------
    x_out_flat, tp_flat = post_linears(
        y_pixel, y_prompt, chan_prompts_flat.astype(cdt),
        wproj, params["b_proj"], wtt1, params["b_tt1"])

    x_out = x_out_flat.reshape(B, P, C)
    tp_out = tp_flat.reshape(B, nT, C)

    # TODO(synk): attn_drop / proj_drop are identity at inference (p=0.0 here).
    raw_attn = [(raw_spa, spa_attn), (raw_chan_r, chan_attn_r)]
    return x_out, raw_attn, tp_out


# -----------------------------------------------------------------------------
# Pure-JAX reference (mirrors the PyTorch forward) for verification
# -----------------------------------------------------------------------------
def reference_forward(x, task_prompts, params, *, num_heads, chan_nheads, resolution):
    B, _, C = x.shape
    H = num_heads
    hd = C // H
    scale = hd ** (-0.5)
    res_h, res_w = resolution
    P = res_h * res_w
    chan_scale = (P // chan_nheads) ** (-0.5)

    x_cat = jnp.concatenate([task_prompts, x], axis=1)
    N = x_cat.shape[1]
    qkv = x_cat @ params["w_qkv_t"]
    qkv = qkv.reshape(B, N, 3, H, hd).transpose(2, 0, 3, 1, 4)
    q, k, v = qkv[0], qkv[1], qkv[2]
    raw_spa = q @ jnp.swapaxes(k, -2, -1)
    attn = jax.nn.softmax(raw_spa * scale, axis=-1)
    y = (attn @ v).transpose(0, 2, 1, 3).reshape(B, N, C)
    y = y @ params["w_proj_t"] + params["b_proj"][0]
    prompt_part, x_out = y[:, :-P, :], y[:, -P:, :]

    chan_x = x[:, -P:, :]
    chan_prompts = task_prompts @ params["w_tt_t"] + params["b_tt"][0]
    nh = nw = int(math.isqrt(chan_nheads))
    wh, ww = res_h // nh, res_w // nw

    def split(t):
        Bt, Tt, _ = t.shape
        return (t.reshape(Bt, Tt, nh, wh, nw, ww)
                 .transpose(0, 2, 4, 1, 3, 5)
                 .reshape(Bt, nh * nw, Tt, wh * ww))

    qc = split(chan_prompts)
    kc = split(jnp.swapaxes(chan_x, 1, 2))
    raw_chan = qc @ jnp.swapaxes(kc, -2, -1)
    attn_c = jax.nn.softmax(raw_chan * chan_scale, axis=-1)

    def h2g(t):
        Bt, Gt, Tt, Ct = t.shape
        return t.reshape(Bt, nh, nw, Tt, Ct).transpose(0, 3, 4, 1, 2)

    tp = prompt_part + (chan_prompts @ params["w_tt1_t"] + params["b_tt1"][0])
    return x_out, [(raw_spa, attn), (h2g(raw_chan), h2g(attn_c))], tp


# -----------------------------------------------------------------------------
if __name__ == "__main__":
    B = 2
    dim = 32            # C
    num_heads = 4       # head_dim = 8
    resolution = (8, 8)
    pixel_no = resolution[0] * resolution[1]   # 64
    chan_nheads = 4     # nh = nw = 2, window 4x4 -> hw = 16
    nT = 8              # number of task-prompt tokens

    key = jax.random.PRNGKey(0)
    keys = jax.random.split(key, 10)

    # PyTorch Linear convention: y = x @ W^T + b
    w_qkv = 0.05 * jax.random.normal(keys[0], (3 * dim, dim), jnp.float32)   # qkv_bias=False
    w_proj = 0.05 * jax.random.normal(keys[1], (dim, dim), jnp.float32)
    b_proj = 0.05 * jax.random.normal(keys[2], (dim,), jnp.float32)
    w_tt = 0.05 * jax.random.normal(keys[3], (pixel_no, dim), jnp.float32)
    b_tt = 0.05 * jax.random.normal(keys[4], (pixel_no,), jnp.float32)
    w_tt1 = 0.05 * jax.random.normal(keys[5], (dim, pixel_no), jnp.float32)
    b_tt1 = 0.05 * jax.random.normal(keys[6], (dim,), jnp.float32)

    params = {
        "w_qkv_t": w_qkv.T,                   # (C, 3C)
        "w_proj_t": w_proj.T,                 # (C, C)
        "b_proj": b_proj.reshape(1, dim),
        "w_tt_t": w_tt.T,                     # (C, P)
        "b_tt": b_tt.reshape(1, pixel_no),
        "w_tt1_t": w_tt1.T,                   # (P, C)
        "b_tt1": b_tt1.reshape(1, dim),
    }

    x = jax.random.normal(keys[7], (B, pixel_no, dim), jnp.float32)
    task_prompts = jax.random.normal(keys[8], (B, nT, dim), jnp.float32)

    fwd = jax.jit(partial(attention_forward, num_heads=num_heads,
                          chan_nheads=chan_nheads, resolution=resolution))
    x_out, raw_attn, tp_out = fwd(x, task_prompts, params)
    jax.block_until_ready((x_out, raw_attn, tp_out))

    # Verify against the pure-JAX (f32) reference.  Tolerances account for the
    # bf16 matmul operands used on the hot paths.
    x_ref, raw_ref, tp_ref = reference_forward(
        x, task_prompts, params,
        num_heads=num_heads, chan_nheads=chan_nheads, resolution=resolution)

    tol = dict(atol=3e-2, rtol=3e-2)
    np.testing.assert_allclose(np.asarray(x_out), np.asarray(x_ref), **tol)
    np.testing.assert_allclose(np.asarray(tp_out), np.asarray(tp_ref), **tol)
    np.testing.assert_allclose(np.asarray(raw_attn[0][0]), np.asarray(raw_ref[0][0]), **tol)
    np.testing.assert_allclose(np.asarray(raw_attn[0][1]), np.asarray(raw_ref[0][1]), **tol)
    np.testing.assert_allclose(np.asarray(raw_attn[1][0]), np.asarray(raw_ref[1][0]), **tol)
    np.testing.assert_allclose(np.asarray(raw_attn[1][1]), np.asarray(raw_ref[1][1]), **tol)

    print("KERNEL_OK")
</pallas_src>

<mosaic_0001>
module attributes {stable_mosaic.version = 11 : i64} {
  func.func @pre_linears_kernel(%arg0: i32, %arg1: memref<16x32xf32, #tpu.memory_space<vmem>>, %arg2: memref<128x32xf32, #tpu.memory_space<vmem>>, %arg3: memref<32x96xbf16, #tpu.memory_space<vmem>>, %arg4: memref<32x64xbf16, #tpu.memory_space<vmem>>, %arg5: memref<1x64xf32, #tpu.memory_space<vmem>>, %arg6: memref<256x96xbf16, #tpu.memory_space<vmem>>, %arg7: memref<16x64xf32, #tpu.memory_space<vmem>>, %arg8: memref<256x32xf32, #tpu.memory_space<vmem>>) attributes {dimension_semantics = [#tpu.dimension_semantics<arbitrary>], iteration_bounds = array<i64: 1>, scalar_prefetch = 0 : i64, scratch_operands = 1 : i64, tpu.core_type = #tpu.core_type<tc>, window_params = [{pipeline_mode = #tpu.pipeline_mode<synchronous>, transform_indices = @transform_0, window_bounds = array<i64: 16, 32>}, {pipeline_mode = #tpu.pipeline_mode<synchronous>, transform_indices = @transform_1, window_bounds = array<i64: 128, 32>}, {pipeline_mode = #tpu.pipeline_mode<synchronous>, transform_indices = @transform_2, window_bounds = array<i64: 32, 96>}, {pipeline_mode = #tpu.pipeline_mode<synchronous>, transform_indices = @transform_3, window_bounds = array<i64: 32, 64>}, {pipeline_mode = #tpu.pipeline_mode<synchronous>, transform_indices = @transform_4, window_bounds = array<i64: 1, 64>}, {pipeline_mode = #tpu.pipeline_mode<synchronous>, transform_indices = @transform_5, window_bounds = array<i64: 256, 96>}, {pipeline_mode = #tpu.pipeline_mode<synchronous>, transform_indices = @transform_6, window_bounds = array<i64: 16, 64>}]} {
    %c0 = arith.constant 0 : index
    %c0_0 = arith.constant 0 : index
    %0 = vector.load %arg1[%c0, %c0_0] : memref<16x32xf32, #tpu.memory_space<vmem>>, vector<8x32xf32>
    %c0_1 = arith.constant 0 : index
    %c0_2 = arith.constant 0 : index
    %1 = vector.load %arg8[%c0_1, %c0_2] : memref<256x32xf32, #tpu.memory_space<vmem>>, vector<8x32xf32>
    tpu.vector_store %arg8[%c0_1, %c0_2], %0 {strides = array<i32>} : memref<256x32xf32, #tpu.memory_space<vmem>>, vector<8x32xf32>,
    %c0_3 = arith.constant 0 : index
    %c0_4 = arith.constant 0 : index
    %2 = vector.load %arg2[%c0_3, %c0_4] : memref<128x32xf32, #tpu.memory_space<vmem>>, vector<64x32xf32>
    %c8 = arith.constant 8 : index
    %c0_5 = arith.constant 0 : index
    %3 = vector.load %arg8[%c8, %c0_5] : memref<256x32xf32, #tpu.memory_space<vmem>>, vector<64x32xf32>
    tpu.vector_store %arg8[%c8, %c0_5], %2 {strides = array<i32>} : memref<256x32xf32, #tpu.memory_space<vmem>>, vector<64x32xf32>,
    %cst = arith.constant 0.000000e+00 : f32
    %4 = vector.broadcast %cst : f32 to vector<56x32xf32>
    %c72 = arith.constant 72 : index
    %c0_6 = arith.constant 0 : index
    %5 = vector.load %arg8[%c72, %c0_6] : memref<256x32xf32, #tpu.memory_space<vmem>>, vector<56x32xf32>
    tpu.vector_store %arg8[%c72, %c0_6], %4 {strides = array<i32>} : memref<256x32xf32, #tpu.memory_space<vmem>>, vector<56x32xf32>,
    %c8_7 = arith.constant 8 : index
    %c0_8 = arith.constant 0 : index
    %6 = vector.load %arg1[%c8_7, %c0_8] : memref<16x32xf32, #tpu.memory_space<vmem>>, vector<8x32xf32>
    %c128 = arith.constant 128 : index
    %c0_9 = arith.constant 0 : index
    %7 = vector.load %arg8[%c128, %c0_9] : memref<256x32xf32, #tpu.memory_space<vmem>>, vector<8x32xf32>
    tpu.vector_store %arg8[%c128, %c0_9], %6 {strides = array<i32>} : memref<256x32xf32, #tpu.memory_space<vmem>>, vector<8x32xf32>,
    %c64 = arith.constant 64 : index
    %c0_10 = arith.constant 0 : index
    %8 = vector.load %arg2[%c64, %c0_10] : memref<128x32xf32, #tpu.memory_space<vmem>>, vector<64x32xf32>
    %c136 = arith.constant 136 : index
    %c0_11 = arith.constant 0 : index
    %9 = vector.load %arg8[%c136, %c0_11] : memref<256x32xf32, #tpu.memory_space<vmem>>, vector<64x32xf32>
    tpu.vector_store %arg8[%c136, %c0_11], %8 {strides = array<i32>} : memref<256x32xf32, #tpu.memory_space<vmem>>, vector<64x32xf32>,
    %cst_12 = arith.constant 0.000000e+00 : f32
    %10 = vector.broadcast %cst_12 : f32 to vector<56x32xf32>
    %c200 = arith.constant 200 : index
    %c0_13 = arith.constant 0 : index
    %11 = vector.load %arg8[%c200, %c0_13] : memref<256x32xf32, #tpu.memory_space<vmem>>, vector<56x32xf32>
    tpu.vector_store %arg8[%c200, %c0_13], %10 {strides = array<i32>} : memref<256x32xf32, #tpu.memory_space<vmem>>, vector<56x32xf32>,
    %c0_14 = arith.constant 0 : index
    %c0_15 = arith.constant 0 : index
    %12 = vector.load %arg8[%c0_14, %c0_15] : memref<256x32xf32, #tpu.memory_space<vmem>>, vector<256x32xf32>
    %13 = arith.truncf %12 : vector<256x32xf32> to vector<256x32xbf16>
    %c0_16 = arith.constant 0 : index
    %c0_17 = arith.constant 0 : index
    %14 = vector.load %arg3[%c0_16, %c0_17] : memref<32x96xbf16, #tpu.memory_space<vmem>>, vector<32x96xbf16>
    %cst_18 = arith.constant dense<0.000000e+00> : vector<256x96xf32>
    %15 = tpu.matmul %13, %14, %cst_18 {dimension_numbers = #tpu.dot_dimension_numbers<[1], [0], [0], [1], [0, 0, 1, 1], [], []>} : vector<256x32xbf16>, vector<32x96xbf16>, vector<256x96xf32> -> vector<256x96xf32>
    %16 = arith.truncf %15 : vector<256x96xf32> to vector<256x96xbf16>
    %c0_19 = arith.constant 0 : index
    %c0_20 = arith.constant 0 : index
    %17 = vector.load %arg6[%c0_19, %c0_20] : memref<256x96xbf16, #tpu.memory_space<vmem>>, vector<256x96xbf16>
    tpu.vector_store %arg6[%c0_19, %c0_20], %16 {strides = array<i32>} : memref<256x96xbf16, #tpu.memory_space<vmem>>, vector<256x96xbf16>,
    %c0_21 = arith.constant 0 : index
    %c0_22 = arith.constant 0 : index
    %18 = vector.load %arg1[%c0_21, %c0_22] : memref<16x32xf32, #tpu.memory_space<vmem>>, vector<16x32xf32>
    %19 = arith.truncf %18 : vector<16x32xf32> to vector<16x32xbf16>
    %c0_23 = arith.constant 0 : index
    %c0_24 = arith.constant 0 : index
    %20 = vector.load %arg4[%c0_23, %c0_24] : memref<32x64xbf16, #tpu.memory_space<vmem>>, vector<32x64xbf16>
    %cst_25 = arith.constant dense<0.000000e+00> : vector<16x64xf32>
    %21 = tpu.matmul %19, %20, %cst_25 {dimension_numbers = #tpu.dot_dimension_numbers<[1], [0], [0], [1], [0, 0, 1, 1], [], []>} : vector<16x32xbf16>, vector<32x64xbf16>, vector<16x64xf32> -> vector<16x64xf32>
    %c0_26 = arith.constant 0 : index
    %c0_27 = arith.constant 0 : index
    %22 = vector.load %arg5[%c0_26, %c0_27] : memref<1x64xf32, #tpu.memory_space<vmem>>, vector<1x64xf32>
    %23 = vector.broadcast %22 : vector<1x64xf32> to vector<16x64xf32>
    %24 = arith.addf %21, %23 : vector<16x64xf32>
    %c0_28 = arith.constant 0 : index
    %c0_29 = arith.constant 0 : index
    %25 = vector.load %arg7[%c0_28, %c0_29] : memref<16x64xf32, #tpu.memory_space<vmem>>, vector<16x64xf32>
    tpu.vector_store %arg7[%c0_28, %c0_29], %24 {strides = array<i32>} : memref<16x64xf32, #tpu.memory_space<vmem>>, vector<16x64xf32>,
    return
  }
  func.func @transform_0(%arg0: i32) -> (i32, i32) {
    %c0_i32 = arith.constant 0 : i32
    %c0_i32_0 = arith.constant 0 : i32
    %c0_i32_1 = arith.constant 0 : i32
    return %c0_i32, %c0_i32_0 : i32, i32
  }
  func.func @transform_1(%arg0: i32) -> (i32, i32) {
    %c0_i32 = arith.constant 0 : i32
    %c0_i32_0 = arith.constant 0 : i32
    %c0_i32_1 = arith.constant 0 : i32
    return %c0_i32, %c0_i32_0 : i32, i32
  }
  func.func @transform_2(%arg0: i32) -> (i32, i32) {
    %c0_i32 = arith.constant 0 : i32
    %c0_i32_0 = arith.constant 0 : i32
    %c0_i32_1 = arith.constant 0 : i32
    return %c0_i32, %c0_i32_0 : i32, i32
  }
  func.func @transform_3(%arg0: i32) -> (i32, i32) {
    %c0_i32 = arith.constant 0 : i32
    %c0_i32_0 = arith.constant 0 : i32
    %c0_i32_1 = arith.constant 0 : i32
    return %c0_i32, %c0_i32_0 : i32, i32
  }
  func.func @transform_4(%arg0: i32) -> (i32, i32) {
    %c0_i32 = arith.constant 0 : i32
    %c0_i32_0 = arith.constant 0 : i32
    %c0_i32_1 = arith.constant 0 : i32
    return %c0_i32, %c0_i32_0 : i32, i32
  }
  func.func @transform_5(%arg0: i32) -> (i32, i32) {
    %c0_i32 = arith.constant 0 : i32
    %c0_i32_0 = arith.constant 0 : i32
    %c0_i32_1 = arith.constant 0 : i32
    return %c0_i32, %c0_i32_0 : i32, i32
  }
  func.func @transform_6(%arg0: i32) -> (i32, i32) {
    %c0_i32 = arith.constant 0 : i32
    %c0_i32_0 = arith.constant 0 : i32
    %c0_i32_1 = arith.constant 0 : i32
    return %c0_i32, %c0_i32_0 : i32, i32
  }
}

module attributes {stable_mosaic.version = 11 : i64} {
  func.func @spa_core_kernel(%arg0: i32, %arg1: memref<1x4x72x8xbf16, #tpu.memory_space<vmem>>, %arg2: memref<1x4x128x8xbf16, #tpu.memory_space<vmem>>, %arg3: memref<1x4x128x8xbf16, #tpu.memory_space<vmem>>, %arg4: memref<1x4x72x128xf32, #tpu.memory_space<vmem>>, %arg5: memref<1x4x72x128xf32, #tpu.memory_space<vmem>>, %arg6: memref<1x4x72x8xbf16, #tpu.memory_space<vmem>>) attributes {dimension_semantics = [#tpu.dimension_semantics<parallel>], iteration_bounds = array<i64: 2>, scalar_prefetch = 0 : i64, scratch_operands = 0 : i64, tpu.core_type = #tpu.core_type<tc>, window_params = [{transform_indices = @transform_0, window_bounds = array<i64: 1, 4, 72, 8>}, {transform_indices = @transform_1, window_bounds = array<i64: 1, 4, 128, 8>}, {transform_indices = @transform_2, window_bounds = array<i64: 1, 4, 128, 8>}, {transform_indices = @transform_3, window_bounds = array<i64: 1, 4, 72, 128>}, {transform_indices = @transform_4, window_bounds = array<i64: 1, 4, 72, 128>}, {transform_indices = @transform_5, window_bounds = array<i64: 1, 4, 72, 8>}]} {
    %c0 = arith.constant 0 : index
    %c0_0 = arith.constant 0 : index
    %c0_1 = arith.constant 0 : index
    %c0_2 = arith.constant 0 : index
    %0 = vector.load %arg1[%c0, %c0_0, %c0_1, %c0_2] : memref<1x4x72x8xbf16, #tpu.memory_space<vmem>>, vector<1x4x72x8xbf16>
    %1 = vector.shape_cast %0 : vector<1x4x72x8xbf16> to vector<4x72x8xbf16>
    %c0_3 = arith.constant 0 : index
    %c0_4 = arith.constant 0 : index
    %c0_5 = arith.constant 0 : index
    %c0_6 = arith.constant 0 : index
    %2 = vector.load %arg2[%c0_3, %c0_4, %c0_5, %c0_6] : memref<1x4x128x8xbf16, #tpu.memory_space<vmem>>, vector<1x4x128x8xbf16>
    %3 = vector.shape_cast %2 : vector<1x4x128x8xbf16> to vector<4x128x8xbf16>
    %c0_7 = arith.constant 0 : index
    %c0_8 = arith.constant 0 : index
    %c0_9 = arith.constant 0 : index
    %c0_10 = arith.constant 0 : index
    %4 = vector.load %arg3[%c0_7, %c0_8, %c0_9, %c0_10] : memref<1x4x128x8xbf16, #tpu.memory_space<vmem>>, vector<1x4x128x8xbf16>
    %5 = vector.shape_cast %4 : vector<1x4x128x8xbf16> to vector<4x128x8xbf16>
    "tpu.trace_start"() <{level = 10 : i32, message = "hnd,hmd->hnm"}> : () -> ()
    %cst = arith.constant dense<0.000000e+00> : vector<4x72x128xf32>
    %6 = tpu.matmul %1, %3, %cst {dimension_numbers = #tpu.dot_dimension_numbers<[2], [2], [1], [1], [0, 0, 0, 1, 1, 1], [0], [0]>} : vector<4x72x8xbf16>, vector<4x128x8xbf16>, vector<4x72x128xf32> -> vector<4x72x128xf32>
    "tpu.trace_stop"() : () -> ()
    %c0_11 = arith.constant 0 : index
    %c0_12 = arith.constant 0 : index
    %c0_13 = arith.constant 0 : index
    %c0_14 = arith.constant 0 : index
    %7 = vector.load %arg4[%c0_11, %c0_12, %c0_13, %c0_14] : memref<1x4x72x128xf32, #tpu.memory_space<vmem>>, vector<1x4x72x128xf32>
    %8 = vector.shape_cast %7 : vector<1x4x72x128xf32> to vector<4x72x128xf32>
    %9 = vector.shape_cast %6 : vector<4x72x128xf32> to vector<1x4x72x128xf32>
    tpu.vector_store %arg4[%c0_11, %c0_12, %c0_13, %c0_14], %9 {strides = array<i32>} : memref<1x4x72x128xf32, #tpu.memory_space<vmem>>, vector<1x4x72x128xf32>,
    %10 = tpu.iota {dimensions = array<i32: 2>} : vector<1x1x128xi32>
    %c72_i32 = arith.constant 72 : i32
    %11 = vector.broadcast %c72_i32 : i32 to vector<1x1x128xi32>
    %12 = arith.cmpi sge, %10, %11 : vector<1x1x128xi32>
    %cst_15 = arith.constant -1.000000e+30 : f32
    %cst_16 = arith.constant 0.000000e+00 : f32
    %13 = vector.broadcast %cst_15 : f32 to vector<1x1x128xf32>
    %14 = vector.broadcast %cst_16 : f32 to vector<1x1x128xf32>
    %15 = arith.select %12, %13, %14 : vector<1x1x128xi1>, vector<1x1x128xf32>
    %cst_17 = arith.constant 0.353553385 : f32
    %16 = vector.broadcast %cst_17 : f32 to vector<4x72x128xf32>
    %17 = arith.mulf %6, %16 : vector<4x72x128xf32>
    %18 = vector.broadcast %15 : vector<1x1x128xf32> to vector<4x72x128xf32>
    %19 = arith.addf %17, %18 : vector<4x72x128xf32>
    %cst_18 = arith.constant dense<0xFF800000> : vector<4x72xf32>
    %20 = vector.multi_reduction <maximumf>, %19, %cst_18 [2] : vector<4x72x128xf32> to vector<4x72xf32>
    %21 = vector.shape_cast %20 : vector<4x72xf32> to vector<4x72x1xf32>
    %22 = vector.broadcast %21 : vector<4x72x1xf32> to vector<4x72x128xf32>
    %23 = arith.subf %19, %22 : vector<4x72x128xf32>
    %24 = math.exp %23 : vector<4x72x128xf32>
    %cst_19 = arith.constant dense<0.000000e+00> : vector<4x72xf32>
    %25 = vector.multi_reduction <add>, %24, %cst_19 [2] : vector<4x72x128xf32> to vector<4x72xf32>
    %26 = vector.shape_cast %25 : vector<4x72xf32> to vector<4x72x1xf32>
    %27 = tpu.reciprocal %26 {approx = true} : vector<4x72x1xf32> -> vector<4x72x1xf32>
    %28 = vector.broadcast %27 : vector<4x72x1xf32> to vector<4x72x128xf32>
    %29 = arith.mulf %24, %28 : vector<4x72x128xf32>
    %c0_20 = arith.constant 0 : index
    %c0_21 = arith.constant 0 : index
    %c0_22 = arith.constant 0 : index
    %c0_23 = arith.constant 0 : index
    %30 = vector.load %arg5[%c0_20, %c0_21, %c0_22, %c0_23] : memref<1x4x72x128xf32, #tpu.memory_space<vmem>>, vector<1x4x72x128xf32>
    %31 = vector.shape_cast %30 : vector<1x4x72x128xf32> to vector<4x72x128xf32>
    %32 = vector.shape_cast %29 : vector<4x72x128xf32> to vector<1x4x72x128xf32>
    tpu.vector_store %arg5[%c0_20, %c0_21, %c0_22, %c0_23], %32 {strides = array<i32>} : memref<1x4x72x128xf32, #tpu.memory_space<vmem>>, vector<1x4x72x128xf32>,
    %33 = arith.truncf %29 : vector<4x72x128xf32> to vector<4x72x128xbf16>
    "tpu.trace_start"() <{level = 10 : i32, message = "hnm,hmd->hnd"}> : () -> ()
    %cst_24 = arith.constant dense<0.000000e+00> : vector<4x72x8xf32>
    %34 = tpu.matmul %33, %5, %cst_24 {dimension_numbers = #tpu.dot_dimension_numbers<[2], [1], [1], [2], [0, 0, 0, 1, 1, 2], [0], [0]>} : vector<4x72x128xbf16>, vector<4x128x8xbf16>, vector<4x72x8xf32> -> vector<4x72x8xf32>
    "tpu.trace_stop"() : () -> ()
    %35 = arith.truncf %34 : vector<4x72x8xf32> to vector<4x72x8xbf16>
    %c0_25 = arith.constant 0 : index
    %c0_26 = arith.constant 0 : index
    %c0_27 = arith.constant 0 : index
    %c0_28 = arith.constant 0 : index
    %36 = vector.load %arg6[%c0_25, %c0_26, %c0_27, %c0_28] : memref<1x4x72x8xbf16, #tpu.memory_space<vmem>>, vector<1x4x72x8xbf16>
    %37 = vector.shape_cast %36 : vector<1x4x72x8xbf16> to vector<4x72x8xbf16>
    %38 = vector.shape_cast %35 : vector<4x72x8xbf16> to vector<1x4x72x8xbf16>
    tpu.vector_store %arg6[%c0_25, %c0_26, %c0_27, %c0_28], %38 {strides = array<i32>} : memref<1x4x72x8xbf16, #tpu.memory_space<vmem>>, vector<1x4x72x8xbf16>,
    return
  }
  func.func @transform_0(%arg0: i32) -> (i32, i32, i32, i32) {
    %c0_i32 = arith.constant 0 : i32
    %c0_i32_0 = arith.constant 0 : i32
    %c0_i32_1 = arith.constant 0 : i32
    %c0_i32_2 = arith.constant 0 : i32
    return %arg0, %c0_i32, %c0_i32_0, %c0_i32_1 : i32, i32, i32, i32
  }
  func.func @transform_1(%arg0: i32) -> (i32, i32, i32, i32) {
    %c0_i32 = arith.constant 0 : i32
    %c0_i32_0 = arith.constant 0 : i32
    %c0_i32_1 = arith.constant 0 : i32
    %c0_i32_2 = arith.constant 0 : i32
    return %arg0, %c0_i32, %c0_i32_0, %c0_i32_1 : i32, i32, i32, i32
  }
  func.func @transform_2(%arg0: i32) -> (i32, i32, i32, i32) {
    %c0_i32 = arith.constant 0 : i32
    %c0_i32_0 = arith.constant 0 : i32
    %c0_i32_1 = arith.constant 0 : i32
    %c0_i32_2 = arith.constant 0 : i32
    return %arg0, %c0_i32, %c0_i32_0, %c0_i32_1 : i32, i32, i32, i32
  }
  func.func @transform_3(%arg0: i32) -> (i32, i32, i32, i32) {
    %c0_i32 = arith.constant 0 : i32
    %c0_i32_0 = arith.constant 0 : i32
    %c0_i32_1 = arith.constant 0 : i32
    %c0_i32_2 = arith.constant 0 : i32
    return %arg0, %c0_i32, %c0_i32_0, %c0_i32_1 : i32, i32, i32, i32
  }
  func.func @transform_4(%arg0: i32) -> (i32, i32, i32, i32) {
    %c0_i32 = arith.constant 0 : i32
    %c0_i32_0 = arith.constant 0 : i32
    %c0_i32_1 = arith.constant 0 : i32
    %c0_i32_2 = arith.constant 0 : i32
    return %arg0, %c0_i32, %c0_i32_0, %c0_i32_1 : i32, i32, i32, i32
  }
  func.func @transform_5(%arg0: i32) -> (i32, i32, i32, i32) {
    %c0_i32 = arith.constant 0 : i32
    %c0_i32_0 = arith.constant 0 : i32
    %c0_i32_1 = arith.constant 0 : i32
    %c0_i32_2 = arith.constant 0 : i32
    return %arg0, %c0_i32, %c0_i32_0, %c0_i32_1 : i32, i32, i32, i32
  }
}

module attributes {stable_mosaic.version = 11 : i64} {
  func.func @post_linears_kernel(%arg0: i32, %arg1: memref<128x32xbf16, #tpu.memory_space<vmem>>, %arg2: memref<16x32xbf16, #tpu.memory_space<vmem>>, %arg3: memref<16x64xbf16, #tpu.memory_space<vmem>>, %arg4: memref<32x32xbf16, #tpu.memory_space<vmem>>, %arg5: memref<1x32xf32, #tpu.memory_space<vmem>>, %arg6: memref<64x32xbf16, #tpu.memory_space<vmem>>, %arg7: memref<1x32xf32, #tpu.memory_space<vmem>>, %arg8: memref<128x32xf32, #tpu.memory_space<vmem>>, %arg9: memref<16x32xf32, #tpu.memory_space<vmem>>) attributes {dimension_semantics = [#tpu.dimension_semantics<arbitrary>], iteration_bounds = array<i64: 1>, scalar_prefetch = 0 : i64, scratch_operands = 0 : i64, tpu.core_type = #tpu.core_type<tc>, window_params = [{pipeline_mode = #tpu.pipeline_mode<synchronous>, transform_indices = @transform_0, window_bounds = array<i64: 128, 32>}, {pipeline_mode = #tpu.pipeline_mode<synchronous>, transform_indices = @transform_1, window_bounds = array<i64: 16, 32>}, {pipeline_mode = #tpu.pipeline_mode<synchronous>, transform_indices = @transform_2, window_bounds = array<i64: 16, 64>}, {pipeline_mode = #tpu.pipeline_mode<synchronous>, transform_indices = @transform_3, window_bounds = array<i64: 32, 32>}, {pipeline_mode = #tpu.pipeline_mode<synchronous>, transform_indices = @transform_4, window_bounds = array<i64: 1, 32>}, {pipeline_mode = #tpu.pipeline_mode<synchronous>, transform_indices = @transform_5, window_bounds = array<i64: 64, 32>}, {pipeline_mode = #tpu.pipeline_mode<synchronous>, transform_indices = @transform_6, window_bounds = array<i64: 1, 32>}, {pipeline_mode = #tpu.pipeline_mode<synchronous>, transform_indices = @transform_7, window_bounds = array<i64: 128, 32>}, {pipeline_mode = #tpu.pipeline_mode<synchronous>, transform_indices = @transform_8, window_bounds = array<i64: 16, 32>}]} {
    %c0 = arith.constant 0 : index
    %c0_0 = arith.constant 0 : index
    %0 = vector.load %arg4[%c0, %c0_0] : memref<32x32xbf16, #tpu.memory_space<vmem>>, vector<32x32xbf16>
    %c0_1 = arith.constant 0 : index
    %c0_2 = arith.constant 0 : index
    %1 = vector.load %arg5[%c0_1, %c0_2] : memref<1x32xf32, #tpu.memory_space<vmem>>, vector<1x32xf32>
    %c0_3 = arith.constant 0 : index
    %c0_4 = arith.constant 0 : index
    %2 = vector.load %arg1[%c0_3, %c0_4] : memref<128x32xbf16, #tpu.memory_space<vmem>>, vector<128x32xbf16>
    %cst = arith.constant dense<0.000000e+00> : vector<128x32xf32>
    %3 = tpu.matmul %2, %0, %cst {dimension_numbers = #tpu.dot_dimension_numbers<[1], [0], [0], [1], [0, 0, 1, 1], [], []>} : vector<128x32xbf16>, vector<32x32xbf16>, vector<128x32xf32> -> vector<128x32xf32>
    %4 = vector.broadcast %1 : vector<1x32xf32> to vector<128x32xf32>
    %5 = arith.addf %3, %4 : vector<128x32xf32>
    %c0_5 = arith.constant 0 : index
    %c0_6 = arith.constant 0 : index
    %6 = vector.load %arg8[%c0_5, %c0_6] : memref<128x32xf32, #tpu.memory_space<vmem>>, vector<128x32xf32>
    tpu.vector_store %arg8[%c0_5, %c0_6], %5 {strides = array<i32>} : memref<128x32xf32, #tpu.memory_space<vmem>>, vector<128x32xf32>,
    %c0_7 = arith.constant 0 : index
    %c0_8 = arith.constant 0 : index
    %7 = vector.load %arg2[%c0_7, %c0_8] : memref<16x32xbf16, #tpu.memory_space<vmem>>, vector<16x32xbf16>
    %cst_9 = arith.constant dense<0.000000e+00> : vector<16x32xf32>
    %8 = tpu.matmul %7, %0, %cst_9 {dimension_numbers = #tpu.dot_dimension_numbers<[1], [0], [0], [1], [0, 0, 1, 1], [], []>} : vector<16x32xbf16>, vector<32x32xbf16>, vector<16x32xf32> -> vector<16x32xf32>
    %9 = vector.broadcast %1 : vector<1x32xf32> to vector<16x32xf32>
    %10 = arith.addf %8, %9 : vector<16x32xf32>
    %c0_10 = arith.constant 0 : index
    %c0_11 = arith.constant 0 : index
    %11 = vector.load %arg3[%c0_10, %c0_11] : memref<16x64xbf16, #tpu.memory_space<vmem>>, vector<16x64xbf16>
    %c0_12 = arith.constant 0 : index
    %c0_13 = arith.constant 0 : index
    %12 = vector.load %arg6[%c0_12, %c0_13] : memref<64x32xbf16, #tpu.memory_space<vmem>>, vector<64x32xbf16>
    %cst_14 = arith.constant dense<0.000000e+00> : vector<16x32xf32>
    %13 = tpu.matmul %11, %12, %cst_14 {dimension_numbers = #tpu.dot_dimension_numbers<[1], [0], [0], [1], [0, 0, 1, 1], [], []>} : vector<16x64xbf16>, vector<64x32xbf16>, vector<16x32xf32> -> vector<16x32xf32>
    %c0_15 = arith.constant 0 : index
    %c0_16 = arith.constant 0 : index
    %14 = vector.load %arg7[%c0_15, %c0_16] : memref<1x32xf32, #tpu.memory_space<vmem>>, vector<1x32xf32>
    %15 = vector.broadcast %14 : vector<1x32xf32> to vector<16x32xf32>
    %16 = arith.addf %13, %15 : vector<16x32xf32>
    %17 = arith.addf %10, %16 : vector<16x32xf32>
    %c0_17 = arith.constant 0 : index
    %c0_18 = arith.constant 0 : index
    %18 = vector.load %arg9[%c0_17, %c0_18] : memref<16x32xf32, #tpu.memory_space<vmem>>, vector<16x32xf32>
    tpu.vector_store %arg9[%c0_17, %c0_18], %17 {strides = array<i32>} : memref<16x32xf32, #tpu.memory_space<vmem>>, vector<16x32xf32>,
    return
  }
  func.func @transform_0(%arg0: i32) -> (i32, i32) {
    %c0_i32 = arith.constant 0 : i32
    %c0_i32_0 = arith.constant 0 : i32
    %c0_i32_1 = arith.constant 0 : i32
    return %c0_i32, %c0_i32_0 : i32, i32
  }
  func.func @transform_1(%arg0: i32) -> (i32, i32) {
    %c0_i32 = arith.constant 0 : i32
    %c0_i32_0 = arith.constant 0 : i32
    %c0_i32_1 = arith.constant 0 : i32
    return %c0_i32, %c0_i32_0 : i32, i32
  }
  func.func @transform_2(%arg0: i32) -> (i32, i32) {
    %c0_i32 = arith.constant 0 : i32
    %c0_i32_0 = arith.constant 0 : i32
    %c0_i32_1 = arith.constant 0 : i32
    return %c0_i32, %c0_i32_0 : i32, i32
  }
  func.func @transform_3(%arg0: i32) -> (i32, i32) {
    %c0_i32 = arith.constant 0 : i32
    %c0_i32_0 = arith.constant 0 : i32
    %c0_i32_1 = arith.constant 0 : i32
    return %c0_i32, %c0_i32_0 : i32, i32
  }
  func.func @transform_4(%arg0: i32) -> (i32, i32) {
    %c0_i32 = arith.constant 0 : i32
    %c0_i32_0 = arith.constant 0 : i32
    %c0_i32_1 = arith.constant 0 : i32
    return %c0_i32, %c0_i32_0 : i32, i32
  }
  func.func @transform_5(%arg0: i32) -> (i32, i32) {
    %c0_i32 = arith.constant 0 : i32
    %c0_i32_0 = arith.constant 0 : i32
    %c0_i32_1 = arith.constant 0 : i32
    return %c0_i32, %c0_i32_0 : i32, i32
  }
  func.func @transform_6(%arg0: i32) -> (i32, i32) {
    %c0_i32 = arith.constant 0 : i32
    %c0_i32_0 = arith.constant 0 : i32
    %c0_i32_1 = arith.constant 0 : i32
    return %c0_i32, %c0_i32_0 : i32, i32
  }
  func.func @transform_7(%arg0: i32) -> (i32, i32) {
    %c0_i32 = arith.constant 0 : i32
    %c0_i32_0 = arith.constant 0 : i32
    %c0_i32_1 = arith.constant 0 : i32
    return %c0_i32, %c0_i32_0 : i32, i32
  }
  func.func @transform_8(%arg0: i32) -> (i32, i32) {
    %c0_i32 = arith.constant 0 : i32
    %c0_i32_0 = arith.constant 0 : i32
    %c0_i32_1 = arith.constant 0 : i32
    return %c0_i32, %c0_i32_0 : i32, i32
  }
}

module attributes {stable_mosaic.version = 11 : i64} {
  func.func @chan_attn_kernel(%arg0: i32, %arg1: memref<1x4x8x16xf32, #tpu.memory_space<vmem>>, %arg2: memref<1x4x32x16xf32, #tpu.memory_space<vmem>>, %arg3: memref<1x4x8x32xf32, #tpu.memory_space<vmem>>, %arg4: memref<1x4x8x32xf32, #tpu.memory_space<vmem>>) attributes {dimension_semantics = [#tpu.dimension_semantics<parallel>], iteration_bounds = array<i64: 2>, scalar_prefetch = 0 : i64, scratch_operands = 0 : i64, tpu.core_type = #tpu.core_type<tc>, window_params = [{transform_indices = @transform_0, window_bounds = array<i64: 1, 4, 8, 16>}, {transform_indices = @transform_1, window_bounds = array<i64: 1, 4, 32, 16>}, {transform_indices = @transform_2, window_bounds = array<i64: 1, 4, 8, 32>}, {transform_indices = @transform_3, window_bounds = array<i64: 1, 4, 8, 32>}]} {
    %c0 = arith.constant 0 : index
    %c0_0 = arith.constant 0 : index
    %c0_1 = arith.constant 0 : index
    %c0_2 = arith.constant 0 : index
    %0 = vector.load %arg1[%c0, %c0_0, %c0_1, %c0_2] : memref<1x4x8x16xf32, #tpu.memory_space<vmem>>, vector<1x4x8x16xf32>
    %1 = vector.shape_cast %0 : vector<1x4x8x16xf32> to vector<4x8x16xf32>
    %c0_3 = arith.constant 0 : index
    %c0_4 = arith.constant 0 : index
    %c0_5 = arith.constant 0 : index
    %c0_6 = arith.constant 0 : index
    %2 = vector.load %arg2[%c0_3, %c0_4, %c0_5, %c0_6] : memref<1x4x32x16xf32, #tpu.memory_space<vmem>>, vector<1x4x32x16xf32>
    %3 = vector.shape_cast %2 : vector<1x4x32x16xf32> to vector<4x32x16xf32>
    "tpu.trace_start"() <{level = 10 : i32, message = "gtx,gcx->gtc"}> : () -> ()
    %cst = arith.constant dense<0.000000e+00> : vector<4x8x32xf32>
    %4 = tpu.matmul %1, %3, %cst {dimension_numbers = #tpu.dot_dimension_numbers<[2], [2], [1], [1], [0, 0, 0, 1, 1, 1], [0], [0]>} : vector<4x8x16xf32>, vector<4x32x16xf32>, vector<4x8x32xf32> -> vector<4x8x32xf32>
    "tpu.trace_stop"() : () -> ()
    %c0_7 = arith.constant 0 : index
    %c0_8 = arith.constant 0 : index
    %c0_9 = arith.constant 0 : index
    %c0_10 = arith.constant 0 : index
    %5 = vector.load %arg3[%c0_7, %c0_8, %c0_9, %c0_10] : memref<1x4x8x32xf32, #tpu.memory_space<vmem>>, vector<1x4x8x32xf32>
    %6 = vector.shape_cast %5 : vector<1x4x8x32xf32> to vector<4x8x32xf32>
    %7 = vector.shape_cast %4 : vector<4x8x32xf32> to vector<1x4x8x32xf32>
    tpu.vector_store %arg3[%c0_7, %c0_8, %c0_9, %c0_10], %7 {strides = array<i32>} : memref<1x4x8x32xf32, #tpu.memory_space<vmem>>, vector<1x4x8x32xf32>,
    %cst_11 = arith.constant 2.500000e-01 : f32
    %8 = vector.broadcast %cst_11 : f32 to vector<4x8x32xf32>
    %9 = arith.mulf %4, %8 : vector<4x8x32xf32>
    %cst_12 = arith.constant dense<0xFF800000> : vector<4x8xf32>
    %10 = vector.multi_reduction <maximumf>, %9, %cst_12 [2] : vector<4x8x32xf32> to vector<4x8xf32>
    %11 = vector.shape_cast %10 : vector<4x8xf32> to vector<4x8x1xf32>
    %12 = vector.broadcast %11 : vector<4x8x1xf32> to vector<4x8x32xf32>
    %13 = arith.subf %9, %12 : vector<4x8x32xf32>
    %14 = math.exp %13 : vector<4x8x32xf32>
    %cst_13 = arith.constant dense<0.000000e+00> : vector<4x8xf32>
    %15 = vector.multi_reduction <add>, %14, %cst_13 [2] : vector<4x8x32xf32> to vector<4x8xf32>
    %16 = vector.shape_cast %15 : vector<4x8xf32> to vector<4x8x1xf32>
    %17 = tpu.reciprocal %16 {approx = true} : vector<4x8x1xf32> -> vector<4x8x1xf32>
    %18 = vector.broadcast %17 : vector<4x8x1xf32> to vector<4x8x32xf32>
    %19 = arith.mulf %14, %18 : vector<4x8x32xf32>
    %c0_14 = arith.constant 0 : index
    %c0_15 = arith.constant 0 : index
    %c0_16 = arith.constant 0 : index
    %c0_17 = arith.constant 0 : index
    %20 = vector.load %arg4[%c0_14, %c0_15, %c0_16, %c0_17] : memref<1x4x8x32xf32, #tpu.memory_space<vmem>>, vector<1x4x8x32xf32>
    %21 = vector.shape_cast %20 : vector<1x4x8x32xf32> to vector<4x8x32xf32>
    %22 = vector.shape_cast %19 : vector<4x8x32xf32> to vector<1x4x8x32xf32>
    tpu.vector_store %arg4[%c0_14, %c0_15, %c0_16, %c0_17], %22 {strides = array<i32>} : memref<1x4x8x32xf32, #tpu.memory_space<vmem>>, vector<1x4x8x32xf32>,
    return
  }
  func.func @transform_0(%arg0: i32) -> (i32, i32, i32, i32) {
    %c0_i32 = arith.constant 0 : i32
    %c0_i32_0 = arith.constant 0 : i32
    %c0_i32_1 = arith.constant 0 : i32
    %c0_i32_2 = arith.constant 0 : i32
    return %arg0, %c0_i32, %c0_i32_0, %c0_i32_1 : i32, i32, i32, i32
  }
  func.func @transform_1(%arg0: i32) -> (i32, i32, i32, i32) {
    %c0_i32 = arith.constant 0 : i32
    %c0_i32_0 = arith.constant 0 : i32
    %c0_i32_1 = arith.constant 0 : i32
    %c0_i32_2 = arith.constant 0 : i32
    return %arg0, %c0_i32, %c0_i32_0, %c0_i32_1 : i32, i32, i32, i32
  }
  func.func @transform_2(%arg0: i32) -> (i32, i32, i32, i32) {
    %c0_i32 = arith.constant 0 : i32
    %c0_i32_0 = arith.constant 0 : i32
    %c0_i32_1 = arith.constant 0 : i32
    %c0_i32_2 = arith.constant 0 : i32
    return %arg0, %c0_i32, %c0_i32_0, %c0_i32_1 : i32, i32, i32, i32
  }
  func.func @transform_3(%arg0: i32) -> (i32, i32, i32, i32) {
    %c0_i32 = arith.constant 0 : i32
    %c0_i32_0 = arith.constant 0 : i32
    %c0_i32_1 = arith.constant 0 : i32
    %c0_i32_2 = arith.constant 0 : i32
    return %arg0, %c0_i32, %c0_i32_0, %c0_i32_1 : i32, i32, i32, i32
  }
}

</mosaic_0001>

<llo_original>
// kernel: attention_forward.4
$region0: #{attention_forward.4}
  #allocation0 [shape = 'u32[]', space=smem, size = 0x4, offset = 0x4, fixed_abs, tag = 'smem constant byte address 0x4 - core index']
  #allocation1 [shape = 'u32[144,128]{1,0:T(1,128)}', space=vmem, size = 0x12000, scoped, tag = 'internal scratch']
  #allocation2 [shape = 'f32[256,32]{1,0:T(8,128)}', space=vmem, size = 0x20000, scoped, tag = 'scratch operand']
  %s0 = inlined_call_operand.vmem [shape: f32[16,32], index: 0, kind: input, shape index: {}]
  %s1 = inlined_call_operand.vmem [shape: f32[128,32], index: 1, kind: input, shape index: {}]
  %s2 = inlined_call_operand.vmem [shape: bf16[32,96], index: 2, kind: input, shape index: {}]
  %s3 = inlined_call_operand.vmem [shape: bf16[32,64], index: 3, kind: input, shape index: {}]
  %s4 = inlined_call_operand.vmem [shape: f32[1,64], index: 4, kind: input, shape index: {}]
  %s5 = inlined_call_operand.vmem [shape: bf16[256,96], index: 5, kind: output, shape index: {0}]
  %s6 = inlined_call_operand.vmem [shape: f32[16,64], index: 6, kind: output, shape index: {1}]
  %7 = xla_tuple %s5, %s6
  %s8 = sld [smem:[#allocation0]]
  $region38: #{attention_forward.4} parent=0
    _
  %s10 = ssub.s32 1, %s8
  %s11 = scalar_select 0, %s10, %s8
  // Predicated region
  $region2: #{attention_forward.4} parent=0 // pred_check
    _
  $region3: #{attention_forward.4} parent=0 // pred_check_branch
    %13 = sbr.rel (0) target = $region5
  $region4: #{attention_forward.4} parent=0 // pred_region
    _
  $region5: #{attention_forward.4} parent=0 // pred_fallthru
    _
  // Predicated region
  $region6: #{attention_forward.4} parent=0 // pred_check
    _
  $region7: #{attention_forward.4} parent=0 // pred_check_branch
    %15 = sbr.rel (0) target = $region9
  $region8: #{attention_forward.4} parent=0 // pred_region
    _
  $region9: #{attention_forward.4} parent=0 // pred_fallthru
    _
  // Predicated region
  $region10: #{attention_forward.4} parent=0 // pred_check
    _
  $region11: #{attention_forward.4} parent=0 // pred_check_branch
    %17 = sbr.rel (0) target = $region13
  $region12: #{attention_forward.4} parent=0 // pred_region
    _
  $region13: #{attention_forward.4} parent=0 // pred_fallthru
    _
  // Predicated region
  $region14: #{attention_forward.4} parent=0 // pred_check
    _
  $region15: #{attention_forward.4} parent=0 // pred_check_branch
    %19 = sbr.rel (0) target = $region17
  $region16: #{attention_forward.4} parent=0 // pred_region
    _
  $region17: #{attention_forward.4} parent=0 // pred_fallthru
    _
  // Predicated region
  $region18: #{attention_forward.4} parent=0 // pred_check
    _
  $region19: #{attention_forward.4} parent=0 // pred_check_branch
    %21 = sbr.rel (0) target = $region21
  $region20: #{attention_forward.4} parent=0 // pred_region
    _
  $region21: #{attention_forward.4} parent=0 // pred_fallthru
    _
  %v23 = vld [vmem:[%s0] sm:$0xff]
  %vm24 = vcmask 261120
  %25 = vst.msk [vmem:[#allocation2] sm:$0xff] %vm24, %v23
  %v26 = vld [vmem:[%s1] sm:$0xff]
  %v27 = vld [vmem:[%s1 + $0x8] sm:$0xff]
  %v28 = vld [vmem:[%s1 + $0x10] sm:$0xff]
  %v29 = vld [vmem:[%s1 + $0x18] sm:$0xff]
  %v30 = vld [vmem:[%s1 + $0x20] sm:$0xff]
  %v31 = vld [vmem:[%s1 + $0x28] sm:$0xff]
  %v32 = vld [vmem:[%s1 + $0x30] sm:$0xff]
  %v33 = vld [vmem:[%s1 + $0x38] sm:$0xff]
  %34 = vst.msk [vmem:[#allocation2 + $0x8] sm:$0xff] %vm24, %v26
  %35 = vst.msk [vmem:[#allocation2 + $0x10] sm:$0xff] %vm24, %v27
  %36 = vst.msk [vmem:[#allocation2 + $0x18] sm:$0xff] %vm24, %v28
  %37 = vst.msk [vmem:[#allocation2 + $0x20] sm:$0xff] %vm24, %v29
  %38 = vst.msk [vmem:[#allocation2 + $0x28] sm:$0xff] %vm24, %v30
  %39 = vst.msk [vmem:[#allocation2 + $0x30] sm:$0xff] %vm24, %v31
  %40 = vst.msk [vmem:[#allocation2 + $0x38] sm:$0xff] %vm24, %v32
  %41 = vst.msk [vmem:[#allocation2 + $0x40] sm:$0xff] %vm24, %v33
  %42 = vst.msk [vmem:[#allocation2 + $0x48] sm:$0xff] %vm24, 0.0
  %43 = vst.msk [vmem:[#allocation2 + $0x50] sm:$0xff] %vm24, 0.0
  %44 = vst.msk [vmem:[#allocation2 + $0x58] sm:$0xff] %vm24, 0.0
  %45 = vst.msk [vmem:[#allocation2 + $0x60] sm:$0xff] %vm24, 0.0
  %46 = vst.msk [vmem:[#allocation2 + $0x68] sm:$0xff] %vm24, 0.0
  %47 = vst.msk [vmem:[#allocation2 + $0x70] sm:$0xff] %vm24, 0.0
  %48 = vst.msk [vmem:[#allocation2 + $0x78] sm:$0xff] %vm24, 0.0
  %v49 = vld [vmem:[%s0 + $0x8] sm:$0xff]
  %50 = vst.msk [vmem:[#allocation2 + $0x80] sm:$0xff] %vm24, %v49
  %v51 = vld [vmem:[%s1 + $0x40] sm:$0xff]
  %v52 = vld [vmem:[%s1 + $0x48] sm:$0xff]
  %v53 = vld [vmem:[%s1 + $0x50] sm:$0xff]
  %v54 = vld [vmem:[%s1 + $0x58] sm:$0xff]
  %v55 = vld [vmem:[%s1 + $0x60] sm:$0xff]
  %v56 = vld [vmem:[%s1 + $0x68] sm:$0xff]
  %v57 = vld [vmem:[%s1 + $0x70] sm:$0xff]
  %v58 = vld [vmem:[%s1 + $0x78] sm:$0xff]
  %59 = vst.msk [vmem:[#allocation2 + $0x88] sm:$0xff] %vm24, %v51
  %60 = vst.msk [vmem:[#allocation2 + $0x90] sm:$0xff] %vm24, %v52
  %61 = vst.msk [vmem:[#allocation2 + $0x98] sm:$0xff] %vm24, %v53
  %62 = vst.msk [vmem:[#allocation2 + $0xa0] sm:$0xff] %vm24, %v54
  %63 = vst.msk [vmem:[#allocation2 + $0xa8] sm:$0xff] %vm24, %v55
  %64 = vst.msk [vmem:[#allocation2 + $0xb0] sm:$0xff] %vm24, %v56
  %65 = vst.msk [vmem:[#allocation2 + $0xb8] sm:$0xff] %vm24, %v57
  %66 = vst.msk [vmem:[#allocation2 + $0xc0] sm:$0xff] %vm24, %v58
  %67 = vst.msk [vmem:[#allocation2 + $0xc8] sm:$0xff] %vm24, 0.0
  %68 = vst.msk [vmem:[#allocation2 + $0xd0] sm:$0xff] %vm24, 0.0
  %69 = vst.msk [vmem:[#allocation2 + $0xd8] sm:$0xff] %vm24, 0.0
  %70 = vst.msk [vmem:[#allocation2 + $0xe0] sm:$0xff] %vm24, 0.0
  %71 = vst.msk [vmem:[#allocation2 + $0xe8] sm:$0xff] %vm24, 0.0
  %72 = vst.msk [vmem:[#allocation2 + $0xf0] sm:$0xff] %vm24, 0.0
  %73 = vst.msk [vmem:[#allocation2 + $0xf8] sm:$0xff] %vm24, 0.0
  %v74 = vld [vmem:[#allocation2] sm:$0xff]
  %v75 = vld [vmem:[#allocation2 + $0x8] sm:$0xff]
  %v76 = vld [vmem:[#allocation2 + $0x10] sm:$0xff]
  %v77 = vld [vmem:[#allocation2 + $0x18] sm:$0xff]
  %v78 = vld [vmem:[#allocation2 + $0x20] sm:$0xff]
  %v79 = vld [vmem:[#allocation2 + $0x28] sm:$0xff]
  %v80 = vld [vmem:[#allocation2 + $0x30] sm:$0xff]
  %v81 = vld [vmem:[#allocation2 + $0x38] sm:$0xff]
  %v82 = vld [vmem:[#allocation2 + $0x40] sm:$0xff]
  %v83 = vld [vmem:[#allocation2 + $0x48] sm:$0xff]
  %v84 = vld [vmem:[#allocation2 + $0x50] sm:$0xff]
  %v85 = vld [vmem:[#allocation2 + $0x58] sm:$0xff]
  %v86 = vld [vmem:[#allocation2 + $0x60] sm:$0xff]
  %v87 = vld [vmem:[#allocation2 + $0x68] sm:$0xff]
  %v88 = vld [vmem:[#allocation2 + $0x70] sm:$0xff]
  %v89 = vld [vmem:[#allocation2 + $0x78] sm:$0xff]
  %v90 = vld [vmem:[#allocation2 + $0x80] sm:$0xff]
  %v91 = vld [vmem:[#allocation2 + $0x88] sm:$0xff]
  %v92 = vld [vmem:[#allocation2 + $0x90] sm:$0xff]
  %v93 = vld [vmem:[#allocation2 + $0x98] sm:$0xff]
  %v94 = vld [vmem:[#allocation2 + $0xa0] sm:$0xff]
  %v95 = vld [vmem:[#allocation2 + $0xa8] sm:$0xff]
  %v96 = vld [vmem:[#allocation2 + $0xb0] sm:$0xff]
  %v97 = vld [vmem:[#allocation2 + $0xb8] sm:$0xff]
  %v98 = vld [vmem:[#allocation2 + $0xc0] sm:$0xff]
  %v99 = vld [vmem:[#allocation2 + $0xc8] sm:$0xff]
  %v100 = vld [vmem:[#allocation2 + $0xd0] sm:$0xff]
  %v101 = vld [vmem:[#allocation2 + $0xd8] sm:$0xff]
  %v102 = vld [vmem:[#allocation2 + $0xe0] sm:$0xff]
  %v103 = vld [vmem:[#allocation2 + $0xe8] sm:$0xff]
  %v104 = vld [vmem:[#allocation2 + $0xf0] sm:$0xff]
  %v105 = vld [vmem:[#allocation2 + $0xf8] sm:$0xff]
  %v106 = vpack.c.bf16 %v75, %v74
  %v107 = vpack.c.bf16 %v77, %v76
  %v108 = vpack.c.bf16 %v79, %v78
  %v109 = vpack.c.bf16 %v81, %v80
  %v110 = vpack.c.bf16 %v83, %v82
  %v111 = vpack.c.bf16 %v85, %v84
  %v112 = vpack.c.bf16 %v87, %v86
  %v113 = vpack.c.bf16 %v89, %v88
  %v114 = vpack.c.bf16 %v91, %v90
  %v115 = vpack.c.bf16 %v93, %v92
  %v116 = vpack.c.bf16 %v95, %v94
  %v117 = vpack.c.bf16 %v97, %v96
  %v118 = vpack.c.bf16 %v99, %v98
  %v119 = vpack.c.bf16 %v101, %v100
  %v120 = vpack.c.bf16 %v103, %v102
  %v121 = vpack.c.bf16 %v105, %v104
  %v122 = vld [vmem:[%s2] sm:$0xf]
  %v123 = vld [vmem:[%s2 + $0x4] sm:$0xf]
  %v124 = vld [vmem:[%s2 + $0x8] sm:$0xf]
  %v125 = vld [vmem:[%s2 + $0xc] sm:$0xf]
  %v130 = vunpack.c.l.b16 %v122
  %v131 = vunpack.c.l.b16 %v123
  %v132 = vunpack.c.l.b16 %v124
  %v133 = vunpack.c.l.b16 %v125
  %v134 = vpack.c.b16 %v131, %v130
  %v135 = vpack.c.b16 %v133, %v132
  %v139 = vsel %vm24, %v106, 0
  %v142 = vsel %vm24, %v107, 0
  %v145 = vsel %vm24, %v108, 0
  %v148 = vsel %vm24, %v109, 0
  %v151 = vsel %vm24, %v110, 0
  %v154 = vsel %vm24, %v111, 0
  %v157 = vsel %vm24, %v112, 0
  %v160 = vsel %vm24, %v113, 0
  %v163 = vsel %vm24, %v114, 0
  %v166 = vsel %vm24, %v115, 0
  %v169 = vsel %vm24, %v116, 0
  %v172 = vsel %vm24, %v117, 0
  %v175 = vsel %vm24, %v118, 0
  %v178 = vsel %vm24, %v119, 0
  %v181 = vsel %vm24, %v120, 0
  %v184 = vsel %vm24, %v121, 0
  %186 = vmatprep.subr.bf16.mxu0 0
  %187 = vmatpush1.bf16.msra.mxu0 0
  %188 = vmatprep.subr.bf16.mxu0 0
  %189 = vmatpush1.bf16.msra.mxu0 0
  %190 = vmatprep.subr.bf16.mxu0 0
  %191 = vmatpush1.bf16.msra.mxu0 0
  %192 = vmatprep.subr.bf16.mxu0 0
  %193 = vmatpush1.bf16.msra.mxu0 0
  %194 = vmatprep.subr.bf16.mxu0 0
  %195 = vmatpush1.bf16.msra.mxu0 0
  %196 = vmatprep.subr.bf16.mxu0 0
  %197 = vmatpush1.bf16.msra.mxu0 0
  %198 = vmatprep.subr.bf16.mxu0 0
  %199 = vmatpush1.bf16.msra.mxu0 %v135
  %200 = vmatprep.subr.bf16.mxu0 0
  %201 = vmatpush1.bf16.msra.mxu0 %v134
  %202 = vmatprep.subr.bf16.mxu0 0
  %203 = vmatpush2.bf16.msra.mxu0 0
  %204 = vmatprep.subr.bf16.mxu0 0
  %205 = vmatpush2.bf16.msra.mxu0 0
  %206 = vmatprep.subr.bf16.mxu0 0
  %207 = vmatpush2.bf16.msra.mxu0 0
  %208 = vmatprep.subr.bf16.mxu0 0
  %209 = vmatpush2.bf16.msra.mxu0 0
  %210 = vmatprep.subr.bf16.mxu0 0
  %211 = vmatpush2.bf16.msra.mxu0 0
  %212 = vmatprep.subr.bf16.mxu0 0
  %213 = vmatpush2.bf16.msra.mxu0 0
  %214 = vmatprep.subr.bf16.mxu0 0
  %215 = vmatpush2.bf16.msra.mxu0 0
  %216 = vmatprep.subr.bf16.mxu0 0
  %217 = vmatpush2.bf16.msra.mxu0 0
  %218 = vmatprep.mubr.bf16.mxu0 0
  %219 = vmatmul.mubr.bf16.gmra.mxu0 %v139
  %v220 = vpop.f32.mrf.mxu0
  %v221 = vadd.f32 0.0, %v220
  %v222 = vpop.f32.mrf.mxu0
  %v223 = vpop.f32.mrf.mxu0
  %v224 = vadd.f32 0.0, %v223
  %v225 = vpop.f32.mrf.mxu0
  %226 = vmatprep.mubr.bf16.mxu0 0
  %227 = vmatmul.mubr.bf16.gmra.mxu0 %v142
  %v228 = vpop.f32.mrf.mxu0
  %v229 = vadd.f32 0.0, %v228
  %v230 = vpop.f32.mrf.mxu0
  %v231 = vpop.f32.mrf.mxu0
  %v232 = vadd.f32 0.0, %v231
  %v233 = vpop.f32.mrf.mxu0
  %234 = vmatprep.mubr.bf16.mxu0 0
  %235 = vmatmul.mubr.bf16.gmra.mxu0 %v145
  %v236 = vpop.f32.mrf.mxu0
  %v237 = vadd.f32 0.0, %v236
  %v238 = vpop.f32.mrf.mxu0
  %v239 = vpop.f32.mrf.mxu0
  %v240 = vadd.f32 0.0, %v239
  %v241 = vpop.f32.mrf.mxu0
  %242 = vmatprep.mubr.bf16.mxu0 0
  %243 = vmatmul.mubr.bf16.gmra.mxu0 %v148
  %v244 = vpop.f32.mrf.mxu0
  %v245 = vadd.f32 0.0, %v244
  %v246 = vpop.f32.mrf.mxu0
  %v247 = vpop.f32.mrf.mxu0
  %v248 = vadd.f32 0.0, %v247
  %v249 = vpop.f32.mrf.mxu0
  %250 = vmatprep.mubr.bf16.mxu0 0
  %251 = vmatmul.mubr.bf16.gmra.mxu0 %v151
  %v252 = vpop.f32.mrf.mxu0
  %v253 = vadd.f32 0.0, %v252
  %v254 = vpop.f32.mrf.mxu0
  %v255 = vpop.f32.mrf.mxu0
  %v256 = vadd.f32 0.0, %v255
  %v257 = vpop.f32.mrf.mxu0
  %258 = vmatprep.mubr.bf16.mxu0 0
  %259 = vmatmul.mubr.bf16.gmra.mxu0 %v154
  %v260 = vpop.f32.mrf.mxu0
  %v261 = vadd.f32 0.0, %v260
  %v262 = vpop.f32.mrf.mxu0
  %v263 = vpop.f32.mrf.mxu0
  %v264 = vadd.f32 0.0, %v263
  %v265 = vpop.f32.mrf.mxu0
  %266 = vmatprep.mubr.bf16.mxu0 0
  %267 = vmatmul.mubr.bf16.gmra.mxu0 %v157
  %v268 = vpop.f32.mrf.mxu0
  %v269 = vadd.f32 0.0, %v268
  %v270 = vpop.f32.mrf.mxu0
  %v271 = vpop.f32.mrf.mxu0
  %v272 = vadd.f32 0.0, %v271
  %v273 = vpop.f32.mrf.mxu0
  %274 = vmatprep.mubr.bf16.mxu0 0
  %275 = vmatmul.mubr.bf16.gmra.mxu0 %v160
  %v276 = vpop.f32.mrf.mxu0
  %v277 = vadd.f32 0.0, %v276
  %v278 = vpop.f32.mrf.mxu0
  %v279 = vpop.f32.mrf.mxu0
  %v280 = vadd.f32 0.0, %v279
  %v281 = vpop.f32.mrf.mxu0
  %282 = vmatprep.mubr.bf16.mxu0 0
  %283 = vmatmul.mubr.bf16.gmra.mxu0 %v163
  %v284 = vpop.f32.mrf.mxu0
  %v285 = vadd.f32 0.0, %v284
  %v286 = vpop.f32.mrf.mxu0
  %v287 = vpop.f32.mrf.mxu0
  %v288 = vadd.f32 0.0, %v287
  %v289 = vpop.f32.mrf.mxu0
  %290 = vmatprep.mubr.bf16.mxu0 0
  %291 = vmatmul.mubr.bf16.gmra.mxu0 %v166
  %v292 = vpop.f32.mrf.mxu0
  %v293 = vadd.f32 0.0, %v292
  %v294 = vpop.f32.mrf.mxu0
  %v295 = vpop.f32.mrf.mxu0
  %v296 = vadd.f32 0.0, %v295
  %v297 = vpop.f32.mrf.mxu0
  %298 = vmatprep.mubr.bf16.mxu0 0
  %299 = vmatmul.mubr.bf16.gmra.mxu0 %v169
  %v300 = vpop.f32.mrf.mxu0
  %v301 = vadd.f32 0.0, %v300
  %v302 = vpop.f32.mrf.mxu0
  %v303 = vpop.f32.mrf.mxu0
  %v304 = vadd.f32 0.0, %v303
  %v305 = vpop.f32.mrf.mxu0
  %306 = vmatprep.mubr.bf16.mxu0 0
  %307 = vmatmul.mubr.bf16.gmra.mxu0 %v172
  %v308 = vpop.f32.mrf.mxu0
  %v309 = vadd.f32 0.0, %v308
  %v310 = vpop.f32.mrf.mxu0
  %v311 = vpop.f32.mrf.mxu0
  %v312 = vadd.f32 0.0, %v311
  %v313 = vpop.f32.mrf.mxu0
  %314 = vmatprep.mubr.bf16.mxu0 0
  %315 = vmatmul.mubr.bf16.gmra.mxu0 %v175
  %v316 = vpop.f32.mrf.mxu0
  %v317 = vadd.f32 0.0, %v316
  %v318 = vpop.f32.mrf.mxu0
  %v319 = vpop.f32.mrf.mxu0
  %v320 = vadd.f32 0.0, %v319
  %v321 = vpop.f32.mrf.mxu0
  %322 = vmatprep.mubr.bf16.mxu0 0
  %323 = vmatmul.mubr.bf16.gmra.mxu0 %v178
  %v324 = vpop.f32.mrf.mxu0
  %v325 = vadd.f32 0.0, %v324
  %v326 = vpop.f32.mrf.mxu0
  %v327 = vpop.f32.mrf.mxu0
  %v328 = vadd.f32 0.0, %v327
  %v329 = vpop.f32.mrf.mxu0
  %330 = vmatprep.mubr.bf16.mxu0 0
  %331 = vmatmul.mubr.bf16.gmra.mxu0 %v181
  %v332 = vpop.f32.mrf.mxu0
  %v333 = vadd.f32 0.0, %v332
  %v334 = vpop.f32.mrf.mxu0
  %v335 = vpop.f32.mrf.mxu0
  %v336 = vadd.f32 0.0, %v335
  %v337 = vpop.f32.mrf.mxu0
  %338 = vmatprep.mubr.bf16.mxu0 0
  %339 = vmatmul.mubr.bf16.gmra.mxu0 %v184
  %v340 = vpop.f32.mrf.mxu0
  %v341 = vadd.f32 0.0, %v340
  %v342 = vpop.f32.mrf.mxu0
  %v343 = vpop.f32.mrf.mxu0
  %v344 = vadd.f32 0.0, %v343
  %v345 = vpop.f32.mrf.mxu0
  %346 = vdwg.mxu0
  %v347 = vpack.c.bf16 %v224, %v221
  %v348 = vpack.c.bf16 %v232, %v229
  %v349 = vpack.c.bf16 %v240, %v237
  %v350 = vpack.c.bf16 %v248, %v245
  %v351 = vpack.c.bf16 %v256, %v253
  %v352 = vpack.c.bf16 %v264, %v261
  %v353 = vpack.c.bf16 %v272, %v269
  %v354 = vpack.c.bf16 %v280, %v277
  %v355 = vpack.c.bf16 %v288, %v285
  %v356 = vpack.c.bf16 %v296, %v293
  %v357 = vpack.c.bf16 %v304, %v301
  %v358 = vpack.c.bf16 %v312, %v309
  %v359 = vpack.c.bf16 %v320, %v317
  %v360 = vpack.c.bf16 %v328, %v325
  %v361 = vpack.c.bf16 %v336, %v333
  %v362 = vpack.c.bf16 %v344, %v341
  %v379 = vunpack.c.l.b16 %v347
  %v380 = vunpack.c.h.b16 %v347
  %v381 = vunpack.c.l.b16 %v348
  %v382 = vunpack.c.h.b16 %v348
  %v383 = vunpack.c.l.b16 %v349
  %v384 = vunpack.c.h.b16 %v349
  %v385 = vunpack.c.l.b16 %v350
  %v386 = vunpack.c.h.b16 %v350
  %v387 = vunpack.c.l.b16 %v351
  %v388 = vunpack.c.h.b16 %v351
  %v389 = vunpack.c.l.b16 %v352
  %v390 = vunpack.c.h.b16 %v352
  %v391 = vunpack.c.l.b16 %v353
  %v392 = vunpack.c.h.b16 %v353
  %v393 = vunpack.c.l.b16 %v354
  %v394 = vunpack.c.h.b16 %v354
  %v395 = vunpack.c.l.b16 %v355
  %v396 = vunpack.c.h.b16 %v355
  %v397 = vunpack.c.l.b16 %v356
  %v398 = vunpack.c.h.b16 %v356
  %v399 = vunpack.c.l.b16 %v357
  %v400 = vunpack.c.h.b16 %v357
  %v401 = vunpack.c.l.b16 %v358
  %v402 = vunpack.c.h.b16 %v358
  %v403 = vunpack.c.l.b16 %v359
  %v404 = vunpack.c.h.b16 %v359
  %v405 = vunpack.c.l.b16 %v360
  %v406 = vunpack.c.h.b16 %v360
  %v407 = vunpack.c.l.b16 %v361
  %v408 = vunpack.c.h.b16 %v361
  %v409 = vunpack.c.l.b16 %v362
  %v410 = vunpack.c.h.b16 %v362
  %v411 = vpack.c.b16 %v379, %v379
  %v412 = vpack.c.b16 %v380, %v380
  %v413 = vpack.c.b16 %v381, %v381
  %v414 = vpack.c.b16 %v382, %v382
  %v415 = vpack.c.b16 %v383, %v383
  %v416 = vpack.c.b16 %v384, %v384
  %v417 = vpack.c.b16 %v385, %v385
  %v418 = vpack.c.b16 %v386, %v386
  %v419 = vpack.c.b16 %v387, %v387
  %v420 = vpack.c.b16 %v388, %v388
  %v421 = vpack.c.b16 %v389, %v389
  %v422 = vpack.c.b16 %v390, %v390
  %v423 = vpack.c.b16 %v391, %v391
  %v424 = vpack.c.b16 %v392, %v392
  %v425 = vpack.c.b16 %v393, %v393
  %v426 = vpack.c.b16 %v394, %v394
  %v427 = vpack.c.b16 %v395, %v395
  %v428 = vpack.c.b16 %v396, %v396
  %v429 = vpack.c.b16 %v397, %v397
  %v430 = vpack.c.b16 %v398, %v398
  %v431 = vpack.c.b16 %v399, %v399
  %v432 = vpack.c.b16 %v400, %v400
  %v433 = vpack.c.b16 %v401, %v401
  %v434 = vpack.c.b16 %v402, %v402
  %v435 = vpack.c.b16 %v403, %v403
  %v436 = vpack.c.b16 %v404, %v404
  %v437 = vpack.c.b16 %v405, %v405
  %v438 = vpack.c.b16 %v406, %v406
  %v439 = vpack.c.b16 %v407, %v407
  %v440 = vpack.c.b16 %v408, %v408
  %v441 = vpack.c.b16 %v409, %v409
  %v442 = vpack.c.b16 %v410, %v410
  %vm475 = vcmask 781312
  %476 = vst.msk [vmem:[%s5] sm:$0xf] %vm475, %v411
  %477 = vst.msk [vmem:[%s5 + $0x4] sm:$0xf] %vm475, %v412
  %478 = vst.msk [vmem:[%s5 + $0x8] sm:$0xf] %vm475, %v413
  %479 = vst.msk [vmem:[%s5 + $0xc] sm:$0xf] %vm475, %v414
  %480 = vst.msk [vmem:[%s5 + $0x10] sm:$0xf] %vm475, %v415
  %481 = vst.msk [vmem:[%s5 + $0x14] sm:$0xf] %vm475, %v416
  %482 = vst.msk [vmem:[%s5 + $0x18] sm:$0xf] %vm475, %v417
  %483 = vst.msk [vmem:[%s5 + $0x1c] sm:$0xf] %vm475, %v418
  %484 = vst.msk [vmem:[%s5 + $0x20] sm:$0xf] %vm475, %v419
  %485 = vst.msk [vmem:[%s5 + $0x24] sm:$0xf] %vm475, %v420
  %486 = vst.msk [vmem:[%s5 + $0x28] sm:$0xf] %vm475, %v421
  %487 = vst.msk [vmem:[%s5 + $0x2c] sm:$0xf] %vm475, %v422
  %488 = vst.msk [vmem:[%s5 + $0x30] sm:$0xf] %vm475, %v423
  %489 = vst.msk [vmem:[%s5 + $0x34] sm:$0xf] %vm475, %v424
  %490 = vst.msk [vmem:[%s5 + $0x38] sm:$0xf] %vm475, %v425
  %491 = vst.msk [vmem:[%s5 + $0x3c] sm:$0xf] %vm475, %v426
  %492 = vst.msk [vmem:[%s5 + $0x40] sm:$0xf] %vm475, %v427
  %493 = vst.msk [vmem:[%s5 + $0x44] sm:$0xf] %vm475, %v428
  %494 = vst.msk [vmem:[%s5 + $0x48] sm:$0xf] %vm475, %v429
  %495 = vst.msk [vmem:[%s5 + $0x4c] sm:$0xf] %vm475, %v430
  %496 = vst.msk [vmem:[%s5 + $0x50] sm:$0xf] %vm475, %v431
  %497 = vst.msk [vmem:[%s5 + $0x54] sm:$0xf] %vm475, %v432
  %498 = vst.msk [vmem:[%s5 + $0x58] sm:$0xf] %vm475, %v433
  %499 = vst.msk [vmem:[%s5 + $0x5c] sm:$0xf] %vm475, %v434
  %500 = vst.msk [vmem:[%s5 + $0x60] sm:$0xf] %vm475, %v435
  %501 = vst.msk [vmem:[%s5 + $0x64] sm:$0xf] %vm475, %v436
  %502 = vst.msk [vmem:[%s5 + $0x68] sm:$0xf] %vm475, %v437
  %503 = vst.msk [vmem:[%s5 + $0x6c] sm:$0xf] %vm475, %v438
  %504 = vst.msk [vmem:[%s5 + $0x70] sm:$0xf] %vm475, %v439
  %505 = vst.msk [vmem:[%s5 + $0x74] sm:$0xf] %vm475, %v440
  %506 = vst.msk [vmem:[%s5 + $0x78] sm:$0xf] %vm475, %v441
  %507 = vst.msk [vmem:[%s5 + $0x7c] sm:$0xf] %vm475, %v442
  %v508 = vld [vmem:[%s0] sm:$0xff]
  %v509 = vld [vmem:[%s0 + $0x8] sm:$0xff]
  %v510 = vpack.c.bf16 %v509, %v508
  %v511 = vld [vmem:[%s3] sm:$0xf]
  %v512 = vld [vmem:[%s3 + $0x4] sm:$0xf]
  %v513 = vld [vmem:[%s3 + $0x8] sm:$0xf]
  %v514 = vld [vmem:[%s3 + $0xc] sm:$0xf]
  %v515 = vld [vmem:[%s4] sm:$0x1]
  %v517 = vlaneseq
  %v518 = vshrl.u32 %v517, 7
  %v519 = vsub.s32 0, %v518
  %v520 = vrot.slane %v515, %v519
  %v526 = vunpack.c.l.b16 %v511
  %v527 = vunpack.c.l.b16 %v512
  %v528 = vunpack.c.l.b16 %v513
  %v529 = vunpack.c.l.b16 %v514
  %v530 = vpack.c.b16 %v527, %v526
  %v531 = vpack.c.b16 %v529, %v528
  %v535 = vsel %vm24, %v510, 0
  %537 = vmatprep.subr.bf16.mxu0 0
  %538 = vmatpush1.bf16.msra.mxu0 0
  %539 = vmatprep.subr.bf16.mxu0 0
  %540 = vmatpush1.bf16.msra.mxu0 0
  %541 = vmatprep.subr.bf16.mxu0 0
  %542 = vmatpush1.bf16.msra.mxu0 0
  %543 = vmatprep.subr.bf16.mxu0 0
  %544 = vmatpush1.bf16.msra.mxu0 0
  %545 = vmatprep.subr.bf16.mxu0 0
  %546 = vmatpush1.bf16.msra.mxu0 0
  %547 = vmatprep.subr.bf16.mxu0 0
  %548 = vmatpush1.bf16.msra.mxu0 0
  %549 = vmatprep.subr.bf16.mxu0 0
  %550 = vmatpush1.bf16.msra.mxu0 %v531
  %551 = vmatprep.subr.bf16.mxu0 0
  %552 = vmatpush1.bf16.msra.mxu0 %v530
  %553 = vmatprep.subr.bf16.mxu0 0
  %554 = vmatpush2.bf16.msra.mxu0 0
  %555 = vmatprep.subr.bf16.mxu0 0
  %556 = vmatpush2.bf16.msra.mxu0 0
  %557 = vmatprep.subr.bf16.mxu0 0
  %558 = vmatpush2.bf16.msra.mxu0 0
  %559 = vmatprep.subr.bf16.mxu0 0
  %560 = vmatpush2.bf16.msra.mxu0 0
  %561 = vmatprep.subr.bf16.mxu0 0
  %562 = vmatpush2.bf16.msra.mxu0 0
  %563 = vmatprep.subr.bf16.mxu0 0
  %564 = vmatpush2.bf16.msra.mxu0 0
  %565 = vmatprep.subr.bf16.mxu0 0
  %566 = vmatpush2.bf16.msra.mxu0 0
  %567 = vmatprep.subr.bf16.mxu0 0
  %568 = vmatpush2.bf16.msra.mxu0 0
  %569 = vmatprep.mubr.bf16.mxu0 0
  %570 = vmatmul.mubr.bf16.gmra.mxu0 %v535
  %v571 = vpop.f32.mrf.mxu0
  %v572 = vadd.f32 %v520, %v571
  %v573 = vpop.f32.mrf.mxu0
  %v574 = vpop.f32.mrf.mxu0
  %v575 = vadd.f32 %v520, %v574
  %v576 = vpop.f32.mrf.mxu0
  %577 = vdwg.mxu0
  %vm578 = vcmask 523264
  %579 = vst.msk [vmem:[%s6] sm:$0xff] %vm578, %v572
  %580 = vst.msk [vmem:[%s6 + $0x8] sm:$0xff] %vm578, %v575
  // Predicated region
  $region22: #{attention_forward.4} parent=0 // pred_check
    _
  $region23: #{attention_forward.4} parent=0 // pred_check_branch
    %582 = sbr.rel (0) target = $region25
  $region24: #{attention_forward.4} parent=0 // pred_region
    _
  $region25: #{attention_forward.4} parent=0 // pred_fallthru
    _
  // Predicated region
  $region26: #{attention_forward.4} parent=0 // pred_check
    _
  $region27: #{attention_forward.4} parent=0 // pred_check_branch
    %584 = sbr.rel (0) target = $region29
  $region28: #{attention_forward.4} parent=0 // pred_region
    _
  $region29: #{attention_forward.4} parent=0 // pred_fallthru
    _
  // Predicated region
  $region30: #{attention_forward.4} parent=0 // pred_check
    _
  $region31: #{attention_forward.4} parent=0 // pred_check_branch
    %586 = sbr.rel (0) target = $region33
  $region32: #{attention_forward.4} parent=0 // pred_region
    _
  $region33: #{attention_forward.4} parent=0 // pred_fallthru
    _
  // Predicated region
  $region34: #{attention_forward.4} parent=0 // pred_check
    _
  $region35: #{attention_forward.4} parent=0 // pred_check_branch
    %588 = sbr.rel (0) target = $region37
  $region36: #{attention_forward.4} parent=0 // pred_region
    _
  $region37: #{attention_forward.4} parent=0 // pred_fallthru
    _

// kernel: attention_forward.5
$region0: #{attention_forward.5}
  #allocation0 [shape = 'u32[]', space=smem, size = 0x4, offset = 0x4, fixed_abs, tag = 'smem constant byte address 0x4 - core index']
  #allocation1 [shape = 'u32[144,128]{1,0:T(1,128)}', space=vmem, size = 0x12000, scoped, tag = 'internal scratch']
  %s0 = inlined_call_operand.vmem [shape: bf16[2,4,72,8], index: 0, kind: input, shape index: {}]
  %s1 = inlined_call_operand.vmem [shape: bf16[2,4,128,8], index: 1, kind: input, shape index: {}]
  %s2 = inlined_call_operand.vmem [shape: bf16[2,4,128,8], index: 2, kind: input, shape index: {}]
  %s3 = inlined_call_operand.hbm [shape: f32[2,4,72,128], index: 3, kind: output, shape index: {0}]
  %s4 = inlined_call_operand.hbm [shape: f32[2,4,72,128], index: 4, kind: output, shape index: {1}]
  %s5 = inlined_call_operand.vmem [shape: bf16[2,4,72,8], index: 5, kind: output, shape index: {2}]
  %6 = xla_tuple %s3, %s4, %s5
  %s7 = sld [smem:[#allocation0]]
  $region61: #{attention_forward.5} parent=0
    _
  %s9 = ssub.s32 1, %s7
  %s10 = scalar_select 0, %s9, %s7
  $region1: #{attention_forward.5} parent=0
    #allocation2 [shape = 'u8[294912]{0}', space=vmem, size = 0x48000, scoped, tag = 'output window, operand 0']
    #allocation3 [shape = 's32[2]{0}', space=sflag, size = 0x8, scoped, tag = 'scoped memory for attention_forward.5']
    #allocation4 [shape = 'u8[294912]{0}', space=vmem, size = 0x48000, scoped, tag = 'output window, operand 1']
    #allocation5 [shape = 's32[2]{0}', space=sflag, size = 0x8, scoped, tag = 'scoped memory for attention_forward.5']
    %11 = vsyncpa [#allocation3], 0
    %s12 = scalar_lea.sflag [#allocation3], 1
    %13 = vsyncpa %s12, 0
    %14 = vsyncpa [#allocation5], 0
    %s15 = scalar_lea.sflag [#allocation5], 1
    %16 = vsyncpa %s15, 0
    loop: start=0, step=1, limit=4
    $region2: #{attention_forward.5} parent=1 // loop_pre_header
      _
    $region3: #{attention_forward.5} parent=1 // loop_header
      %s18 = sphi 0, %s22
      %p19 = scmp.ge.s32.totalorder %s18, 4
      %s28 = sphi 0, %s30
      %s31 = sphi 0, %s28
      %s32 = sphi 0, %s31
      %s48 = sphi 0, %s32
      %s54 = sphi 0, %s56
      %s57 = sphi 0, %s54
      %s58 = sphi 0, %s57
      %s74 = sphi 0, %s58
      %s80 = sphi 0, %s82
      %s83 = sphi 0, %s80
      %s84 = sphi 0, %s83
      %s100 = sphi 0, %s84
      %s106 = sphi 0, %s108
      %s109 = sphi 0, %s106
      %s110 = sphi 0, %s109
      %s126 = sphi 0, %s110
      %s132 = sphi 0, %s134
      %s135 = sphi 0, %s132
      %s136 = sphi 0, %s135
      %s152 = sphi 0, %s136
      %s158 = sphi 0, %s160
      %s161 = sphi 0, %s158
      %s162 = sphi 0, %s161
      %s178 = sphi 0, %s162
    $region4: #{attention_forward.5} parent=1 // loop_header_branch
      %21 = sbr.rel (%p19) target = $region8
    $region5: #{attention_forward.5} parent=1 // loop_body
      %s23 = ssub.s32 %s18, 1
      %s24 = ssub.s32 %s18, 2
      %s25 = sadd.s32 %s18, 1
      %s26 = ssub.s32 %s18, %s25
      %p27 = scmp.eq.s32.totalorder %s26, 0
      %s29 = sadd.s32 %s28, 1
      %s30 = scalar_select %p27, %s28, %s29
      %p33 = pneg %p27
      %p34 = scmp.eq.s32.totalorder %s18, 1
      %p35 = por %p33, %p34
      %p36 = scmp.ne.s32.totalorder %s28, %s31
      %p37 = scmp.eq.s32.totalorder %s18, 0
      %p38 = por %p36, %p37
      %p39 = scmp.ne.s32.totalorder %s28, %s31
      %p40 = scmp.eq.s32.totalorder %s23, 1
      %p41 = por %p39, %p40
      %p42 = scmp.ne.s32.totalorder %s31, %s32
      %p43 = scmp.eq.s32.totalorder %s23, 0
      %p44 = por %p42, %p43
      %p45 = scmp.ne.s32.totalorder %s31, %s32
      %p46 = scmp.eq.s32.totalorder %s24, 1
      %p47 = por %p45, %p46
      %p49 = scmp.ne.s32.totalorder %s32, %s48
      %p50 = scmp.eq.s32.totalorder %s24, 0
      %p51 = por %p49, %p50
      %s52 = ssub.s32 %s18, %s25
      %p53 = scmp.eq.s32.totalorder %s52, 0
      %s55 = sadd.s32 %s54, 1
      %s56 = scalar_select %p53, %s54, %s55
      %p59 = pneg %p53
      %p60 = scmp.eq.s32.totalorder %s18, 1
      %p61 = por %p59, %p60
      %p62 = scmp.ne.s32.totalorder %s54, %s57
      %p63 = scmp.eq.s32.totalorder %s18, 0
      %p64 = por %p62, %p63
      %p65 = scmp.ne.s32.totalorder %s54, %s57
      %p66 = scmp.eq.s32.totalorder %s23, 1
      %p67 = por %p65, %p66
      %p68 = scmp.ne.s32.totalorder %s57, %s58
      %p69 = scmp.eq.s32.totalorder %s23, 0
      %p70 = por %p68, %p69
      %p71 = scmp.ne.s32.totalorder %s57, %s58
      %p72 = scmp.eq.s32.totalorder %s24, 1
      %p73 = por %p71, %p72
      %p75 = scmp.ne.s32.totalorder %s58, %s74
      %p76 = scmp.eq.s32.totalorder %s24, 0
      %p77 = por %p75, %p76
      %s78 = ssub.s32 %s18, %s25
      %p79 = scmp.eq.s32.totalorder %s78, 0
      %s81 = sadd.s32 %s80, 1
      %s82 = scalar_select %p79, %s80, %s81
      %p85 = pneg %p79
      %p86 = scmp.eq.s32.totalorder %s18, 1
      %p87 = por %p85, %p86
      %p88 = scmp.ne.s32.totalorder %s80, %s83
      %p89 = scmp.eq.s32.totalorder %s18, 0
      %p90 = por %p88, %p89
      %p91 = scmp.ne.s32.totalorder %s80, %s83
      %p92 = scmp.eq.s32.totalorder %s23, 1
      %p93 = por %p91, %p92
      %p94 = scmp.ne.s32.totalorder %s83, %s84
      %p95 = scmp.eq.s32.totalorder %s23, 0
      %p96 = por %p94, %p95
      %p97 = scmp.ne.s32.totalorder %s83, %s84
      %p98 = scmp.eq.s32.totalorder %s24, 1
      %p99 = por %p97, %p98
      %p101 = scmp.ne.s32.totalorder %s84, %s100
      %p102 = scmp.eq.s32.totalorder %s24, 0
      %p103 = por %p101, %p102
      %s104 = ssub.s32 %s18, %s25
      %p105 = scmp.eq.s32.totalorder %s104, 0
      %s107 = sadd.s32 %s106, 1
      %s108 = scalar_select %p105, %s106, %s107
      %p111 = pneg %p105
      %p112 = scmp.eq.s32.totalorder %s18, 1
      %p113 = por %p111, %p112
      %p114 = scmp.ne.s32.totalorder %s106, %s109
      %p115 = scmp.eq.s32.totalorder %s18, 0
      %p116 = por %p114, %p115
      %p117 = scmp.ne.s32.totalorder %s106, %s109
      %p118 = scmp.eq.s32.totalorder %s23, 1
      %p119 = por %p117, %p118
      %p120 = scmp.ne.s32.totalorder %s109, %s110
      %p121 = scmp.eq.s32.totalorder %s23, 0
      %p122 = por %p120, %p121
      %p123 = scmp.ne.s32.totalorder %s109, %s110
      %p124 = scmp.eq.s32.totalorder %s24, 1
      %p125 = por %p123, %p124
      %p127 = scmp.ne.s32.totalorder %s110, %s126
      %p128 = scmp.eq.s32.totalorder %s24, 0
      %p129 = por %p127, %p128
      %s130 = ssub.s32 %s18, %s25
      %p131 = scmp.eq.s32.totalorder %s130, 0
      %s133 = sadd.s32 %s132, 1
      %s134 = scalar_select %p131, %s132, %s133
      %p137 = pneg %p131
      %p138 = scmp.eq.s32.totalorder %s18, 1
      %p139 = por %p137, %p138
      %p140 = scmp.ne.s32.totalorder %s132, %s135
      %p141 = scmp.eq.s32.totalorder %s18, 0
      %p142 = por %p140, %p141
      %p143 = scmp.ne.s32.totalorder %s132, %s135
      %p144 = scmp.eq.s32.totalorder %s23, 1
      %p145 = por %p143, %p144
      %p146 = scmp.ne.s32.totalorder %s135, %s136
      %p147 = scmp.eq.s32.totalorder %s23, 0
      %p148 = por %p146, %p147
      %p149 = scmp.ne.s32.totalorder %s135, %s136
      %p150 = scmp.eq.s32.totalorder %s24, 1
      %p151 = por %p149, %p150
      %p153 = scmp.ne.s32.totalorder %s136, %s152
      %p154 = scmp.eq.s32.totalorder %s24, 0
      %p155 = por %p153, %p154
      %s156 = ssub.s32 %s18, %s25
      %p157 = scmp.eq.s32.totalorder %s156, 0
      %s159 = sadd.s32 %s158, 1
      %s160 = scalar_select %p157, %s158, %s159
      %p163 = pneg %p157
      %p164 = scmp.eq.s32.totalorder %s18, 1
      %p165 = por %p163, %p164
      %p166 = scmp.ne.s32.totalorder %s158, %s161
      %p167 = scmp.eq.s32.totalorder %s18, 0
      %p168 = por %p166, %p167
      %p169 = scmp.ne.s32.totalorder %s158, %s161
      %p170 = scmp.eq.s32.totalorder %s23, 1
      %p171 = por %p169, %p170
      %p172 = scmp.ne.s32.totalorder %s161, %s162
      %p173 = scmp.eq.s32.totalorder %s23, 0
      %p174 = por %p172, %p173
      %p175 = scmp.ne.s32.totalorder %s161, %s162
      %p176 = scmp.eq.s32.totalorder %s24, 1
      %p177 = por %p175, %p176
      %p179 = scmp.ne.s32.totalorder %s162, %s178
      %p180 = scmp.eq.s32.totalorder %s24, 0
      %p181 = por %p179, %p180
      %p182 = scmp.le.s32.totalorder 1, %s18
      %p183 = scmp.lt.s32.totalorder %s18, 3
      %p184 = pnand %p182, %p183
      %p185 = pneg %p184
      // Predicated region
      $region9: #{attention_forward.5} parent=5 // pred_check
        _
      $region10: #{attention_forward.5} parent=5 // pred_check_branch
        %187 = sbr.rel (%p184) target = $region12
      $region11: #{attention_forward.5} parent=5 // pred_region
        %s188 = ssub.s32 %s18, 1
      $region12: #{attention_forward.5} parent=5 // pred_fallthru
        _
      %p189 = scmp.lt.s32.totalorder %s18, 2
      // Predicated region
      $region13: #{attention_forward.5} parent=5 // pred_check
        %p190 = pneg %p189
      $region14: #{attention_forward.5} parent=5 // pred_check_branch
        %192 = sbr.rel (%p190) target = $region16
      $region15: #{attention_forward.5} parent=5 // pred_region
        // Predicated region
        $region17: #{attention_forward.5} parent=15 // pred_check
          %p193 = pneg %p38
        $region18: #{attention_forward.5} parent=15 // pred_check_branch
          %195 = sbr.rel (%p193) target = $region20
        $region19: #{attention_forward.5} parent=15 // pred_region
          %p196 = scmp.lt.s32.totalorder %s18, 1
          %s197 = scalar_select %p196, %s18, 1
          %s198 = smul.addr %s197, 36
          %s199 = smul.addr %s198, 4
          %s200 = scalar_lea.vmem %s0, %s199
        $region20: #{attention_forward.5} parent=15 // pred_fallthru
          _
        // Predicated region
        $region21: #{attention_forward.5} parent=15 // pred_check
          %p201 = pneg %p64
        $region22: #{attention_forward.5} parent=15 // pred_check_branch
          %203 = sbr.rel (%p201) target = $region24
        $region23: #{attention_forward.5} parent=15 // pred_region
          %p204 = scmp.lt.s32.totalorder %s18, 1
          %s205 = scalar_select %p204, %s18, 1
          %s206 = smul.addr %s205, 64
          %s207 = smul.addr %s206, 4
          %s208 = scalar_lea.vmem %s1, %s207
        $region24: #{attention_forward.5} parent=15 // pred_fallthru
          _
        // Predicated region
        $region25: #{attention_forward.5} parent=15 // pred_check
          %p209 = pneg %p90
        $region26: #{attention_forward.5} parent=15 // pred_check_branch
          %211 = sbr.rel (%p209) target = $region28
        $region27: #{attention_forward.5} parent=15 // pred_region
          %p212 = scmp.lt.s32.totalorder %s18, 1
          %s213 = scalar_select %p212, %s18, 1
          %s214 = smul.addr %s213, 64
          %s215 = smul.addr %s214, 4
          %s216 = scalar_lea.vmem %s2, %s215
        $region28: #{attention_forward.5} parent=15 // pred_fallthru
          _
      $region16: #{attention_forward.5} parent=5 // pred_fallthru
        _
      %p217 = scmp.le.s32.totalorder 1, %s18
      %p218 = scmp.lt.s32.totalorder %s18, 3
      %p219 = pnand %p217, %p218
      %p220 = pneg %p219
      // Predicated region
      $region29: #{attention_forward.5} parent=5 // pred_check
        _
      $region30: #{attention_forward.5} parent=5 // pred_check_branch
        %222 = sbr.rel (%p219) target = $region32
      $region31: #{attention_forward.5} parent=5 // pred_region
        %s223 = ssub.s32 %s18, 1
        %p224 = scmp.lt.s32.totalorder %s23, 1
        %s225 = scalar_select %p224, %s23, 1
        %s226 = smul.addr %s225, 36
        %s227 = smul.addr %s226, 4
        %s228 = scalar_lea.vmem %s0, %s227
        %p229 = pneg %p44
        %p230 = pneg %p41
        %p231 = scmp.lt.s32.totalorder %s23, 1
        %s232 = scalar_select %p231, %s23, 1
        %s233 = smul.addr %s232, 64
        %s234 = smul.addr %s233, 4
        %s235 = scalar_lea.vmem %s1, %s234
        %p236 = pneg %p70
        %p237 = pneg %p67
        %p238 = scmp.lt.s32.totalorder %s23, 1
        %s239 = scalar_select %p238, %s23, 1
        %s240 = smul.addr %s239, 64
        %s241 = smul.addr %s240, 4
        %s242 = scalar_lea.vmem %s2, %s241
        %p243 = pneg %p96
        %p244 = pneg %p93
        %p245 = pneg %p122
        %p246 = pneg %p119
        %s247 = sand.u32 %s109, 1
        %s248 = scalar_lea.sflag [#allocation3], %s247
        %s249 = sand.u32 %s109, 1
        %s250 = smul.addr %s249, 288
        %s251 = scalar_lea.vmem [#allocation2], %s250
        %p252 = pneg %p148
        %p253 = pneg %p145
        %s254 = sand.u32 %s135, 1
        %s255 = scalar_lea.sflag [#allocation5], %s254
        %s256 = sand.u32 %s135, 1
        %s257 = smul.addr %s256, 288
        %s258 = scalar_lea.vmem [#allocation4], %s257
        %p259 = pneg %p174
        %p260 = pneg %p171
        %p261 = scmp.lt.s32.totalorder %s23, 1
        %s262 = scalar_select %p261, %s23, 1
        %s263 = smul.addr %s262, 36
        %s264 = smul.addr %s263, 4
        %s265 = scalar_lea.vmem %s5, %s264
        %p266 = scmp.lt.s32.totalorder %s23, 1
        %s267 = scalar_select %p266, %s23, 1
        %s268 = smul.addr %s267, 36
        %s269 = smul.addr %s268, 4
        %s270 = scalar_lea.vmem %s0, %s269
        %p271 = scmp.lt.s32.totalorder %s23, 1
        %s272 = scalar_select %p271, %s23, 1
        %s273 = smul.addr %s272, 64
        %s274 = smul.addr %s273, 4
        %s275 = scalar_lea.vmem %s1, %s274
        %p276 = scmp.lt.s32.totalorder %s23, 1
        %s277 = scalar_select %p276, %s23, 1
        %s278 = smul.addr %s277, 64
        %s279 = smul.addr %s278, 4
        %s280 = scalar_lea.vmem %s2, %s279
        %p281 = scmp.lt.s32.totalorder %s23, 1
        %s282 = scalar_select %p281, %s23, 1
        %s283 = smul.addr %s282, 36
        %s284 = smul.addr %s283, 4
        %s285 = scalar_lea.vmem %s5, %s284
        %v287 = vld [vmem:[%s270] sm:$0xf]
        %v288 = vld [vmem:[%s270 + $0x4] sm:$0xf]
        %v289 = vld [vmem:[%s270 + $0x8] sm:$0xf]
        %v290 = vld [vmem:[%s270 + $0xc] sm:$0xf]
        %v291 = vld [vmem:[%s270 + $0x10] sm:$0xf]
        %v292 = vld [vmem:[%s270 + $0x14] sm:$0xf]
        %v293 = vld [vmem:[%s270 + $0x18] sm:$0xf]
        %v294 = vld [vmem:[%s270 + $0x1c] sm:$0xf]
        %v295 = vld [vmem:[%s270 + $0x20] sm:$0xf]
        %v296 = vld [vmem:[%s270 + $0x24] sm:$0xf]
        %v297 = vld [vmem:[%s270 + $0x28] sm:$0xf]
        %v298 = vld [vmem:[%s270 + $0x2c] sm:$0xf]
        %v299 = vld [vmem:[%s270 + $0x30] sm:$0xf]
        %v300 = vld [vmem:[%s270 + $0x34] sm:$0xf]
        %v301 = vld [vmem:[%s270 + $0x38] sm:$0xf]
        %v302 = vld [vmem:[%s270 + $0x3c] sm:$0xf]
        %v303 = vld [vmem:[%s270 + $0x40] sm:$0xf]
        %v304 = vld [vmem:[%s270 + $0x44] sm:$0xf]
        %v305 = vld [vmem:[%s270 + $0x48] sm:$0xf]
        %v306 = vld [vmem:[%s270 + $0x4c] sm:$0xf]
        %v307 = vld [vmem:[%s270 + $0x50] sm:$0xf]
        %v308 = vld [vmem:[%s270 + $0x54] sm:$0xf]
        %v309 = vld [vmem:[%s270 + $0x58] sm:$0xf]
        %v310 = vld [vmem:[%s270 + $0x5c] sm:$0xf]
        %v311 = vld [vmem:[%s270 + $0x60] sm:$0xf]
        %v312 = vld [vmem:[%s270 + $0x64] sm:$0xf]
        %v313 = vld [vmem:[%s270 + $0x68] sm:$0xf]
        %v314 = vld [vmem:[%s270 + $0x6c] sm:$0xf]
        %v315 = vld [vmem:[%s270 + $0x70] sm:$0xf]
        %v316 = vld [vmem:[%s270 + $0x74] sm:$0xf]
        %v317 = vld [vmem:[%s270 + $0x78] sm:$0xf]
        %v318 = vld [vmem:[%s270 + $0x7c] sm:$0xf]
        %v319 = vld [vmem:[%s270 + $0x80] sm:$0xf]
        %v320 = vld [vmem:[%s270 + $0x84] sm:$0xf]
        %v321 = vld [vmem:[%s270 + $0x88] sm:$0xf]
        %v322 = vld [vmem:[%s270 + $0x8c] sm:$0xf]
        %v323 = vld [vmem:[%s275] sm:$0xf]
        %v324 = vld [vmem:[%s275 + $0x4] sm:$0xf]
        %v325 = vld [vmem:[%s275 + $0x8] sm:$0xf]
        %v326 = vld [vmem:[%s275 + $0xc] sm:$0xf]
        %v327 = vld [vmem:[%s275 + $0x10] sm:$0xf]
        %v328 = vld [vmem:[%s275 + $0x14] sm:$0xf]
        %v329 = vld [vmem:[%s275 + $0x18] sm:$0xf]
        %v330 = vld [vmem:[%s275 + $0x1c] sm:$0xf]
        %v331 = vld [vmem:[%s275 + $0x20] sm:$0xf]
        %v332 = vld [vmem:[%s275 + $0x24] sm:$0xf]
        %v333 = vld [vmem:[%s275 + $0x28] sm:$0xf]
        %v334 = vld [vmem:[%s275 + $0x2c] sm:$0xf]
        %v335 = vld [vmem:[%s275 + $0x30] sm:$0xf]
        %v336 = vld [vmem:[%s275 + $0x34] sm:$0xf]
        %v337 = vld [vmem:[%s275 + $0x38] sm:$0xf]
        %v338 = vld [vmem:[%s275 + $0x3c] sm:$0xf]
        %v339 = vld [vmem:[%s275 + $0x40] sm:$0xf]
        %v340 = vld [vmem:[%s275 + $0x44] sm:$0xf]
        %v341 = vld [vmem:[%s275 + $0x48] sm:$0xf]
        %v342 = vld [vmem:[%s275 + $0x4c] sm:$0xf]
        %v343 = vld [vmem:[%s275 + $0x50] sm:$0xf]
        %v344 = vld [vmem:[%s275 + $0x54] sm:$0xf]
        %v345 = vld [vmem:[%s275 + $0x58] sm:$0xf]
        %v346 = vld [vmem:[%s275 + $0x5c] sm:$0xf]
        %v347 = vld [vmem:[%s275 + $0x60] sm:$0xf]
        %v348 = vld [vmem:[%s275 + $0x64] sm:$0xf]
        %v349 = vld [vmem:[%s275 + $0x68] sm:$0xf]
        %v350 = vld [vmem:[%s275 + $0x6c] sm:$0xf]
        %v351 = vld [vmem:[%s275 + $0x70] sm:$0xf]
        %v352 = vld [vmem:[%s275 + $0x74] sm:$0xf]
        %v353 = vld [vmem:[%s275 + $0x78] sm:$0xf]
        %v354 = vld [vmem:[%s275 + $0x7c] sm:$0xf]
        %v355 = vld [vmem:[%s275 + $0x80] sm:$0xf]
        %v356 = vld [vmem:[%s275 + $0x84] sm:$0xf]
        %v357 = vld [vmem:[%s275 + $0x88] sm:$0xf]
        %v358 = vld [vmem:[%s275 + $0x8c] sm:$0xf]
        %v359 = vld [vmem:[%s275 + $0x90] sm:$0xf]
        %v360 = vld [vmem:[%s275 + $0x94] sm:$0xf]
        %v361 = vld [vmem:[%s275 + $0x98] sm:$0xf]
        %v362 = vld [vmem:[%s275 + $0x9c] sm:$0xf]
        %v363 = vld [vmem:[%s275 + $0xa0] sm:$0xf]
        %v364 = vld [vmem:[%s275 + $0xa4] sm:$0xf]
        %v365 = vld [vmem:[%s275 + $0xa8] sm:$0xf]
        %v366 = vld [vmem:[%s275 + $0xac] sm:$0xf]
        %v367 = vld [vmem:[%s275 + $0xb0] sm:$0xf]
        %v368 = vld [vmem:[%s275 + $0xb4] sm:$0xf]
        %v369 = vld [vmem:[%s275 + $0xb8] sm:$0xf]
        %v370 = vld [vmem:[%s275 + $0xbc] sm:$0xf]
        %v371 = vld [vmem:[%s275 + $0xc0] sm:$0xf]
        %v372 = vld [vmem:[%s275 + $0xc4] sm:$0xf]
        %v373 = vld [vmem:[%s275 + $0xc8] sm:$0xf]
        %v374 = vld [vmem:[%s275 + $0xcc] sm:$0xf]
        %v375 = vld [vmem:[%s275 + $0xd0] sm:$0xf]
        %v376 = vld [vmem:[%s275 + $0xd4] sm:$0xf]
        %v377 = vld [vmem:[%s275 + $0xd8] sm:$0xf]
        %v378 = vld [vmem:[%s275 + $0xdc] sm:$0xf]
        %v379 = vld [vmem:[%s275 + $0xe0] sm:$0xf]
        %v380 = vld [vmem:[%s275 + $0xe4] sm:$0xf]
        %v381 = vld [vmem:[%s275 + $0xe8] sm:$0xf]
        %v382 = vld [vmem:[%s275 + $0xec] sm:$0xf]
        %v383 = vld [vmem:[%s275 + $0xf0] sm:$0xf]
        %v384 = vld [vmem:[%s275 + $0xf4] sm:$0xf]
        %v385 = vld [vmem:[%s275 + $0xf8] sm:$0xf]
        %v386 = vld [vmem:[%s275 + $0xfc] sm:$0xf]
        %v387 = vld [vmem:[%s280] sm:$0xf]
        %v388 = vld [vmem:[%s280 + $0x4] sm:$0xf]
        %v389 = vld [vmem:[%s280 + $0x8] sm:$0xf]
        %v390 = vld [vmem:[%s280 + $0xc] sm:$0xf]
        %v391 = vld [vmem:[%s280 + $0x10] sm:$0xf]
        %v392 = vld [vmem:[%s280 + $0x14] sm:$0xf]
        %v393 = vld [vmem:[%s280 + $0x18] sm:$0xf]
        %v394 = vld [vmem:[%s280 + $0x1c] sm:$0xf]
        %v395 = vld [vmem:[%s280 + $0x20] sm:$0xf]
        %v396 = vld [vmem:[%s280 + $0x24] sm:$0xf]
        %v397 = vld [vmem:[%s280 + $0x28] sm:$0xf]
        %v398 = vld [vmem:[%s280 + $0x2c] sm:$0xf]
        %v399 = vld [vmem:[%s280 + $0x30] sm:$0xf]
        %v400 = vld [vmem:[%s280 + $0x34] sm:$0xf]
        %v401 = vld [vmem:[%s280 + $0x38] sm:$0xf]
        %v402 = vld [vmem:[%s280 + $0x3c] sm:$0xf]
        %v403 = vld [vmem:[%s280 + $0x40] sm:$0xf]
        %v404 = vld [vmem:[%s280 + $0x44] sm:$0xf]
        %v405 = vld [vmem:[%s280 + $0x48] sm:$0xf]
        %v406 = vld [vmem:[%s280 + $0x4c] sm:$0xf]
        %v407 = vld [vmem:[%s280 + $0x50] sm:$0xf]
        %v408 = vld [vmem:[%s280 + $0x54] sm:$0xf]
        %v409 = vld [vmem:[%s280 + $0x58] sm:$0xf]
        %v410 = vld [vmem:[%s280 + $0x5c] sm:$0xf]
        %v411 = vld [vmem:[%s280 + $0x60] sm:$0xf]
        %v412 = vld [vmem:[%s280 + $0x64] sm:$0xf]
        %v413 = vld [vmem:[%s280 + $0x68] sm:$0xf]
        %v414 = vld [vmem:[%s280 + $0x6c] sm:$0xf]
        %v415 = vld [vmem:[%s280 + $0x70] sm:$0xf]
        %v416 = vld [vmem:[%s280 + $0x74] sm:$0xf]
        %v417 = vld [vmem:[%s280 + $0x78] sm:$0xf]
        %v418 = vld [vmem:[%s280 + $0x7c] sm:$0xf]
        %v419 = vld [vmem:[%s280 + $0x80] sm:$0xf]
        %v420 = vld [vmem:[%s280 + $0x84] sm:$0xf]
        %v421 = vld [vmem:[%s280 + $0x88] sm:$0xf]
        %v422 = vld [vmem:[%s280 + $0x8c] sm:$0xf]
        %v423 = vld [vmem:[%s280 + $0x90] sm:$0xf]
        %v424 = vld [vmem:[%s280 + $0x94] sm:$0xf]
        %v425 = vld [vmem:[%s280 + $0x98] sm:$0xf]
        %v426 = vld [vmem:[%s280 + $0x9c] sm:$0xf]
        %v427 = vld [vmem:[%s280 + $0xa0] sm:$0xf]
        %v428 = vld [vmem:[%s280 + $0xa4] sm:$0xf]
        %v429 = vld [vmem:[%s280 + $0xa8] sm:$0xf]
        %v430 = vld [vmem:[%s280 + $0xac] sm:$0xf]
        %v431 = vld [vmem:[%s280 + $0xb0] sm:$0xf]
        %v432 = vld [vmem:[%s280 + $0xb4] sm:$0xf]
        %v433 = vld [vmem:[%s280 + $0xb8] sm:$0xf]
        %v434 = vld [vmem:[%s280 + $0xbc] sm:$0xf]
        %v435 = vld [vmem:[%s280 + $0xc0] sm:$0xf]
        %v436 = vld [vmem:[%s280 + $0xc4] sm:$0xf]
        %v437 = vld [vmem:[%s280 + $0xc8] sm:$0xf]
        %v438 = vld [vmem:[%s280 + $0xcc] sm:$0xf]
        %v439 = vld [vmem:[%s280 + $0xd0] sm:$0xf]
        %v440 = vld [vmem:[%s280 + $0xd4] sm:$0xf]
        %v441 = vld [vmem:[%s280 + $0xd8] sm:$0xf]
        %v442 = vld [vmem:[%s280 + $0xdc] sm:$0xf]
        %v443 = vld [vmem:[%s280 + $0xe0] sm:$0xf]
        %v444 = vld [vmem:[%s280 + $0xe4] sm:$0xf]
        %v445 = vld [vmem:[%s280 + $0xe8] sm:$0xf]
        %v446 = vld [vmem:[%s280 + $0xec] sm:$0xf]
        %v447 = vld [vmem:[%s280 + $0xf0] sm:$0xf]
        %v448 = vld [vmem:[%s280 + $0xf4] sm:$0xf]
        %v449 = vld [vmem:[%s280 + $0xf8] sm:$0xf]
        %v450 = vld [vmem:[%s280 + $0xfc] sm:$0xf]
        %v460 = vunpack.c.l.b16 %v287
        %v461 = vunpack.c.l.b16 %v288
        %v462 = vunpack.c.l.b16 %v289
        %v463 = vunpack.c.l.b16 %v290
        %v464 = vunpack.c.l.b16 %v291
        %v465 = vunpack.c.l.b16 %v292
        %v466 = vunpack.c.l.b16 %v293
        %v467 = vunpack.c.l.b16 %v294
        %v468 = vunpack.c.l.b16 %v295
        %v469 = vpack.c.b16 %v461, %v460
        %v470 = vpack.c.b16 %v463, %v462
        %v471 = vpack.c.b16 %v465, %v464
        %v472 = vpack.c.b16 %v467, %v466
        %v473 = vpack.c.b16 %v468, %v468
        %v490 = vunpack.c.l.b16 %v323
        %v491 = vunpack.c.l.b16 %v324
        %v492 = vunpack.c.l.b16 %v325
        %v493 = vunpack.c.l.b16 %v326
        %v494 = vunpack.c.l.b16 %v327
        %v495 = vunpack.c.l.b16 %v328
        %v496 = vunpack.c.l.b16 %v329
        %v497 = vunpack.c.l.b16 %v330
        %v498 = vunpack.c.l.b16 %v331
        %v499 = vunpack.c.l.b16 %v332
        %v500 = vunpack.c.l.b16 %v333
        %v501 = vunpack.c.l.b16 %v334
        %v502 = vunpack.c.l.b16 %v335
        %v503 = vunpack.c.l.b16 %v336
        %v504 = vunpack.c.l.b16 %v337
        %v505 = vunpack.c.l.b16 %v338
        %v506 = vpack.c.b16 %v491, %v490
        %v507 = vpack.c.b16 %v493, %v492
        %v508 = vpack.c.b16 %v495, %v494
        %v509 = vpack.c.b16 %v497, %v496
        %v510 = vpack.c.b16 %v499, %v498
        %v511 = vpack.c.b16 %v501, %v500
        %v512 = vpack.c.b16 %v503, %v502
        %v513 = vpack.c.b16 %v505, %v504
        %vm514 = vcmask 64512
        %v516 = vsel %vm514, %v469, 0
        %v519 = vsel %vm514, %v470, 0
        %v522 = vsel %vm514, %v471, 0
        %v525 = vsel %vm514, %v472, 0
        %v528 = vsel %vm514, %v473, 0
        %v531 = vsel %vm514, %v506, 0
        %v534 = vsel %vm514, %v507, 0
        %v537 = vsel %vm514, %v508, 0
        %v540 = vsel %vm514, %v509, 0
        %v543 = vsel %vm514, %v510, 0
        %v546 = vsel %vm514, %v511, 0
        %v549 = vsel %vm514, %v512, 0
        %v552 = vsel %vm514, %v513, 0
        %554 = vmatprep.subr.bf16.mxu0 0
        %555 = vmatpush1.bf16.xpose.msra.mxu0 %v552
        %556 = vmatprep.subr.bf16.mxu0 0
        %557 = vmatpush1.bf16.xpose.msra.mxu0 %v549
        %558 = vmatprep.subr.bf16.mxu0 0
        %559 = vmatpush1.bf16.xpose.msra.mxu0 %v546
        %560 = vmatprep.subr.bf16.mxu0 0
        %561 = vmatpush1.bf16.xpose.msra.mxu0 %v543
        %562 = vmatprep.subr.bf16.mxu0 0
        %563 = vmatpush1.bf16.xpose.msra.mxu0 %v540
        %564 = vmatprep.subr.bf16.mxu0 0
        %565 = vmatpush1.bf16.xpose.msra.mxu0 %v537
        %566 = vmatprep.subr.bf16.mxu0 0
        %567 = vmatpush1.bf16.xpose.msra.mxu0 %v534
        %568 = vmatprep.subr.bf16.mxu0 0
        %569 = vmatpush1.bf16.xpose.msra.mxu0 %v531
        %570 = vmatprep.subr.bf16.mxu0 0
        %571 = vmatpush2.bf16.xpose.msra.mxu0 0
        %572 = vmatprep.subr.bf16.mxu0 0
        %573 = vmatpush2.bf16.xpose.msra.mxu0 0
        %574 = vmatprep.subr.bf16.mxu0 0
        %575 = vmatpush2.bf16.xpose.msra.mxu0 0
        %576 = vmatprep.subr.bf16.mxu0 0
        %577 = vmatpush2.bf16.xpose.msra.mxu0 0
        %578 = vmatprep.subr.bf16.mxu0 0
        %579 = vmatpush2.bf16.xpose.msra.mxu0 0
        %580 = vmatprep.subr.bf16.mxu0 0
        %581 = vmatpush2.bf16.xpose.msra.mxu0 0
        %582 = vmatprep.subr.bf16.mxu0 0
        %583 = vmatpush2.bf16.xpose.msra.mxu0 0
        %584 = vmatprep.subr.bf16.mxu0 0
        %585 = vmatpush2.bf16.xpose.msra.mxu0 0
        %586 = vmatprep.mubr.bf16.mxu0 0
        %587 = vmatmul.mubr.bf16.gmra.mxu0 %v516
        %v588 = vpop.f32.mrf.mxu0
        %v589 = vadd.f32 0.0, %v588
        %v590 = vpop.f32.mrf.mxu0
        %v591 = vpop.f32.mrf.mxu0
        %v592 = vadd.f32 0.0, %v591
        %v593 = vpop.f32.mrf.mxu0
        %594 = vmatprep.mubr.bf16.mxu0 0
        %595 = vmatmul.mubr.bf16.gmra.mxu0 %v519
        %v596 = vpop.f32.mrf.mxu0
        %v597 = vadd.f32 0.0, %v596
        %v598 = vpop.f32.mrf.mxu0
        %v599 = vpop.f32.mrf.mxu0
        %v600 = vadd.f32 0.0, %v599
        %v601 = vpop.f32.mrf.mxu0
        %602 = vmatprep.mubr.bf16.mxu0 0
        %603 = vmatmul.mubr.bf16.gmra.mxu0 %v522
        %v604 = vpop.f32.mrf.mxu0
        %v605 = vadd.f32 0.0, %v604
        %v606 = vpop.f32.mrf.mxu0
        %v607 = vpop.f32.mrf.mxu0
        %v608 = vadd.f32 0.0, %v607
        %v609 = vpop.f32.mrf.mxu0
        %610 = vmatprep.mubr.bf16.mxu0 0
        %611 = vmatmul.mubr.bf16.gmra.mxu0 %v525
        %v612 = vpop.f32.mrf.mxu0
        %v613 = vadd.f32 0.0, %v612
        %v614 = vpop.f32.mrf.mxu0
        %v615 = vpop.f32.mrf.mxu0
        %v616 = vadd.f32 0.0, %v615
        %v617 = vpop.f32.mrf.mxu0
        %618 = vmatprep.mubr.bf16.mxu0 0
        %619 = vmatmul.mubr.bf16.gmra.mxu0 %v528
        %v620 = vpop.f32.mrf.mxu0
        %v621 = vadd.f32 0.0, %v620
        %v622 = vpop.f32.mrf.mxu0
        %v623 = vpop.f32.mrf.mxu0
        %v624 = vpop.f32.mrf.mxu0
        %625 = vdwg.mxu0
        %v635 = vunpack.c.l.b16 %v296
        %v636 = vunpack.c.l.b16 %v297
        %v637 = vunpack.c.l.b16 %v298
        %v638 = vunpack.c.l.b16 %v299
        %v639 = vunpack.c.l.b16 %v300
        %v640 = vunpack.c.l.b16 %v301
        %v641 = vunpack.c.l.b16 %v302
        %v642 = vunpack.c.l.b16 %v303
        %v643 = vunpack.c.l.b16 %v304
        %v644 = vpack.c.b16 %v636, %v635
        %v645 = vpack.c.b16 %v638, %v637
        %v646 = vpack.c.b16 %v640, %v639
        %v647 = vpack.c.b16 %v642, %v641
        %v648 = vpack.c.b16 %v643, %v643
        %v665 = vunpack.c.l.b16 %v339
        %v666 = vunpack.c.l.b16 %v340
        %v667 = vunpack.c.l.b16 %v341
        %v668 = vunpack.c.l.b16 %v342
        %v669 = vunpack.c.l.b16 %v343
        %v670 = vunpack.c.l.b16 %v344
        %v671 = vunpack.c.l.b16 %v345
        %v672 = vunpack.c.l.b16 %v346
        %v673 = vunpack.c.l.b16 %v347
        %v674 = vunpack.c.l.b16 %v348
        %v675 = vunpack.c.l.b16 %v349
        %v676 = vunpack.c.l.b16 %v350
        %v677 = vunpack.c.l.b16 %v351
        %v678 = vunpack.c.l.b16 %v352
        %v679 = vunpack.c.l.b16 %v353
        %v680 = vunpack.c.l.b16 %v354
        %v681 = vpack.c.b16 %v666, %v665
        %v682 = vpack.c.b16 %v668, %v667
        %v683 = vpack.c.b16 %v670, %v669
        %v684 = vpack.c.b16 %v672, %v671
        %v685 = vpack.c.b16 %v674, %v673
        %v686 = vpack.c.b16 %v676, %v675
        %v687 = vpack.c.b16 %v678, %v677
        %v688 = vpack.c.b16 %v680, %v679
        %v690 = vsel %vm514, %v644, 0
        %v693 = vsel %vm514, %v645, 0
        %v696 = vsel %vm514, %v646, 0
        %v699 = vsel %vm514, %v647, 0
        %v702 = vsel %vm514, %v648, 0
        %v705 = vsel %vm514, %v681, 0
        %v708 = vsel %vm514, %v682, 0
        %v711 = vsel %vm514, %v683, 0
        %v714 = vsel %vm514, %v684, 0
        %v717 = vsel %vm514, %v685, 0
        %v720 = vsel %vm514, %v686, 0
        %v723 = vsel %vm514, %v687, 0
        %v726 = vsel %vm514, %v688, 0
        %728 = vmatprep.subr.bf16.mxu0 0
        %729 = vmatpush1.bf16.xpose.msra.mxu0 %v726
        %730 = vmatprep.subr.bf16.mxu0 0
        %731 = vmatpush1.bf16.xpose.msra.mxu0 %v723
        %732 = vmatprep.subr.bf16.mxu0 0
        %733 = vmatpush1.bf16.xpose.msra.mxu0 %v720
        %734 = vmatprep.subr.bf16.mxu0 0
        %735 = vmatpush1.bf16.xpose.msra.mxu0 %v717
        %736 = vmatprep.subr.bf16.mxu0 0
        %737 = vmatpush1.bf16.xpose.msra.mxu0 %v714
        %738 = vmatprep.subr.bf16.mxu0 0
        %739 = vmatpush1.bf16.xpose.msra.mxu0 %v711
        %740 = vmatprep.subr.bf16.mxu0 0
        %741 = vmatpush1.bf16.xpose.msra.mxu0 %v708
        %742 = vmatprep.subr.bf16.mxu0 0
        %743 = vmatpush1.bf16.xpose.msra.mxu0 %v705
        %744 = vmatprep.subr.bf16.mxu0 0
        %745 = vmatpush2.bf16.xpose.msra.mxu0 0
        %746 = vmatprep.subr.bf16.mxu0 0
        %747 = vmatpush2.bf16.xpose.msra.mxu0 0
        %748 = vmatprep.subr.bf16.mxu0 0
        %749 = vmatpush2.bf16.xpose.msra.mxu0 0
        %750 = vmatprep.subr.bf16.mxu0 0
        %751 = vmatpush2.bf16.xpose.msra.mxu0 0
        %752 = vmatprep.subr.bf16.mxu0 0
        %753 = vmatpush2.bf16.xpose.msra.mxu0 0
        %754 = vmatprep.subr.bf16.mxu0 0
        %755 = vmatpush2.bf16.xpose.msra.mxu0 0
        %756 = vmatprep.subr.bf16.mxu0 0
        %757 = vmatpush2.bf16.xpose.msra.mxu0 0
        %758 = vmatprep.subr.bf16.mxu0 0
        %759 = vmatpush2.bf16.xpose.msra.mxu0 0
        %760 = vmatprep.mubr.bf16.mxu0 0
        %761 = vmatmul.mubr.bf16.gmra.mxu0 %v690
        %v762 = vpop.f32.mrf.mxu0
        %v763 = vadd.f32 0.0, %v762
        %v764 = vpop.f32.mrf.mxu0
        %v765 = vpop.f32.mrf.mxu0
        %v766 = vadd.f32 0.0, %v765
        %v767 = vpop.f32.mrf.mxu0
        %768 = vmatprep.mubr.bf16.mxu0 0
        %769 = vmatmul.mubr.bf16.gmra.mxu0 %v693
        %v770 = vpop.f32.mrf.mxu0
        %v771 = vadd.f32 0.0, %v770
        %v772 = vpop.f32.mrf.mxu0
        %v773 = vpop.f32.mrf.mxu0
        %v774 = vadd.f32 0.0, %v773
        %v775 = vpop.f32.mrf.mxu0
        %776 = vmatprep.mubr.bf16.mxu0 0
        %777 = vmatmul.mubr.bf16.gmra.mxu0 %v696
        %v778 = vpop.f32.mrf.mxu0
        %v779 = vadd.f32 0.0, %v778
        %v780 = vpop.f32.mrf.mxu0
        %v781 = vpop.f32.mrf.mxu0
        %v782 = vadd.f32 0.0, %v781
        %v783 = vpop.f32.mrf.mxu0
        %784 = vmatprep.mubr.bf16.mxu0 0
        %785 = vmatmul.mubr.bf16.gmra.mxu0 %v699
        %v786 = vpop.f32.mrf.mxu0
        %v787 = vadd.f32 0.0, %v786
        %v788 = vpop.f32.mrf.mxu0
        %v789 = vpop.f32.mrf.mxu0
        %v790 = vadd.f32 0.0, %v789
        %v791 = vpop.f32.mrf.mxu0
        %792 = vmatprep.mubr.bf16.mxu0 0
        %793 = vmatmul.mubr.bf16.gmra.mxu0 %v702
        %v794 = vpop.f32.mrf.mxu0
        %v795 = vadd.f32 0.0, %v794
        %v796 = vpop.f32.mrf.mxu0
        %v797 = vpop.f32.mrf.mxu0
        %v798 = vpop.f32.mrf.mxu0
        %799 = vdwg.mxu0
        %v809 = vunpack.c.l.b16 %v305
        %v810 = vunpack.c.l.b16 %v306
        %v811 = vunpack.c.l.b16 %v307
        %v812 = vunpack.c.l.b16 %v308
        %v813 = vunpack.c.l.b16 %v309
        %v814 = vunpack.c.l.b16 %v310
        %v815 = vunpack.c.l.b16 %v311
        %v816 = vunpack.c.l.b16 %v312
        %v817 = vunpack.c.l.b16 %v313
        %v818 = vpack.c.b16 %v810, %v809
        %v819 = vpack.c.b16 %v812, %v811
        %v820 = vpack.c.b16 %v814, %v813
        %v821 = vpack.c.b16 %v816, %v815
        %v822 = vpack.c.b16 %v817, %v817
        %v839 = vunpack.c.l.b16 %v355
        %v840 = vunpack.c.l.b16 %v356
        %v841 = vunpack.c.l.b16 %v357
        %v842 = vunpack.c.l.b16 %v358
        %v843 = vunpack.c.l.b16 %v359
        %v844 = vunpack.c.l.b16 %v360
        %v845 = vunpack.c.l.b16 %v361
        %v846 = vunpack.c.l.b16 %v362
        %v847 = vunpack.c.l.b16 %v363
        %v848 = vunpack.c.l.b16 %v364
        %v849 = vunpack.c.l.b16 %v365
        %v850 = vunpack.c.l.b16 %v366
        %v851 = vunpack.c.l.b16 %v367
        %v852 = vunpack.c.l.b16 %v368
        %v853 = vunpack.c.l.b16 %v369
        %v854 = vunpack.c.l.b16 %v370
        %v855 = vpack.c.b16 %v840, %v839
        %v856 = vpack.c.b16 %v842, %v841
        %v857 = vpack.c.b16 %v844, %v843
        %v858 = vpack.c.b16 %v846, %v845
        %v859 = vpack.c.b16 %v848, %v847
        %v860 = vpack.c.b16 %v850, %v849
        %v861 = vpack.c.b16 %v852, %v851
        %v862 = vpack.c.b16 %v854, %v853
        %v864 = vsel %vm514, %v818, 0
        %v867 = vsel %vm514, %v819, 0
        %v870 = vsel %vm514, %v820, 0
        %v873 = vsel %vm514, %v821, 0
        %v876 = vsel %vm514, %v822, 0
        %v879 = vsel %vm514, %v855, 0
        %v882 = vsel %vm514, %v856, 0
        %v885 = vsel %vm514, %v857, 0
        %v888 = vsel %vm514, %v858, 0
        %v891 = vsel %vm514, %v859, 0
        %v894 = vsel %vm514, %v860, 0
        %v897 = vsel %vm514, %v861, 0
        %v900 = vsel %vm514, %v862, 0
        %902 = vmatprep.subr.bf16.mxu0 0
        %903 = vmatpush1.bf16.xpose.msra.mxu0 %v900
        %904 = vmatprep.subr.bf16.mxu0 0
        %905 = vmatpush1.bf16.xpose.msra.mxu0 %v897
        %906 = vmatprep.subr.bf16.mxu0 0
        %907 = vmatpush1.bf16.xpose.msra.mxu0 %v894
        %908 = vmatprep.subr.bf16.mxu0 0
        %909 = vmatpush1.bf16.xpose.msra.mxu0 %v891
        %910 = vmatprep.subr.bf16.mxu0 0
        %911 = vmatpush1.bf16.xpose.msra.mxu0 %v888
        %912 = vmatprep.subr.bf16.mxu0 0
        %913 = vmatpush1.bf16.xpose.msra.mxu0 %v885
        %914 = vmatprep.subr.bf16.mxu0 0
        %915 = vmatpush1.bf16.xpose.msra.mxu0 %v882
        %916 = vmatprep.subr.bf16.mxu0 0
        %917 = vmatpush1.bf16.xpose.msra.mxu0 %v879
        %918 = vmatprep.subr.bf16.mxu0 0
        %919 = vmatpush2.bf16.xpose.msra.mxu0 0
        %920 = vmatprep.subr.bf16.mxu0 0
        %921 = vmatpush2.bf16.xpose.msra.mxu0 0
        %922 = vmatprep.subr.bf16.mxu0 0
        %923 = vmatpush2.bf16.xpose.msra.mxu0 0
        %924 = vmatprep.subr.bf16.mxu0 0
        %925 = vmatpush2.bf16.xpose.msra.mxu0 0
        %926 = vmatprep.subr.bf16.mxu0 0
        %927 = vmatpush2.bf16.xpose.msra.mxu0 0
        %928 = vmatprep.subr.bf16.mxu0 0
        %929 = vmatpush2.bf16.xpose.msra.mxu0 0
        %930 = vmatprep.subr.bf16.mxu0 0
        %931 = vmatpush2.bf16.xpose.msra.mxu0 0
        %932 = vmatprep.subr.bf16.mxu0 0
        %933 = vmatpush2.bf16.xpose.msra.mxu0 0
        %934 = vmatprep.mubr.bf16.mxu0 0
        %935 = vmatmul.mubr.bf16.gmra.mxu0 %v864
        %v936 = vpop.f32.mrf.mxu0
        %v937 = vadd.f32 0.0, %v936
        %v938 = vpop.f32.mrf.mxu0
        %v939 = vpop.f32.mrf.mxu0
        %v940 = vadd.f32 0.0, %v939
        %v941 = vpop.f32.mrf.mxu0
        %942 = vmatprep.mubr.bf16.mxu0 0
        %943 = vmatmul.mubr.bf16.gmra.mxu0 %v867
        %v944 = vpop.f32.mrf.mxu0
        %v945 = vadd.f32 0.0, %v944
        %v946 = vpop.f32.mrf.mxu0
        %v947 = vpop.f32.mrf.mxu0
        %v948 = vadd.f32 0.0, %v947
        %v949 = vpop.f32.mrf.mxu0
        %950 = vmatprep.mubr.bf16.mxu0 0
        %951 = vmatmul.mubr.bf16.gmra.mxu0 %v870
        %v952 = vpop.f32.mrf.mxu0
        %v953 = vadd.f32 0.0, %v952
        %v954 = vpop.f32.mrf.mxu0
        %v955 = vpop.f32.mrf.mxu0
        %v956 = vadd.f32 0.0, %v955
        %v957 = vpop.f32.mrf.mxu0
        %958 = vmatprep.mubr.bf16.mxu0 0
        %959 = vmatmul.mubr.bf16.gmra.mxu0 %v873
        %v960 = vpop.f32.mrf.mxu0
        %v961 = vadd.f32 0.0, %v960
        %v962 = vpop.f32.mrf.mxu0
        %v963 = vpop.f32.mrf.mxu0
        %v964 = vadd.f32 0.0, %v963
        %v965 = vpop.f32.mrf.mxu0
        %966 = vmatprep.mubr.bf16.mxu0 0
        %967 = vmatmul.mubr.bf16.gmra.mxu0 %v876
        %v968 = vpop.f32.mrf.mxu0
        %v969 = vadd.f32 0.0, %v968
        %v970 = vpop.f32.mrf.mxu0
        %v971 = vpop.f32.mrf.mxu0
        %v972 = vpop.f32.mrf.mxu0
        %973 = vdwg.mxu0
        %v983 = vunpack.c.l.b16 %v314
        %v984 = vunpack.c.l.b16 %v315
        %v985 = vunpack.c.l.b16 %v316
        %v986 = vunpack.c.l.b16 %v317
        %v987 = vunpack.c.l.b16 %v318
        %v988 = vunpack.c.l.b16 %v319
        %v989 = vunpack.c.l.b16 %v320
        %v990 = vunpack.c.l.b16 %v321
        %v991 = vunpack.c.l.b16 %v322
        %v992 = vpack.c.b16 %v984, %v983
        %v993 = vpack.c.b16 %v986, %v985
        %v994 = vpack.c.b16 %v988, %v987
        %v995 = vpack.c.b16 %v990, %v989
        %v996 = vpack.c.b16 %v991, %v991
        %v1013 = vunpack.c.l.b16 %v371
        %v1014 = vunpack.c.l.b16 %v372
        %v1015 = vunpack.c.l.b16 %v373
        %v1016 = vunpack.c.l.b16 %v374
        %v1017 = vunpack.c.l.b16 %v375
        %v1018 = vunpack.c.l.b16 %v376
        %v1019 = vunpack.c.l.b16 %v377
        %v1020 = vunpack.c.l.b16 %v378
        %v1021 = vunpack.c.l.b16 %v379
        %v1022 = vunpack.c.l.b16 %v380
        %v1023 = vunpack.c.l.b16 %v381
        %v1024 = vunpack.c.l.b16 %v382
        %v1025 = vunpack.c.l.b16 %v383
        %v1026 = vunpack.c.l.b16 %v384
        %v1027 = vunpack.c.l.b16 %v385
        %v1028 = vunpack.c.l.b16 %v386
        %v1029 = vpack.c.b16 %v1014, %v1013
        %v1030 = vpack.c.b16 %v1016, %v1015
        %v1031 = vpack.c.b16 %v1018, %v1017
        %v1032 = vpack.c.b16 %v1020, %v1019
        %v1033 = vpack.c.b16 %v1022, %v1021
        %v1034 = vpack.c.b16 %v1024, %v1023
        %v1035 = vpack.c.b16 %v1026, %v1025
        %v1036 = vpack.c.b16 %v1028, %v1027
        %v1038 = vsel %vm514, %v992, 0
        %v1041 = vsel %vm514, %v993, 0
        %v1044 = vsel %vm514, %v994, 0
        %v1047 = vsel %vm514, %v995, 0
        %v1050 = vsel %vm514, %v996, 0
        %v1053 = vsel %vm514, %v1029, 0
        %v1056 = vsel %vm514, %v1030, 0
        %v1059 = vsel %vm514, %v1031, 0
        %v1062 = vsel %vm514, %v1032, 0
        %v1065 = vsel %vm514, %v1033, 0
        %v1068 = vsel %vm514, %v1034, 0
        %v1071 = vsel %vm514, %v1035, 0
        %v1074 = vsel %vm514, %v1036, 0
        %1076 = vmatprep.subr.bf16.mxu0 0
        %1077 = vmatpush1.bf16.xpose.msra.mxu0 %v1074
        %1078 = vmatprep.subr.bf16.mxu0 0
        %1079 = vmatpush1.bf16.xpose.msra.mxu0 %v1071
        %1080 = vmatprep.subr.bf16.mxu0 0
        %1081 = vmatpush1.bf16.xpose.msra.mxu0 %v1068
        %1082 = vmatprep.subr.bf16.mxu0 0
        %1083 = vmatpush1.bf16.xpose.msra.mxu0 %v1065
        %1084 = vmatprep.subr.bf16.mxu0 0
        %1085 = vmatpush1.bf16.xpose.msra.mxu0 %v1062
        %1086 = vmatprep.subr.bf16.mxu0 0
        %1087 = vmatpush1.bf16.xpose.msra.mxu0 %v1059
        %1088 = vmatprep.subr.bf16.mxu0 0
        %1089 = vmatpush1.bf16.xpose.msra.mxu0 %v1056
        %1090 = vmatprep.subr.bf16.mxu0 0
        %1091 = vmatpush1.bf16.xpose.msra.mxu0 %v1053
        %1092 = vmatprep.subr.bf16.mxu0 0
        %1093 = vmatpush2.bf16.xpose.msra.mxu0 0
        %1094 = vmatprep.subr.bf16.mxu0 0
        %1095 = vmatpush2.bf16.xpose.msra.mxu0 0
        %1096 = vmatprep.subr.bf16.mxu0 0
        %1097 = vmatpush2.bf16.xpose.msra.mxu0 0
        %1098 = vmatprep.subr.bf16.mxu0 0
        %1099 = vmatpush2.bf16.xpose.msra.mxu0 0
        %1100 = vmatprep.subr.bf16.mxu0 0
        %1101 = vmatpush2.bf16.xpose.msra.mxu0 0
        %1102 = vmatprep.subr.bf16.mxu0 0
        %1103 = vmatpush2.bf16.xpose.msra.mxu0 0
        %1104 = vmatprep.subr.bf16.mxu0 0
        %1105 = vmatpush2.bf16.xpose.msra.mxu0 0
        %1106 = vmatprep.subr.bf16.mxu0 0
        %1107 = vmatpush2.bf16.xpose.msra.mxu0 0
        %1108 = vmatprep.mubr.bf16.mxu0 0
        %1109 = vmatmul.mubr.bf16.gmra.mxu0 %v1038
        %v1110 = vpop.f32.mrf.mxu0
        %v1111 = vadd.f32 0.0, %v1110
        %v1112 = vpop.f32.mrf.mxu0
        %v1113 = vpop.f32.mrf.mxu0
        %v1114 = vadd.f32 0.0, %v1113
        %v1115 = vpop.f32.mrf.mxu0
        %1116 = vmatprep.mubr.bf16.mxu0 0
        %1117 = vmatmul.mubr.bf16.gmra.mxu0 %v1041
        %v1118 = vpop.f32.mrf.mxu0
        %v1119 = vadd.f32 0.0, %v1118
        %v1120 = vpop.f32.mrf.mxu0
        %v1121 = vpop.f32.mrf.mxu0
        %v1122 = vadd.f32 0.0, %v1121
        %v1123 = vpop.f32.mrf.mxu0
        %1124 = vmatprep.mubr.bf16.mxu0 0
        %1125 = vmatmul.mubr.bf16.gmra.mxu0 %v1044
        %v1126 = vpop.f32.mrf.mxu0
        %v1127 = vadd.f32 0.0, %v1126
        %v1128 = vpop.f32.mrf.mxu0
        %v1129 = vpop.f32.mrf.mxu0
        %v1130 = vadd.f32 0.0, %v1129
        %v1131 = vpop.f32.mrf.mxu0
        %1132 = vmatprep.mubr.bf16.mxu0 0
        %1133 = vmatmul.mubr.bf16.gmra.mxu0 %v1047
        %v1134 = vpop.f32.mrf.mxu0
        %v1135 = vadd.f32 0.0, %v1134
        %v1136 = vpop.f32.mrf.mxu0
        %v1137 = vpop.f32.mrf.mxu0
        %v1138 = vadd.f32 0.0, %v1137
        %v1139 = vpop.f32.mrf.mxu0
        %1140 = vmatprep.mubr.bf16.mxu0 0
        %1141 = vmatmul.mubr.bf16.gmra.mxu0 %v1050
        %v1142 = vpop.f32.mrf.mxu0
        %v1143 = vadd.f32 0.0, %v1142
        %v1144 = vpop.f32.mrf.mxu0
        %v1145 = vpop.f32.mrf.mxu0
        %v1146 = vpop.f32.mrf.mxu0
        %1147 = vdwg.mxu0
        %1148 = vst [vmem:[%s251] sm:$0xff] %v589
        %1149 = vst [vmem:[%s251 + $0x8] sm:$0xff] %v592
        %1150 = vst [vmem:[%s251 + $0x10] sm:$0xff] %v597
        %1151 = vst [vmem:[%s251 + $0x18] sm:$0xff] %v600
        %1152 = vst [vmem:[%s251 + $0x20] sm:$0xff] %v605
        %1153 = vst [vmem:[%s251 + $0x28] sm:$0xff] %v608
        %1154 = vst [vmem:[%s251 + $0x30] sm:$0xff] %v613
        %1155 = vst [vmem:[%s251 + $0x38] sm:$0xff] %v616
        %1156 = vst [vmem:[%s251 + $0x40] sm:$0xff] %v621
        %1157 = vst [vmem:[%s251 + $0x48] sm:$0xff] %v763
        %1158 = vst [vmem:[%s251 + $0x50] sm:$0xff] %v766
        %1159 = vst [vmem:[%s251 + $0x58] sm:$0xff] %v771
        %1160 = vst [vmem:[%s251 + $0x60] sm:$0xff] %v774
        %1161 = vst [vmem:[%s251 + $0x68] sm:$0xff] %v779
        %1162 = vst [vmem:[%s251 + $0x70] sm:$0xff] %v782
        %1163 = vst [vmem:[%s251 + $0x78] sm:$0xff] %v787
        %1164 = vst [vmem:[%s251 + $0x80] sm:$0xff] %v790
        %1165 = vst [vmem:[%s251 + $0x88] sm:$0xff] %v795
        %1166 = vst [vmem:[%s251 + $0x90] sm:$0xff] %v937
        %1167 = vst [vmem:[%s251 + $0x98] sm:$0xff] %v940
        %1168 = vst [vmem:[%s251 + $0xa0] sm:$0xff] %v945
        %1169 = vst [vmem:[%s251 + $0xa8] sm:$0xff] %v948
        %1170 = vst [vmem:[%s251 + $0xb0] sm:$0xff] %v953
        %1171 = vst [vmem:[%s251 + $0xb8] sm:$0xff] %v956
        %1172 = vst [vmem:[%s251 + $0xc0] sm:$0xff] %v961
        %1173 = vst [vmem:[%s251 + $0xc8] sm:$0xff] %v964
        %1174 = vst [vmem:[%s251 + $0xd0] sm:$0xff] %v969
        %1175 = vst [vmem:[%s251 + $0xd8] sm:$0xff] %v1111
        %1176 = vst [vmem:[%s251 + $0xe0] sm:$0xff] %v1114
        %1177 = vst [vmem:[%s251 + $0xe8] sm:$0xff] %v1119
        %1178 = vst [vmem:[%s251 + $0xf0] sm:$0xff] %v1122
        %1179 = vst [vmem:[%s251 + $0xf8] sm:$0xff] %v1127
        %1180 = vst [vmem:[%s251 + $0x100] sm:$0xff] %v1130
        %1181 = vst [vmem:[%s251 + $0x108] sm:$0xff] %v1135
        %1182 = vst [vmem:[%s251 + $0x110] sm:$0xff] %v1138
        %1183 = vst [vmem:[%s251 + $0x118] sm:$0xff] %v1143
        %v1184 = vlaneseq
        %v1185 = vand.u32 %v1184, 127
        %vm1186 = vcmp.ge.s32.totalorder %v1185, 72
        %v1187 = vsel %vm1186, -1e+30, 0.0
        %v1188 = vmul.f32 %v589, 0.35355338
        %v1189 = vmul.f32 %v592, 0.35355338
        %v1190 = vmul.f32 %v597, 0.35355338
        %v1191 = vmul.f32 %v600, 0.35355338
        %v1192 = vmul.f32 %v605, 0.35355338
        %v1193 = vmul.f32 %v608, 0.35355338
        %v1194 = vmul.f32 %v613, 0.35355338
        %v1195 = vmul.f32 %v616, 0.35355338
        %v1196 = vmul.f32 %v621, 0.35355338
        %v1197 = vmul.f32 %v763, 0.35355338
        %v1198 = vmul.f32 %v766, 0.35355338
        %v1199 = vmul.f32 %v771, 0.35355338
        %v1200 = vmul.f32 %v774, 0.35355338
        %v1201 = vmul.f32 %v779, 0.35355338
        %v1202 = vmul.f32 %v782, 0.35355338
        %v1203 = vmul.f32 %v787, 0.35355338
        %v1204 = vmul.f32 %v790, 0.35355338
        %v1205 = vmul.f32 %v795, 0.35355338
        %v1206 = vmul.f32 %v937, 0.35355338
        %v1207 = vmul.f32 %v940, 0.35355338
        %v1208 = vmul.f32 %v945, 0.35355338
        %v1209 = vmul.f32 %v948, 0.35355338
        %v1210 = vmul.f32 %v953, 0.35355338
        %v1211 = vmul.f32 %v956, 0.35355338
        %v1212 = vmul.f32 %v961, 0.35355338
        %v1213 = vmul.f32 %v964, 0.35355338
        %v1214 = vmul.f32 %v969, 0.35355338
        %v1215 = vmul.f32 %v1111, 0.35355338
        %v1216 = vmul.f32 %v1114, 0.35355338
        %v1217 = vmul.f32 %v1119, 0.35355338
        %v1218 = vmul.f32 %v1122, 0.35355338
        %v1219 = vmul.f32 %v1127, 0.35355338
        %v1220 = vmul.f32 %v1130, 0.35355338
        %v1221 = vmul.f32 %v1135, 0.35355338
        %v1222 = vmul.f32 %v1138, 0.35355338
        %v1223 = vmul.f32 %v1143, 0.35355338
        %v1224 = vadd.f32 %v1188, %v1187
        %v1225 = vadd.f32 %v1189, %v1187
        %v1226 = vadd.f32 %v1190, %v1187
        %v1227 = vadd.f32 %v1191, %v1187
        %v1228 = vadd.f32 %v1192, %v1187
        %v1229 = vadd.f32 %v1193, %v1187
        %v1230 = vadd.f32 %v1194, %v1187
        %v1231 = vadd.f32 %v1195, %v1187
        %v1232 = vadd.f32 %v1196, %v1187
        %v1233 = vadd.f32 %v1197, %v1187
        %v1234 = vadd.f32 %v1198, %v1187
        %v1235 = vadd.f32 %v1199, %v1187
        %v1236 = vadd.f32 %v1200, %v1187
        %v1237 = vadd.f32 %v1201, %v1187
        %v1238 = vadd.f32 %v1202, %v1187
        %v1239 = vadd.f32 %v1203, %v1187
        %v1240 = vadd.f32 %v1204, %v1187
        %v1241 = vadd.f32 %v1205, %v1187
        %v1242 = vadd.f32 %v1206, %v1187
        %v1243 = vadd.f32 %v1207, %v1187
        %v1244 = vadd.f32 %v1208, %v1187
        %v1245 = vadd.f32 %v1209, %v1187
        %v1246 = vadd.f32 %v1210, %v1187
        %v1247 = vadd.f32 %v1211, %v1187
        %v1248 = vadd.f32 %v1212, %v1187
        %v1249 = vadd.f32 %v1213, %v1187
        %v1250 = vadd.f32 %v1214, %v1187
        %v1251 = vadd.f32 %v1215, %v1187
        %v1252 = vadd.f32 %v1216, %v1187
        %v1253 = vadd.f32 %v1217, %v1187
        %v1254 = vadd.f32 %v1218, %v1187
        %v1255 = vadd.f32 %v1219, %v1187
        %v1256 = vadd.f32 %v1220, %v1187
        %v1257 = vadd.f32 %v1221, %v1187
        %v1258 = vadd.f32 %v1222, %v1187
        %v1259 = vadd.f32 %v1223, %v1187
        %1260 = vmax.xlane.f32.xlu0 %v1224
        %v1261 = vpop.xlane.xlu0 %1260
        %1262 = vmax.xlane.f32.xlu0 %v1225
        %v1263 = vpop.xlane.xlu0 %1262
        %1264 = vmax.xlane.f32.xlu0 %v1226
        %v1265 = vpop.xlane.xlu0 %1264
        %1266 = vmax.xlane.f32.xlu0 %v1227
        %v1267 = vpop.xlane.xlu0 %1266
        %1268 = vmax.xlane.f32.xlu0 %v1228
        %v1269 = vpop.xlane.xlu0 %1268
        %1270 = vmax.xlane.f32.xlu0 %v1229
        %v1271 = vpop.xlane.xlu0 %1270
        %1272 = vmax.xlane.f32.xlu0 %v1230
        %v1273 = vpop.xlane.xlu0 %1272
        %1274 = vmax.xlane.f32.xlu0 %v1231
        %v1275 = vpop.xlane.xlu0 %1274
        %1276 = vmax.xlane.f32.xlu0 %v1232
        %v1277 = vpop.xlane.xlu0 %1276
        %1278 = vmax.xlane.f32.xlu0 %v1233
        %v1279 = vpop.xlane.xlu0 %1278
        %1280 = vmax.xlane.f32.xlu0 %v1234
        %v1281 = vpop.xlane.xlu0 %1280
        %1282 = vmax.xlane.f32.xlu0 %v1235
        %v1283 = vpop.xlane.xlu0 %1282
        %1284 = vmax.xlane.f32.xlu0 %v1236
        %v1285 = vpop.xlane.xlu0 %1284
        %1286 = vmax.xlane.f32.xlu0 %v1237
        %v1287 = vpop.xlane.xlu0 %1286
        %1288 = vmax.xlane.f32.xlu0 %v1238
        %v1289 = vpop.xlane.xlu0 %1288
        %1290 = vmax.xlane.f32.xlu0 %v1239
        %v1291 = vpop.xlane.xlu0 %1290
        %1292 = vmax.xlane.f32.xlu0 %v1240
        %v1293 = vpop.xlane.xlu0 %1292
        %1294 = vmax.xlane.f32.xlu0 %v1241
        %v1295 = vpop.xlane.xlu0 %1294
        %1296 = vmax.xlane.f32.xlu0 %v1242
        %v1297 = vpop.xlane.xlu0 %1296
        %1298 = vmax.xlane.f32.xlu0 %v1243
        %v1299 = vpop.xlane.xlu0 %1298
        %1300 = vmax.xlane.f32.xlu0 %v1244
        %v1301 = vpop.xlane.xlu0 %1300
        %1302 = vmax.xlane.f32.xlu0 %v1245
        %v1303 = vpop.xlane.xlu0 %1302
        %1304 = vmax.xlane.f32.xlu0 %v1246
        %v1305 = vpop.xlane.xlu0 %1304
        %1306 = vmax.xlane.f32.xlu0 %v1247
        %v1307 = vpop.xlane.xlu0 %1306
        %1308 = vmax.xlane.f32.xlu0 %v1248
        %v1309 = vpop.xlane.xlu0 %1308
        %1310 = vmax.xlane.f32.xlu0 %v1249
        %v1311 = vpop.xlane.xlu0 %1310
        %1312 = vmax.xlane.f32.xlu0 %v1250
        %v1313 = vpop.xlane.xlu0 %1312
        %1314 = vmax.xlane.f32.xlu0 %v1251
        %v1315 = vpop.xlane.xlu0 %1314
        %1316 = vmax.xlane.f32.xlu0 %v1252
        %v1317 = vpop.xlane.xlu0 %1316
        %1318 = vmax.xlane.f32.xlu0 %v1253
        %v1319 = vpop.xlane.xlu0 %1318
        %1320 = vmax.xlane.f32.xlu0 %v1254
        %v1321 = vpop.xlane.xlu0 %1320
        %1322 = vmax.xlane.f32.xlu0 %v1255
        %v1323 = vpop.xlane.xlu0 %1322
        %1324 = vmax.xlane.f32.xlu0 %v1256
        %v1325 = vpop.xlane.xlu0 %1324
        %1326 = vmax.xlane.f32.xlu0 %v1257
        %v1327 = vpop.xlane.xlu0 %1326
        %1328 = vmax.xlane.f32.xlu0 %v1258
        %v1329 = vpop.xlane.xlu0 %1328
        %1330 = vmax.xlane.f32.xlu0 %v1259
        %v1331 = vpop.xlane.xlu0 %1330
        %v1332 = vsub.f32 %v1224, %v1261
        %v1333 = vsub.f32 %v1225, %v1263
        %v1334 = vsub.f32 %v1226, %v1265
        %v1335 = vsub.f32 %v1227, %v1267
        %v1336 = vsub.f32 %v1228, %v1269
        %v1337 = vsub.f32 %v1229, %v1271
        %v1338 = vsub.f32 %v1230, %v1273
        %v1339 = vsub.f32 %v1231, %v1275
        %v1340 = vsub.f32 %v1232, %v1277
        %v1341 = vsub.f32 %v1233, %v1279
        %v1342 = vsub.f32 %v1234, %v1281
        %v1343 = vsub.f32 %v1235, %v1283
        %v1344 = vsub.f32 %v1236, %v1285
        %v1345 = vsub.f32 %v1237, %v1287
        %v1346 = vsub.f32 %v1238, %v1289
        %v1347 = vsub.f32 %v1239, %v1291
        %v1348 = vsub.f32 %v1240, %v1293
        %v1349 = vsub.f32 %v1241, %v1295
        %v1350 = vsub.f32 %v1242, %v1297
        %v1351 = vsub.f32 %v1243, %v1299
        %v1352 = vsub.f32 %v1244, %v1301
        %v1353 = vsub.f32 %v1245, %v1303
        %v1354 = vsub.f32 %v1246, %v1305
        %v1355 = vsub.f32 %v1247, %v1307
        %v1356 = vsub.f32 %v1248, %v1309
        %v1357 = vsub.f32 %v1249, %v1311
        %v1358 = vsub.f32 %v1250, %v1313
        %v1359 = vsub.f32 %v1251, %v1315
        %v1360 = vsub.f32 %v1252, %v1317
        %v1361 = vsub.f32 %v1253, %v1319
        %v1362 = vsub.f32 %v1254, %v1321
        %v1363 = vsub.f32 %v1255, %v1323
        %v1364 = vsub.f32 %v1256, %v1325
        %v1365 = vsub.f32 %v1257, %v1327
        %v1366 = vsub.f32 %v1258, %v1329
        %v1367 = vsub.f32 %v1259, %v1331
        %v1368 = vmul.f32 %v1332, 1.442695
        %v1369 = vpow.pop %v1368
        %v1370 = vmul.f32 %v1333, 1.442695
        %v1371 = vpow.pop %v1370
        %v1372 = vmul.f32 %v1334, 1.442695
        %v1373 = vpow.pop %v1372
        %v1374 = vmul.f32 %v1335, 1.442695
        %v1375 = vpow.pop %v1374
        %v1376 = vmul.f32 %v1336, 1.442695
        %v1377 = vpow.pop %v1376
        %v1378 = vmul.f32 %v1337, 1.442695
        %v1379 = vpow.pop %v1378
        %v1380 = vmul.f32 %v1338, 1.442695
        %v1381 = vpow.pop %v1380
        %v1382 = vmul.f32 %v1339, 1.442695
        %v1383 = vpow.pop %v1382
        %v1384 = vmul.f32 %v1340, 1.442695
        %v1385 = vpow.pop %v1384
        %v1386 = vmul.f32 %v1341, 1.442695
        %v1387 = vpow.pop %v1386
        %v1388 = vmul.f32 %v1342, 1.442695
        %v1389 = vpow.pop %v1388
        %v1390 = vmul.f32 %v1343, 1.442695
        %v1391 = vpow.pop %v1390
        %v1392 = vmul.f32 %v1344, 1.442695
        %v1393 = vpow.pop %v1392
        %v1394 = vmul.f32 %v1345, 1.442695
        %v1395 = vpow.pop %v1394
        %v1396 = vmul.f32 %v1346, 1.442695
        %v1397 = vpow.pop %v1396
        %v1398 = vmul.f32 %v1347, 1.442695
        %v1399 = vpow.pop %v1398
        %v1400 = vmul.f32 %v1348, 1.442695
        %v1401 = vpow.pop %v1400
        %v1402 = vmul.f32 %v1349, 1.442695
        %v1403 = vpow.pop %v1402
        %v1404 = vmul.f32 %v1350, 1.442695
        %v1405 = vpow.pop %v1404
        %v1406 = vmul.f32 %v1351, 1.442695
        %v1407 = vpow.pop %v1406
        %v1408 = vmul.f32 %v1352, 1.442695
        %v1409 = vpow.pop %v1408
        %v1410 = vmul.f32 %v1353, 1.442695
        %v1411 = vpow.pop %v1410
        %v1412 = vmul.f32 %v1354, 1.442695
        %v1413 = vpow.pop %v1412
        %v1414 = vmul.f32 %v1355, 1.442695
        %v1415 = vpow.pop %v1414
        %v1416 = vmul.f32 %v1356, 1.442695
        %v1417 = vpow.pop %v1416
        %v1418 = vmul.f32 %v1357, 1.442695
        %v1419 = vpow.pop %v1418
        %v1420 = vmul.f32 %v1358, 1.442695
        %v1421 = vpow.pop %v1420
        %v1422 = vmul.f32 %v1359, 1.442695
        %v1423 = vpow.pop %v1422
        %v1424 = vmul.f32 %v1360, 1.442695
        %v1425 = vpow.pop %v1424
        %v1426 = vmul.f32 %v1361, 1.442695
        %v1427 = vpow.pop %v1426
        %v1428 = vmul.f32 %v1362, 1.442695
        %v1429 = vpow.pop %v1428
        %v1430 = vmul.f32 %v1363, 1.442695
        %v1431 = vpow.pop %v1430
        %v1432 = vmul.f32 %v1364, 1.442695
        %v1433 = vpow.pop %v1432
        %v1434 = vmul.f32 %v1365, 1.442695
        %v1435 = vpow.pop %v1434
        %v1436 = vmul.f32 %v1366, 1.442695
        %v1437 = vpow.pop %v1436
        %v1438 = vmul.f32 %v1367, 1.442695
        %v1439 = vpow.pop %v1438
        %1440 = vadd.xlane.f32.xlu0 %v1369
        %v1441 = vpop.xlane.xlu0 %1440
        %1442 = vadd.xlane.f32.xlu0 %v1371
        %v1443 = vpop.xlane.xlu0 %1442
        %1444 = vadd.xlane.f32.xlu0 %v1373
        %v1445 = vpop.xlane.xlu0 %1444
        %1446 = vadd.xlane.f32.xlu0 %v1375
        %v1447 = vpop.xlane.xlu0 %1446
        %1448 = vadd.xlane.f32.xlu0 %v1377
        %v1449 = vpop.xlane.xlu0 %1448
        %1450 = vadd.xlane.f32.xlu0 %v1379
        %v1451 = vpop.xlane.xlu0 %1450
        %1452 = vadd.xlane.f32.xlu0 %v1381
        %v1453 = vpop.xlane.xlu0 %1452
        %1454 = vadd.xlane.f32.xlu0 %v1383
        %v1455 = vpop.xlane.xlu0 %1454
        %1456 = vadd.xlane.f32.xlu0 %v1385
        %v1457 = vpop.xlane.xlu0 %1456
        %1458 = vadd.xlane.f32.xlu0 %v1387
        %v1459 = vpop.xlane.xlu0 %1458
        %1460 = vadd.xlane.f32.xlu0 %v1389
        %v1461 = vpop.xlane.xlu0 %1460
        %1462 = vadd.xlane.f32.xlu0 %v1391
        %v1463 = vpop.xlane.xlu0 %1462
        %1464 = vadd.xlane.f32.xlu0 %v1393
        %v1465 = vpop.xlane.xlu0 %1464
        %1466 = vadd.xlane.f32.xlu0 %v1395
        %v1467 = vpop.xlane.xlu0 %1466
        %1468 = vadd.xlane.f32.xlu0 %v1397
        %v1469 = vpop.xlane.xlu0 %1468
        %1470 = vadd.xlane.f32.xlu0 %v1399
        %v1471 = vpop.xlane.xlu0 %1470
        %1472 = vadd.xlane.f32.xlu0 %v1401
        %v1473 = vpop.xlane.xlu0 %1472
        %1474 = vadd.xlane.f32.xlu0 %v1403
        %v1475 = vpop.xlane.xlu0 %1474
        %1476 = vadd.xlane.f32.xlu0 %v1405
        %v1477 = vpop.xlane.xlu0 %1476
        %1478 = vadd.xlane.f32.xlu0 %v1407
        %v1479 = vpop.xlane.xlu0 %1478
        %1480 = vadd.xlane.f32.xlu0 %v1409
        %v1481 = vpop.xlane.xlu0 %1480
        %1482 = vadd.xlane.f32.xlu0 %v1411
        %v1483 = vpop.xlane.xlu0 %1482
        %1484 = vadd.xlane.f32.xlu0 %v1413
        %v1485 = vpop.xlane.xlu0 %1484
        %1486 = vadd.xlane.f32.xlu0 %v1415
        %v1487 = vpop.xlane.xlu0 %1486
        %1488 = vadd.xlane.f32.xlu0 %v1417
        %v1489 = vpop.xlane.xlu0 %1488
        %1490 = vadd.xlane.f32.xlu0 %v1419
        %v1491 = vpop.xlane.xlu0 %1490
        %1492 = vadd.xlane.f32.xlu0 %v1421
        %v1493 = vpop.xlane.xlu0 %1492
        %1494 = vadd.xlane.f32.xlu0 %v1423
        %v1495 = vpop.xlane.xlu0 %1494
        %1496 = vadd.xlane.f32.xlu0 %v1425
        %v1497 = vpop.xlane.xlu0 %1496
        %1498 = vadd.xlane.f32.xlu0 %v1427
        %v1499 = vpop.xlane.xlu0 %1498
        %1500 = vadd.xlane.f32.xlu0 %v1429
        %v1501 = vpop.xlane.xlu0 %1500
        %1502 = vadd.xlane.f32.xlu0 %v1431
        %v1503 = vpop.xlane.xlu0 %1502
        %1504 = vadd.xlane.f32.xlu0 %v1433
        %v1505 = vpop.xlane.xlu0 %1504
        %1506 = vadd.xlane.f32.xlu0 %v1435
        %v1507 = vpop.xlane.xlu0 %1506
        %1508 = vadd.xlane.f32.xlu0 %v1437
        %v1509 = vpop.xlane.xlu0 %1508
        %1510 = vadd.xlane.f32.xlu0 %v1439
        %v1511 = vpop.xlane.xlu0 %1510
        %v1512 = vrcp.pop %v1441
        %v1513 = vrcp.pop %v1443
        %v1514 = vrcp.pop %v1445
        %v1515 = vrcp.pop %v1447
        %v1516 = vrcp.pop %v1449
        %v1517 = vrcp.pop %v1451
        %v1518 = vrcp.pop %v1453
        %v1519 = vrcp.pop %v1455
        %v1520 = vrcp.pop %v1457
        %v1521 = vrcp.pop %v1459
        %v1522 = vrcp.pop %v1461
        %v1523 = vrcp.pop %v1463
        %v1524 = vrcp.pop %v1465
        %v1525 = vrcp.pop %v1467
        %v1526 = vrcp.pop %v1469
        %v1527 = vrcp.pop %v1471
        %v1528 = vrcp.pop %v1473
        %v1529 = vrcp.pop %v1475
        %v1530 = vrcp.pop %v1477
        %v1531 = vrcp.pop %v1479
        %v1532 = vrcp.pop %v1481
        %v1533 = vrcp.pop %v1483
        %v1534 = vrcp.pop %v1485
        %v1535 = vrcp.pop %v1487
        %v1536 = vrcp.pop %v1489
        %v1537 = vrcp.pop %v1491
        %v1538 = vrcp.pop %v1493
        %v1539 = vrcp.pop %v1495
        %v1540 = vrcp.pop %v1497
        %v1541 = vrcp.pop %v1499
        %v1542 = vrcp.pop %v1501
        %v1543 = vrcp.pop %v1503
        %v1544 = vrcp.pop %v1505
        %v1545 = vrcp.pop %v1507
        %v1546 = vrcp.pop %v1509
        %v1547 = vrcp.pop %v1511
        %v1548 = vmul.f32 %v1369, %v1512
        %v1549 = vmul.f32 %v1371, %v1513
        %v1550 = vmul.f32 %v1373, %v1514
        %v1551 = vmul.f32 %v1375, %v1515
        %v1552 = vmul.f32 %v1377, %v1516
        %v1553 = vmul.f32 %v1379, %v1517
        %v1554 = vmul.f32 %v1381, %v1518
        %v1555 = vmul.f32 %v1383, %v1519
        %v1556 = vmul.f32 %v1385, %v1520
        %v1557 = vmul.f32 %v1387, %v1521
        %v1558 = vmul.f32 %v1389, %v1522
        %v1559 = vmul.f32 %v1391, %v1523
        %v1560 = vmul.f32 %v1393, %v1524
        %v1561 = vmul.f32 %v1395, %v1525
        %v1562 = vmul.f32 %v1397, %v1526
        %v1563 = vmul.f32 %v1399, %v1527
        %v1564 = vmul.f32 %v1401, %v1528
        %v1565 = vmul.f32 %v1403, %v1529
        %v1566 = vmul.f32 %v1405, %v1530
        %v1567 = vmul.f32 %v1407, %v1531
        %v1568 = vmul.f32 %v1409, %v1532
        %v1569 = vmul.f32 %v1411, %v1533
        %v1570 = vmul.f32 %v1413, %v1534
        %v1571 = vmul.f32 %v1415, %v1535
        %v1572 = vmul.f32 %v1417, %v1536
        %v1573 = vmul.f32 %v1419, %v1537
        %v1574 = vmul.f32 %v1421, %v1538
        %v1575 = vmul.f32 %v1423, %v1539
        %v1576 = vmul.f32 %v1425, %v1540
        %v1577 = vmul.f32 %v1427, %v1541
        %v1578 = vmul.f32 %v1429, %v1542
        %v1579 = vmul.f32 %v1431, %v1543
        %v1580 = vmul.f32 %v1433, %v1544
        %v1581 = vmul.f32 %v1435, %v1545
        %v1582 = vmul.f32 %v1437, %v1546
        %v1583 = vmul.f32 %v1439, %v1547
        %1584 = vst [vmem:[%s258] sm:$0xff] %v1548
        %1585 = vst [vmem:[%s258 + $0x8] sm:$0xff] %v1549
        %1586 = vst [vmem:[%s258 + $0x10] sm:$0xff] %v1550
        %1587 = vst [vmem:[%s258 + $0x18] sm:$0xff] %v1551
        %1588 = vst [vmem:[%s258 + $0x20] sm:$0xff] %v1552
        %1589 = vst [vmem:[%s258 + $0x28] sm:$0xff] %v1553
        %1590 = vst [vmem:[%s258 + $0x30] sm:$0xff] %v1554
        %1591 = vst [vmem:[%s258 + $0x38] sm:$0xff] %v1555
        %1592 = vst [vmem:[%s258 + $0x40] sm:$0xff] %v1556
        %1593 = vst [vmem:[%s258 + $0x48] sm:$0xff] %v1557
        %1594 = vst [vmem:[%s258 + $0x50] sm:$0xff] %v1558
        %1595 = vst [vmem:[%s258 + $0x58] sm:$0xff] %v1559
        %1596 = vst [vmem:[%s258 + $0x60] sm:$0xff] %v1560
        %1597 = vst [vmem:[%s258 + $0x68] sm:$0xff] %v1561
        %1598 = vst [vmem:[%s258 + $0x70] sm:$0xff] %v1562
        %1599 = vst [vmem:[%s258 + $0x78] sm:$0xff] %v1563
        %1600 = vst [vmem:[%s258 + $0x80] sm:$0xff] %v1564
        %1601 = vst [vmem:[%s258 + $0x88] sm:$0xff] %v1565
        %1602 = vst [vmem:[%s258 + $0x90] sm:$0xff] %v1566
        %1603 = vst [vmem:[%s258 + $0x98] sm:$0xff] %v1567
        %1604 = vst [vmem:[%s258 + $0xa0] sm:$0xff] %v1568
        %1605 = vst [vmem:[%s258 + $0xa8] sm:$0xff] %v1569
        %1606 = vst [vmem:[%s258 + $0xb0] sm:$0xff] %v1570
        %1607 = vst [vmem:[%s258 + $0xb8] sm:$0xff] %v1571
        %1608 = vst [vmem:[%s258 + $0xc0] sm:$0xff] %v1572
        %1609 = vst [vmem:[%s258 + $0xc8] sm:$0xff] %v1573
        %1610 = vst [vmem:[%s258 + $0xd0] sm:$0xff] %v1574
        %1611 = vst [vmem:[%s258 + $0xd8] sm:$0xff] %v1575
        %1612 = vst [vmem:[%s258 + $0xe0] sm:$0xff] %v1576
        %1613 = vst [vmem:[%s258 + $0xe8] sm:$0xff] %v1577
        %1614 = vst [vmem:[%s258 + $0xf0] sm:$0xff] %v1578
        %1615 = vst [vmem:[%s258 + $0xf8] sm:$0xff] %v1579
        %1616 = vst [vmem:[%s258 + $0x100] sm:$0xff] %v1580
        %1617 = vst [vmem:[%s258 + $0x108] sm:$0xff] %v1581
        %1618 = vst [vmem:[%s258 + $0x110] sm:$0xff] %v1582
        %1619 = vst [vmem:[%s258 + $0x118] sm:$0xff] %v1583
        %v1620 = vpack.c.bf16 %v1549, %v1548
        %v1621 = vpack.c.bf16 %v1551, %v1550
        %v1622 = vpack.c.bf16 %v1553, %v1552
        %v1623 = vpack.c.bf16 %v1555, %v1554
        %v1624 = vpack.c.bf16 %v1556, %v1556
        %v1625 = vpack.c.bf16 %v1558, %v1557
        %v1626 = vpack.c.bf16 %v1560, %v1559
        %v1627 = vpack.c.bf16 %v1562, %v1561
        %v1628 = vpack.c.bf16 %v1564, %v1563
        %v1629 = vpack.c.bf16 %v1565, %v1565
        %v1630 = vpack.c.bf16 %v1567, %v1566
        %v1631 = vpack.c.bf16 %v1569, %v1568
        %v1632 = vpack.c.bf16 %v1571, %v1570
        %v1633 = vpack.c.bf16 %v1573, %v1572
        %v1634 = vpack.c.bf16 %v1574, %v1574
        %v1635 = vpack.c.bf16 %v1576, %v1575
        %v1636 = vpack.c.bf16 %v1578, %v1577
        %v1637 = vpack.c.bf16 %v1580, %v1579
        %v1638 = vpack.c.bf16 %v1582, %v1581
        %v1639 = vpack.c.bf16 %v1583, %v1583
        %v1656 = vunpack.c.l.b16 %v387
        %v1657 = vunpack.c.l.b16 %v388
        %v1658 = vunpack.c.l.b16 %v389
        %v1659 = vunpack.c.l.b16 %v390
        %v1660 = vunpack.c.l.b16 %v391
        %v1661 = vunpack.c.l.b16 %v392
        %v1662 = vunpack.c.l.b16 %v393
        %v1663 = vunpack.c.l.b16 %v394
        %v1664 = vunpack.c.l.b16 %v395
        %v1665 = vunpack.c.l.b16 %v396
        %v1666 = vunpack.c.l.b16 %v397
        %v1667 = vunpack.c.l.b16 %v398
        %v1668 = vunpack.c.l.b16 %v399
        %v1669 = vunpack.c.l.b16 %v400
        %v1670 = vunpack.c.l.b16 %v401
        %v1671 = vunpack.c.l.b16 %v402
        %v1672 = vpack.c.b16 %v1657, %v1656
        %v1673 = vpack.c.b16 %v1659, %v1658
        %v1674 = vpack.c.b16 %v1661, %v1660
        %v1675 = vpack.c.b16 %v1663, %v1662
        %v1676 = vpack.c.b16 %v1665, %v1664
        %v1677 = vpack.c.b16 %v1667, %v1666
        %v1678 = vpack.c.b16 %v1669, %v1668
        %v1679 = vpack.c.b16 %v1671, %v1670
        %1688 = vmatprep.subr.bf16.mxu0 0
        %1689 = vmatpush1.bf16.msra.mxu0 %v1679
        %1690 = vmatprep.subr.bf16.mxu0 0
        %1691 = vmatpush1.bf16.msra.mxu0 %v1678
        %1692 = vmatprep.subr.bf16.mxu0 0
        %1693 = vmatpush1.bf16.msra.mxu0 %v1677
        %1694 = vmatprep.subr.bf16.mxu0 0
        %1695 = vmatpush1.bf16.msra.mxu0 %v1676
        %1696 = vmatprep.subr.bf16.mxu0 0
        %1697 = vmatpush1.bf16.msra.mxu0 %v1675
        %1698 = vmatprep.subr.bf16.mxu0 0
        %1699 = vmatpush1.bf16.msra.mxu0 %v1674
        %1700 = vmatprep.subr.bf16.mxu0 0
        %1701 = vmatpush1.bf16.msra.mxu0 %v1673
        %1702 = vmatprep.subr.bf16.mxu0 0
        %1703 = vmatpush1.bf16.msra.mxu0 %v1672
        %1704 = vmatprep.subr.bf16.mxu0 0
        %1705 = vmatpush2.bf16.msra.mxu0 0
        %1706 = vmatprep.subr.bf16.mxu0 0
        %1707 = vmatpush2.bf16.msra.mxu0 0
        %1708 = vmatprep.subr.bf16.mxu0 0
        %1709 = vmatpush2.bf16.msra.mxu0 0
        %1710 = vmatprep.subr.bf16.mxu0 0
        %1711 = vmatpush2.bf16.msra.mxu0 0
        %1712 = vmatprep.subr.bf16.mxu0 0
        %1713 = vmatpush2.bf16.msra.mxu0 0
        %1714 = vmatprep.subr.bf16.mxu0 0
        %1715 = vmatpush2.bf16.msra.mxu0 0
        %1716 = vmatprep.subr.bf16.mxu0 0
        %1717 = vmatpush2.bf16.msra.mxu0 0
        %1718 = vmatprep.subr.bf16.mxu0 0
        %1719 = vmatpush2.bf16.msra.mxu0 0
        %1720 = vmatprep.mubr.bf16.mxu0 0
        %1721 = vmatmul.mubr.bf16.gmra.mxu0 %v1620
        %v1722 = vpop.f32.mrf.mxu0
        %v1723 = vadd.f32 0.0, %v1722
        %v1724 = vpop.f32.mrf.mxu0
        %v1725 = vpop.f32.mrf.mxu0
        %v1726 = vadd.f32 0.0, %v1725
        %v1727 = vpop.f32.mrf.mxu0
        %1728 = vmatprep.mubr.bf16.mxu0 0
        %1729 = vmatmul.mubr.bf16.gmra.mxu0 %v1621
        %v1730 = vpop.f32.mrf.mxu0
        %v1731 = vadd.f32 0.0, %v1730
        %v1732 = vpop.f32.mrf.mxu0
        %v1733 = vpop.f32.mrf.mxu0
        %v1734 = vadd.f32 0.0, %v1733
        %v1735 = vpop.f32.mrf.mxu0
        %1736 = vmatprep.mubr.bf16.mxu0 0
        %1737 = vmatmul.mubr.bf16.gmra.mxu0 %v1622
        %v1738 = vpop.f32.mrf.mxu0
        %v1739 = vadd.f32 0.0, %v1738
        %v1740 = vpop.f32.mrf.mxu0
        %v1741 = vpop.f32.mrf.mxu0
        %v1742 = vadd.f32 0.0, %v1741
        %v1743 = vpop.f32.mrf.mxu0
        %1744 = vmatprep.mubr.bf16.mxu0 0
        %1745 = vmatmul.mubr.bf16.gmra.mxu0 %v1623
        %v1746 = vpop.f32.mrf.mxu0
        %v1747 = vadd.f32 0.0, %v1746
        %v1748 = vpop.f32.mrf.mxu0
        %v1749 = vpop.f32.mrf.mxu0
        %v1750 = vadd.f32 0.0, %v1749
        %v1751 = vpop.f32.mrf.mxu0
        %1752 = vmatprep.mubr.bf16.mxu0 0
        %1753 = vmatmul.mubr.bf16.gmra.mxu0 %v1624
        %v1754 = vpop.f32.mrf.mxu0
        %v1755 = vadd.f32 0.0, %v1754
        %v1756 = vpop.f32.mrf.mxu0
        %v1757 = vpop.f32.mrf.mxu0
        %v1758 = vpop.f32.mrf.mxu0
        %1759 = vdwg.mxu0
        %v1776 = vunpack.c.l.b16 %v403
        %v1777 = vunpack.c.l.b16 %v404
        %v1778 = vunpack.c.l.b16 %v405
        %v1779 = vunpack.c.l.b16 %v406
        %v1780 = vunpack.c.l.b16 %v407
        %v1781 = vunpack.c.l.b16 %v408
        %v1782 = vunpack.c.l.b16 %v409
        %v1783 = vunpack.c.l.b16 %v410
        %v1784 = vunpack.c.l.b16 %v411
        %v1785 = vunpack.c.l.b16 %v412
        %v1786 = vunpack.c.l.b16 %v413
        %v1787 = vunpack.c.l.b16 %v414
        %v1788 = vunpack.c.l.b16 %v415
        %v1789 = vunpack.c.l.b16 %v416
        %v1790 = vunpack.c.l.b16 %v417
        %v1791 = vunpack.c.l.b16 %v418
        %v1792 = vpack.c.b16 %v1777, %v1776
        %v1793 = vpack.c.b16 %v1779, %v1778
        %v1794 = vpack.c.b16 %v1781, %v1780
        %v1795 = vpack.c.b16 %v1783, %v1782
        %v1796 = vpack.c.b16 %v1785, %v1784
        %v1797 = vpack.c.b16 %v1787, %v1786
        %v1798 = vpack.c.b16 %v1789, %v1788
        %v1799 = vpack.c.b16 %v1791, %v1790
        %1808 = vmatprep.subr.bf16.mxu0 0
        %1809 = vmatpush1.bf16.msra.mxu0 %v1799
        %1810 = vmatprep.subr.bf16.mxu0 0
        %1811 = vmatpush1.bf16.msra.mxu0 %v1798
        %1812 = vmatprep.subr.bf16.mxu0 0
        %1813 = vmatpush1.bf16.msra.mxu0 %v1797
        %1814 = vmatprep.subr.bf16.mxu0 0
        %1815 = vmatpush1.bf16.msra.mxu0 %v1796
        %1816 = vmatprep.subr.bf16.mxu0 0
        %1817 = vmatpush1.bf16.msra.mxu0 %v1795
        %1818 = vmatprep.subr.bf16.mxu0 0
        %1819 = vmatpush1.bf16.msra.mxu0 %v1794
        %1820 = vmatprep.subr.bf16.mxu0 0
        %1821 = vmatpush1.bf16.msra.mxu0 %v1793
        %1822 = vmatprep.subr.bf16.mxu0 0
        %1823 = vmatpush1.bf16.msra.mxu0 %v1792
        %1824 = vmatprep.subr.bf16.mxu0 0
        %1825 = vmatpush2.bf16.msra.mxu0 0
        %1826 = vmatprep.subr.bf16.mxu0 0
        %1827 = vmatpush2.bf16.msra.mxu0 0
        %1828 = vmatprep.subr.bf16.mxu0 0
        %1829 = vmatpush2.bf16.msra.mxu0 0
        %1830 = vmatprep.subr.bf16.mxu0 0
        %1831 = vmatpush2.bf16.msra.mxu0 0
        %1832 = vmatprep.subr.bf16.mxu0 0
        %1833 = vmatpush2.bf16.msra.mxu0 0
        %1834 = vmatprep.subr.bf16.mxu0 0
        %1835 = vmatpush2.bf16.msra.mxu0 0
        %1836 = vmatprep.subr.bf16.mxu0 0
        %1837 = vmatpush2.bf16.msra.mxu0 0
        %1838 = vmatprep.subr.bf16.mxu0 0
        %1839 = vmatpush2.bf16.msra.mxu0 0
        %1840 = vmatprep.mubr.bf16.mxu0 0
        %1841 = vmatmul.mubr.bf16.gmra.mxu0 %v1625
        %v1842 = vpop.f32.mrf.mxu0
        %v1843 = vadd.f32 0.0, %v1842
        %v1844 = vpop.f32.mrf.mxu0
        %v1845 = vpop.f32.mrf.mxu0
        %v1846 = vadd.f32 0.0, %v1845
        %v1847 = vpop.f32.mrf.mxu0
        %1848 = vmatprep.mubr.bf16.mxu0 0
        %1849 = vmatmul.mubr.bf16.gmra.mxu0 %v1626
        %v1850 = vpop.f32.mrf.mxu0
        %v1851 = vadd.f32 0.0, %v1850
        %v1852 = vpop.f32.mrf.mxu0
        %v1853 = vpop.f32.mrf.mxu0
        %v1854 = vadd.f32 0.0, %v1853
        %v1855 = vpop.f32.mrf.mxu0
        %1856 = vmatprep.mubr.bf16.mxu0 0
        %1857 = vmatmul.mubr.bf16.gmra.mxu0 %v1627
        %v1858 = vpop.f32.mrf.mxu0
        %v1859 = vadd.f32 0.0, %v1858
        %v1860 = vpop.f32.mrf.mxu0
        %v1861 = vpop.f32.mrf.mxu0
        %v1862 = vadd.f32 0.0, %v1861
        %v1863 = vpop.f32.mrf.mxu0
        %1864 = vmatprep.mubr.bf16.mxu0 0
        %1865 = vmatmul.mubr.bf16.gmra.mxu0 %v1628
        %v1866 = vpop.f32.mrf.mxu0
        %v1867 = vadd.f32 0.0, %v1866
        %v1868 = vpop.f32.mrf.mxu0
        %v1869 = vpop.f32.mrf.mxu0
        %v1870 = vadd.f32 0.0, %v1869
        %v1871 = vpop.f32.mrf.mxu0
        %1872 = vmatprep.mubr.bf16.mxu0 0
        %1873 = vmatmul.mubr.bf16.gmra.mxu0 %v1629
        %v1874 = vpop.f32.mrf.mxu0
        %v1875 = vadd.f32 0.0, %v1874
        %v1876 = vpop.f32.mrf.mxu0
        %v1877 = vpop.f32.mrf.mxu0
        %v1878 = vpop.f32.mrf.mxu0
        %1879 = vdwg.mxu0
        %v1896 = vunpack.c.l.b16 %v419
        %v1897 = vunpack.c.l.b16 %v420
        %v1898 = vunpack.c.l.b16 %v421
        %v1899 = vunpack.c.l.b16 %v422
        %v1900 = vunpack.c.l.b16 %v423
        %v1901 = vunpack.c.l.b16 %v424
        %v1902 = vunpack.c.l.b16 %v425
        %v1903 = vunpack.c.l.b16 %v426
        %v1904 = vunpack.c.l.b16 %v427
        %v1905 = vunpack.c.l.b16 %v428
        %v1906 = vunpack.c.l.b16 %v429
        %v1907 = vunpack.c.l.b16 %v430
        %v1908 = vunpack.c.l.b16 %v431
        %v1909 = vunpack.c.l.b16 %v432
        %v1910 = vunpack.c.l.b16 %v433
        %v1911 = vunpack.c.l.b16 %v434
        %v1912 = vpack.c.b16 %v1897, %v1896
        %v1913 = vpack.c.b16 %v1899, %v1898
        %v1914 = vpack.c.b16 %v1901, %v1900
        %v1915 = vpack.c.b16 %v1903, %v1902
        %v1916 = vpack.c.b16 %v1905, %v1904
        %v1917 = vpack.c.b16 %v1907, %v1906
        %v1918 = vpack.c.b16 %v1909, %v1908
        %v1919 = vpack.c.b16 %v1911, %v1910
        %1928 = vmatprep.subr.bf16.mxu0 0
        %1929 = vmatpush1.bf16.msra.mxu0 %v1919
        %1930 = vmatprep.subr.bf16.mxu0 0
        %1931 = vmatpush1.bf16.msra.mxu0 %v1918
        %1932 = vmatprep.subr.bf16.mxu0 0
        %1933 = vmatpush1.bf16.msra.mxu0 %v1917
        %1934 = vmatprep.subr.bf16.mxu0 0
        %1935 = vmatpush1.bf16.msra.mxu0 %v1916
        %1936 = vmatprep.subr.bf16.mxu0 0
        %1937 = vmatpush1.bf16.msra.mxu0 %v1915
        %1938 = vmatprep.subr.bf16.mxu0 0
        %1939 = vmatpush1.bf16.msra.mxu0 %v1914
        %1940 = vmatprep.subr.bf16.mxu0 0
        %1941 = vmatpush1.bf16.msra.mxu0 %v1913
        %1942 = vmatprep.subr.bf16.mxu0 0
        %1943 = vmatpush1.bf16.msra.mxu0 %v1912
        %1944 = vmatprep.subr.bf16.mxu0 0
        %1945 = vmatpush2.bf16.msra.mxu0 0
        %1946 = vmatprep.subr.bf16.mxu0 0
        %1947 = vmatpush2.bf16.msra.mxu0 0
        %1948 = vmatprep.subr.bf16.mxu0 0
        %1949 = vmatpush2.bf16.msra.mxu0 0
        %1950 = vmatprep.subr.bf16.mxu0 0
        %1951 = vmatpush2.bf16.msra.mxu0 0
        %1952 = vmatprep.subr.bf16.mxu0 0
        %1953 = vmatpush2.bf16.msra.mxu0 0
        %1954 = vmatprep.subr.bf16.mxu0 0
        %1955 = vmatpush2.bf16.msra.mxu0 0
        %1956 = vmatprep.subr.bf16.mxu0 0
        %1957 = vmatpush2.bf16.msra.mxu0 0
        %1958 = vmatprep.subr.bf16.mxu0 0
        %1959 = vmatpush2.bf16.msra.mxu0 0
        %1960 = vmatprep.mubr.bf16.mxu0 0
        %1961 = vmatmul.mubr.bf16.gmra.mxu0 %v1630
        %v1962 = vpop.f32.mrf.mxu0
        %v1963 = vadd.f32 0.0, %v1962
        %v1964 = vpop.f32.mrf.mxu0
        %v1965 = vpop.f32.mrf.mxu0
        %v1966 = vadd.f32 0.0, %v1965
        %v1967 = vpop.f32.mrf.mxu0
        %1968 = vmatprep.mubr.bf16.mxu0 0
        %1969 = vmatmul.mubr.bf16.gmra.mxu0 %v1631
        %v1970 = vpop.f32.mrf.mxu0
        %v1971 = vadd.f32 0.0, %v1970
        %v1972 = vpop.f32.mrf.mxu0
        %v1973 = vpop.f32.mrf.mxu0
        %v1974 = vadd.f32 0.0, %v1973
        %v1975 = vpop.f32.mrf.mxu0
        %1976 = vmatprep.mubr.bf16.mxu0 0
        %1977 = vmatmul.mubr.bf16.gmra.mxu0 %v1632
        %v1978 = vpop.f32.mrf.mxu0
        %v1979 = vadd.f32 0.0, %v1978
        %v1980 = vpop.f32.mrf.mxu0
        %v1981 = vpop.f32.mrf.mxu0
        %v1982 = vadd.f32 0.0, %v1981
        %v1983 = vpop.f32.mrf.mxu0
        %1984 = vmatprep.mubr.bf16.mxu0 0
        %1985 = vmatmul.mubr.bf16.gmra.mxu0 %v1633
        %v1986 = vpop.f32.mrf.mxu0
        %v1987 = vadd.f32 0.0, %v1986
        %v1988 = vpop.f32.mrf.mxu0
        %v1989 = vpop.f32.mrf.mxu0
        %v1990 = vadd.f32 0.0, %v1989
        %v1991 = vpop.f32.mrf.mxu0
        %1992 = vmatprep.mubr.bf16.mxu0 0
        %1993 = vmatmul.mubr.bf16.gmra.mxu0 %v1634
        %v1994 = vpop.f32.mrf.mxu0
        %v1995 = vadd.f32 0.0, %v1994
        %v1996 = vpop.f32.mrf.mxu0
        %v1997 = vpop.f32.mrf.mxu0
        %v1998 = vpop.f32.mrf.mxu0
        %1999 = vdwg.mxu0
        %v2016 = vunpack.c.l.b16 %v435
        %v2017 = vunpack.c.l.b16 %v436
        %v2018 = vunpack.c.l.b16 %v437
        %v2019 = vunpack.c.l.b16 %v438
        %v2020 = vunpack.c.l.b16 %v439
        %v2021 = vunpack.c.l.b16 %v440
        %v2022 = vunpack.c.l.b16 %v441
        %v2023 = vunpack.c.l.b16 %v442
        %v2024 = vunpack.c.l.b16 %v443
        %v2025 = vunpack.c.l.b16 %v444
        %v2026 = vunpack.c.l.b16 %v445
        %v2027 = vunpack.c.l.b16 %v446
        %v2028 = vunpack.c.l.b16 %v447
        %v2029 = vunpack.c.l.b16 %v448
        %v2030 = vunpack.c.l.b16 %v449
        %v2031 = vunpack.c.l.b16 %v450
        %v2032 = vpack.c.b16 %v2017, %v2016
        %v2033 = vpack.c.b16 %v2019, %v2018
        %v2034 = vpack.c.b16 %v2021, %v2020
        %v2035 = vpack.c.b16 %v2023, %v2022
        %v2036 = vpack.c.b16 %v2025, %v2024
        %v2037 = vpack.c.b16 %v2027, %v2026
        %v2038 = vpack.c.b16 %v2029, %v2028
        %v2039 = vpack.c.b16 %v2031, %v2030
        %2048 = vmatprep.subr.bf16.mxu0 0
        %2049 = vmatpush1.bf16.msra.mxu0 %v2039
        %2050 = vmatprep.subr.bf16.mxu0 0
        %2051 = vmatpush1.bf16.msra.mxu0 %v2038
        %2052 = vmatprep.subr.bf16.mxu0 0
        %2053 = vmatpush1.bf16.msra.mxu0 %v2037
        %2054 = vmatprep.subr.bf16.mxu0 0
        %2055 = vmatpush1.bf16.msra.mxu0 %v2036
        %2056 = vmatprep.subr.bf16.mxu0 0
        %2057 = vmatpush1.bf16.msra.mxu0 %v2035
        %2058 = vmatprep.subr.bf16.mxu0 0
        %2059 = vmatpush1.bf16.msra.mxu0 %v2034
        %2060 = vmatprep.subr.bf16.mxu0 0
        %2061 = vmatpush1.bf16.msra.mxu0 %v2033
        %2062 = vmatprep.subr.bf16.mxu0 0
        %2063 = vmatpush1.bf16.msra.mxu0 %v2032
        %2064 = vmatprep.subr.bf16.mxu0 0
        %2065 = vmatpush2.bf16.msra.mxu0 0
        %2066 = vmatprep.subr.bf16.mxu0 0
        %2067 = vmatpush2.bf16.msra.mxu0 0
        %2068 = vmatprep.subr.bf16.mxu0 0
        %2069 = vmatpush2.bf16.msra.mxu0 0
        %2070 = vmatprep.subr.bf16.mxu0 0
        %2071 = vmatpush2.bf16.msra.mxu0 0
        %2072 = vmatprep.subr.bf16.mxu0 0
        %2073 = vmatpush2.bf16.msra.mxu0 0
        %2074 = vmatprep.subr.bf16.mxu0 0
        %2075 = vmatpush2.bf16.msra.mxu0 0
        %2076 = vmatprep.subr.bf16.mxu0 0
        %2077 = vmatpush2.bf16.msra.mxu0 0
        %2078 = vmatprep.subr.bf16.mxu0 0
        %2079 = vmatpush2.bf16.msra.mxu0 0
        %2080 = vmatprep.mubr.bf16.mxu0 0
        %2081 = vmatmul.mubr.bf16.gmra.mxu0 %v1635
        %v2082 = vpop.f32.mrf.mxu0
        %v2083 = vadd.f32 0.0, %v2082
        %v2084 = vpop.f32.mrf.mxu0
        %v2085 = vpop.f32.mrf.mxu0
        %v2086 = vadd.f32 0.0, %v2085
        %v2087 = vpop.f32.mrf.mxu0
        %2088 = vmatprep.mubr.bf16.mxu0 0
        %2089 = vmatmul.mubr.bf16.gmra.mxu0 %v1636
        %v2090 = vpop.f32.mrf.mxu0
        %v2091 = vadd.f32 0.0, %v2090
        %v2092 = vpop.f32.mrf.mxu0
        %v2093 = vpop.f32.mrf.mxu0
        %v2094 = vadd.f32 0.0, %v2093
        %v2095 = vpop.f32.mrf.mxu0
        %2096 = vmatprep.mubr.bf16.mxu0 0
        %2097 = vmatmul.mubr.bf16.gmra.mxu0 %v1637
        %v2098 = vpop.f32.mrf.mxu0
        %v2099 = vadd.f32 0.0, %v2098
        %v2100 = vpop.f32.mrf.mxu0
        %v2101 = vpop.f32.mrf.mxu0
        %v2102 = vadd.f32 0.0, %v2101
        %v2103 = vpop.f32.mrf.mxu0
        %2104 = vmatprep.mubr.bf16.mxu0 0
        %2105 = vmatmul.mubr.bf16.gmra.mxu0 %v1638
        %v2106 = vpop.f32.mrf.mxu0
        %v2107 = vadd.f32 0.0, %v2106
        %v2108 = vpop.f32.mrf.mxu0
        %v2109 = vpop.f32.mrf.mxu0
        %v2110 = vadd.f32 0.0, %v2109
        %v2111 = vpop.f32.mrf.mxu0
        %2112 = vmatprep.mubr.bf16.mxu0 0
        %2113 = vmatmul.mubr.bf16.gmra.mxu0 %v1639
        %v2114 = vpop.f32.mrf.mxu0
        %v2115 = vadd.f32 0.0, %v2114
        %v2116 = vpop.f32.mrf.mxu0
        %v2117 = vpop.f32.mrf.mxu0
        %v2118 = vpop.f32.mrf.mxu0
        %2119 = vdwg.mxu0
        %v2120 = vpack.c.bf16 %v1726, %v1723
        %v2121 = vpack.c.bf16 %v1734, %v1731
        %v2122 = vpack.c.bf16 %v1742, %v1739
        %v2123 = vpack.c.bf16 %v1750, %v1747
        %v2124 = vpack.c.bf16 %v1755, %v1755
        %v2125 = vpack.c.bf16 %v1846, %v1843
        %v2126 = vpack.c.bf16 %v1854, %v1851
        %v2127 = vpack.c.bf16 %v1862, %v1859
        %v2128 = vpack.c.bf16 %v1870, %v1867
        %v2129 = vpack.c.bf16 %v1875, %v1875
        %v2130 = vpack.c.bf16 %v1966, %v1963
        %v2131 = vpack.c.bf16 %v1974, %v1971
        %v2132 = vpack.c.bf16 %v1982, %v1979
        %v2133 = vpack.c.bf16 %v1990, %v1987
        %v2134 = vpack.c.bf16 %v1995, %v1995
        %v2135 = vpack.c.bf16 %v2086, %v2083
        %v2136 = vpack.c.bf16 %v2094, %v2091
        %v2137 = vpack.c.bf16 %v2102, %v2099
        %v2138 = vpack.c.bf16 %v2110, %v2107
        %v2139 = vpack.c.bf16 %v2115, %v2115
        %v2160 = vunpack.c.l.b16 %v2120
        %v2161 = vunpack.c.h.b16 %v2120
        %v2162 = vunpack.c.l.b16 %v2121
        %v2163 = vunpack.c.h.b16 %v2121
        %v2164 = vunpack.c.l.b16 %v2122
        %v2165 = vunpack.c.h.b16 %v2122
        %v2166 = vunpack.c.l.b16 %v2123
        %v2167 = vunpack.c.h.b16 %v2123
        %v2168 = vunpack.c.l.b16 %v2124
        %v2169 = vunpack.c.l.b16 %v2125
        %v2170 = vunpack.c.h.b16 %v2125
        %v2171 = vunpack.c.l.b16 %v2126
        %v2172 = vunpack.c.h.b16 %v2126
        %v2173 = vunpack.c.l.b16 %v2127
        %v2174 = vunpack.c.h.b16 %v2127
        %v2175 = vunpack.c.l.b16 %v2128
        %v2176 = vunpack.c.h.b16 %v2128
        %v2177 = vunpack.c.l.b16 %v2129
        %v2178 = vunpack.c.l.b16 %v2130
        %v2179 = vunpack.c.h.b16 %v2130
        %v2180 = vunpack.c.l.b16 %v2131
        %v2181 = vunpack.c.h.b16 %v2131
        %v2182 = vunpack.c.l.b16 %v2132
        %v2183 = vunpack.c.h.b16 %v2132
        %v2184 = vunpack.c.l.b16 %v2133
        %v2185 = vunpack.c.h.b16 %v2133
        %v2186 = vunpack.c.l.b16 %v2134
        %v2187 = vunpack.c.l.b16 %v2135
        %v2188 = vunpack.c.h.b16 %v2135
        %v2189 = vunpack.c.l.b16 %v2136
        %v2190 = vunpack.c.h.b16 %v2136
        %v2191 = vunpack.c.l.b16 %v2137
        %v2192 = vunpack.c.h.b16 %v2137
        %v2193 = vunpack.c.l.b16 %v2138
        %v2194 = vunpack.c.h.b16 %v2138
        %v2195 = vunpack.c.l.b16 %v2139
        %v2196 = vpack.c.b16 %v2160, %v2160
        %v2197 = vpack.c.b16 %v2161, %v2161
        %v2198 = vpack.c.b16 %v2162, %v2162
        %v2199 = vpack.c.b16 %v2163, %v2163
        %v2200 = vpack.c.b16 %v2164, %v2164
        %v2201 = vpack.c.b16 %v2165, %v2165
        %v2202 = vpack.c.b16 %v2166, %v2166
        %v2203 = vpack.c.b16 %v2167, %v2167
        %v2204 = vpack.c.b16 %v2168, %v2168
        %v2205 = vpack.c.b16 %v2169, %v2169
        %v2206 = vpack.c.b16 %v2170, %v2170
        %v2207 = vpack.c.b16 %v2171, %v2171
        %v2208 = vpack.c.b16 %v2172, %v2172
        %v2209 = vpack.c.b16 %v2173, %v2173
        %v2210 = vpack.c.b16 %v2174, %v2174
        %v2211 = vpack.c.b16 %v2175, %v2175
        %v2212 = vpack.c.b16 %v2176, %v2176
        %v2213 = vpack.c.b16 %v2177, %v2177
        %v2214 = vpack.c.b16 %v2178, %v2178
        %v2215 = vpack.c.b16 %v2179, %v2179
        %v2216 = vpack.c.b16 %v2180, %v2180
        %v2217 = vpack.c.b16 %v2181, %v2181
        %v2218 = vpack.c.b16 %v2182, %v2182
        %v2219 = vpack.c.b16 %v2183, %v2183
        %v2220 = vpack.c.b16 %v2184, %v2184
        %v2221 = vpack.c.b16 %v2185, %v2185
        %v2222 = vpack.c.b16 %v2186, %v2186
        %v2223 = vpack.c.b16 %v2187, %v2187
        %v2224 = vpack.c.b16 %v2188, %v2188
        %v2225 = vpack.c.b16 %v2189, %v2189
        %v2226 = vpack.c.b16 %v2190, %v2190
        %v2227 = vpack.c.b16 %v2191, %v2191
        %v2228 = vpack.c.b16 %v2192, %v2192
        %v2229 = vpack.c.b16 %v2193, %v2193
        %v2230 = vpack.c.b16 %v2194, %v2194
        %v2231 = vpack.c.b16 %v2195, %v2195
        %vm2268 = vcmask 60416
        %2269 = vst.msk [vmem:[%s285] sm:$0xf] %vm2268, %v2196
        %2270 = vst.msk [vmem:[%s285 + $0x4] sm:$0xf] %vm2268, %v2197
        %2271 = vst.msk [vmem:[%s285 + $0x8] sm:$0xf] %vm2268, %v2198
        %2272 = vst.msk [vmem:[%s285 + $0xc] sm:$0xf] %vm2268, %v2199
        %2273 = vst.msk [vmem:[%s285 + $0x10] sm:$0xf] %vm2268, %v2200
        %2274 = vst.msk [vmem:[%s285 + $0x14] sm:$0xf] %vm2268, %v2201
        %2275 = vst.msk [vmem:[%s285 + $0x18] sm:$0xf] %vm2268, %v2202
        %2276 = vst.msk [vmem:[%s285 + $0x1c] sm:$0xf] %vm2268, %v2203
        %2277 = vst.msk [vmem:[%s285 + $0x20] sm:$0xf] %vm2268, %v2204
        %2278 = vst.msk [vmem:[%s285 + $0x24] sm:$0xf] %vm2268, %v2205
        %2279 = vst.msk [vmem:[%s285 + $0x28] sm:$0xf] %vm2268, %v2206
        %2280 = vst.msk [vmem:[%s285 + $0x2c] sm:$0xf] %vm2268, %v2207
        %2281 = vst.msk [vmem:[%s285 + $0x30] sm:$0xf] %vm2268, %v2208
        %2282 = vst.msk [vmem:[%s285 + $0x34] sm:$0xf] %vm2268, %v2209
        %2283 = vst.msk [vmem:[%s285 + $0x38] sm:$0xf] %vm2268, %v2210
        %2284 = vst.msk [vmem:[%s285 + $0x3c] sm:$0xf] %vm2268, %v2211
        %2285 = vst.msk [vmem:[%s285 + $0x40] sm:$0xf] %vm2268, %v2212
        %2286 = vst.msk [vmem:[%s285 + $0x44] sm:$0xf] %vm2268, %v2213
        %2287 = vst.msk [vmem:[%s285 + $0x48] sm:$0xf] %vm2268, %v2214
        %2288 = vst.msk [vmem:[%s285 + $0x4c] sm:$0xf] %vm2268, %v2215
        %2289 = vst.msk [vmem:[%s285 + $0x50] sm:$0xf] %vm2268, %v2216
        %2290 = vst.msk [vmem:[%s285 + $0x54] sm:$0xf] %vm2268, %v2217
        %2291 = vst.msk [vmem:[%s285 + $0x58] sm:$0xf] %vm2268, %v2218
        %2292 = vst.msk [vmem:[%s285 + $0x5c] sm:$0xf] %vm2268, %v2219
        %2293 = vst.msk [vmem:[%s285 + $0x60] sm:$0xf] %vm2268, %v2220
        %2294 = vst.msk [vmem:[%s285 + $0x64] sm:$0xf] %vm2268, %v2221
        %2295 = vst.msk [vmem:[%s285 + $0x68] sm:$0xf] %vm2268, %v2222
        %2296 = vst.msk [vmem:[%s285 + $0x6c] sm:$0xf] %vm2268, %v2223
        %2297 = vst.msk [vmem:[%s285 + $0x70] sm:$0xf] %vm2268, %v2224
        %2298 = vst.msk [vmem:[%s285 + $0x74] sm:$0xf] %vm2268, %v2225
        %2299 = vst.msk [vmem:[%s285 + $0x78] sm:$0xf] %vm2268, %v2226
        %2300 = vst.msk [vmem:[%s285 + $0x7c] sm:$0xf] %vm2268, %v2227
        %2301 = vst.msk [vmem:[%s285 + $0x80] sm:$0xf] %vm2268, %v2228
        %2302 = vst.msk [vmem:[%s285 + $0x84] sm:$0xf] %vm2268, %v2229
        %2303 = vst.msk [vmem:[%s285 + $0x88] sm:$0xf] %vm2268, %v2230
        %2304 = vst.msk [vmem:[%s285 + $0x8c] sm:$0xf] %vm2268, %v2231
        %s2305 = sand.u32 %s109, 1
        %s2306 = scalar_lea.sflag [#allocation3], %s2305
        %s2307 = sand.u32 %s109, 1
        %s2308 = smul.addr %s2307, 288
        %s2309 = scalar_lea.vmem [#allocation2], %s2308
        %s2310 = sand.u32 %s135, 1
        %s2311 = scalar_lea.sflag [#allocation5], %s2310
        %s2312 = sand.u32 %s135, 1
        %s2313 = smul.addr %s2312, 288
        %s2314 = scalar_lea.vmem [#allocation4], %s2313
        %p2315 = scmp.lt.s32.totalorder %s23, 1
        %s2316 = scalar_select %p2315, %s23, 1
        %s2317 = smul.addr %s2316, 36
        %s2318 = smul.addr %s2317, 4
        %s2319 = scalar_lea.vmem %s5, %s2318
        // Predicated region
        $region33: #{attention_forward.5} parent=31 // pred_check
          %p2320 = pneg %p119
        $region34: #{attention_forward.5} parent=31 // pred_check_branch
          %2322 = sbr.rel (%p2320) target = $region36
        $region35: #{attention_forward.5} parent=31 // pred_region
          %s2324 = ssub.s32 4608, 4608
          %2325 = vsyncadd %s2306, %s2324
          %s2326 = smul.addr %s23, 36
          %s2327 = smul.addr %s2326, 128
          %s2328 = scalar_lea.hbm %s3, %s2327
          %s2329 = sshll.u32 %s2309, 4
          %s2330 = int_to_ptr.vmem [resolvable:$true] %s2329
          %2335 = dma.vmem_to_hbm [thread:$0]  %s2330, 4608, %s2328, %s2306, 128, 128, 8
        $region36: #{attention_forward.5} parent=31 // pred_fallthru
          _
        // Predicated region
        $region37: #{attention_forward.5} parent=31 // pred_check
          %p2336 = pneg %p145
        $region38: #{attention_forward.5} parent=31 // pred_check_branch
          %2338 = sbr.rel (%p2336) target = $region40
        $region39: #{attention_forward.5} parent=31 // pred_region
          %s2340 = ssub.s32 4608, 4608
          %2341 = vsyncadd %s2311, %s2340
          %s2342 = smul.addr %s23, 36
          %s2343 = smul.addr %s2342, 128
          %s2344 = scalar_lea.hbm %s4, %s2343
          %s2345 = sshll.u32 %s2314, 4
          %s2346 = int_to_ptr.vmem [resolvable:$true] %s2345
          %2351 = dma.vmem_to_hbm [thread:$0]  %s2346, 4608, %s2344, %s2311, 128, 128, 8
        $region40: #{attention_forward.5} parent=31 // pred_fallthru
          _
        // Predicated region
        $region41: #{attention_forward.5} parent=31 // pred_check
          %p2352 = pneg %p171
        $region42: #{attention_forward.5} parent=31 // pred_check_branch
          %2354 = sbr.rel (%p2352) target = $region44
        $region43: #{attention_forward.5} parent=31 // pred_region
          _
        $region44: #{attention_forward.5} parent=31 // pred_fallthru
          _
      $region32: #{attention_forward.5} parent=5 // pred_fallthru
        _
      %p2355 = scmp.le.s32.totalorder 2, %s18
      // Predicated region
      $region45: #{attention_forward.5} parent=5 // pred_check
        %p2356 = pneg %p2355
      $region46: #{attention_forward.5} parent=5 // pred_check_branch
        %2358 = sbr.rel (%p2356) target = $region48
      $region47: #{attention_forward.5} parent=5 // pred_region
        %s2359 = ssub.s32 %s18, 2
        // Predicated region
        $region49: #{attention_forward.5} parent=47 // pred_check
          %p2360 = pneg %p125
        $region50: #{attention_forward.5} parent=47 // pred_check_branch
          %2362 = sbr.rel (%p2360) target = $region52
        $region51: #{attention_forward.5} parent=47 // pred_region
          %s2363 = sand.u32 %s110, 1
          %s2364 = scalar_lea.sflag [#allocation3], %s2363
          %s2365 = sand.u32 %s110, 1
          %s2366 = smul.addr %s2365, 288
          %s2367 = scalar_lea.vmem [#allocation2], %s2366
          %2368 = dma.done %s2364, 4608
        $region52: #{attention_forward.5} parent=47 // pred_fallthru
          _
        // Predicated region
        $region53: #{attention_forward.5} parent=47 // pred_check
          %p2369 = pneg %p151
        $region54: #{attention_forward.5} parent=47 // pred_check_branch
          %2371 = sbr.rel (%p2369) target = $region56
        $region55: #{attention_forward.5} parent=47 // pred_region
          %s2372 = sand.u32 %s136, 1
          %s2373 = scalar_lea.sflag [#allocation5], %s2372
          %s2374 = sand.u32 %s136, 1
          %s2375 = smul.addr %s2374, 288
          %s2376 = scalar_lea.vmem [#allocation4], %s2375
          %2377 = dma.done %s2373, 4608
        $region56: #{attention_forward.5} parent=47 // pred_fallthru
          _
        // Predicated region
        $region57: #{attention_forward.5} parent=47 // pred_check
          %p2378 = pneg %p177
        $region58: #{attention_forward.5} parent=47 // pred_check_branch
          %2380 = sbr.rel (%p2378) target = $region60
        $region59: #{attention_forward.5} parent=47 // pred_region
          %p2381 = scmp.lt.s32.totalorder %s24, 1
          %s2382 = scalar_select %p2381, %s24, 1
          %s2383 = smul.addr %s2382, 36
          %s2384 = smul.addr %s2383, 4
          %s2385 = scalar_lea.vmem %s5, %s2384
        $region60: #{attention_forward.5} parent=47 // pred_fallthru
          _
      $region48: #{attention_forward.5} parent=5 // pred_fallthru
        _
    $region6: #{attention_forward.5} parent=1 // loop_footer
      %s22 = sadd.s32 1, %s18
    $region7: #{attention_forward.5} parent=1 // loop_footer_branch
      %17 = sbr.rel target = $region3
    $region8: #{attention_forward.5} parent=1 // loop_exit
      _
    %2386 = vsyncpa [#allocation3], 1
    %s2387 = scalar_lea.sflag [#allocation3], 1
    %2388 = vsyncpa %s2387, 1
    %2389 = vsyncpa [#allocation5], 1
    %s2390 = scalar_lea.sflag [#allocation5], 1
    %2391 = vsyncpa %s2390, 1

// kernel: attention_forward.7
$region0: #{attention_forward.7}
  #allocation0 [shape = 'u32[]', space=smem, size = 0x4, offset = 0x4, fixed_abs, tag = 'smem constant byte address 0x4 - core index']
  #allocation1 [shape = 'u32[144,128]{1,0:T(1,128)}', space=vmem, size = 0x12000, scoped, tag = 'internal scratch']
  %s0 = inlined_call_operand.vmem [shape: bf16[128,32], index: 0, kind: input, shape index: {}]
  %s1 = inlined_call_operand.vmem [shape: bf16[16,32], index: 1, kind: input, shape index: {}]
  %s2 = inlined_call_operand.vmem [shape: bf16[16,64], index: 2, kind: input, shape index: {}]
  %s3 = inlined_call_operand.vmem [shape: bf16[32,32], index: 3, kind: input, shape index: {}]
  %s4 = inlined_call_operand.vmem [shape: f32[1,32], index: 4, kind: input, shape index: {}]
  %s5 = inlined_call_operand.vmem [shape: bf16[64,32], index: 5, kind: input, shape index: {}]
  %s6 = inlined_call_operand.vmem [shape: f32[1,32], index: 6, kind: input, shape index: {}]
  %s7 = inlined_call_operand.vmem [shape: f32[128,32], index: 7, kind: output, shape index: {0}]
  %s8 = inlined_call_operand.hbm [shape: f32[16,32], index: 8, kind: output, shape index: {1}]
  %9 = xla_tuple %s7, %s8
  %s10 = sld [smem:[#allocation0]]
  $region46: #{attention_forward.7} parent=0
    _
  %s12 = ssub.s32 1, %s10
  %s13 = scalar_select 0, %s12, %s10
  $region1: #{attention_forward.7} parent=0
    #allocation2 [shape = 'u8[8192]{0}', space=vmem, size = 0x2000, scoped, tag = 'output window, operand 1, single buffered']
    #allocation3 [shape = 's32[1]{0}', space=sflag, size = 0x4, scoped, tag = 'scoped memory for attention_forward.7']
    %14 = vsyncpa [#allocation3], 0
    // Predicated region
    $region2: #{attention_forward.7} parent=1 // pred_check
      _
    $region3: #{attention_forward.7} parent=1 // pred_check_branch
      %16 = sbr.rel (0) target = $region5
    $region4: #{attention_forward.7} parent=1 // pred_region
      _
    $region5: #{attention_forward.7} parent=1 // pred_fallthru
      _
    // Predicated region
    $region6: #{attention_forward.7} parent=1 // pred_check
      _
    $region7: #{attention_forward.7} parent=1 // pred_check_branch
      %18 = sbr.rel (0) target = $region9
    $region8: #{attention_forward.7} parent=1 // pred_region
      _
    $region9: #{attention_forward.7} parent=1 // pred_fallthru
      _
    // Predicated region
    $region10: #{attention_forward.7} parent=1 // pred_check
      _
    $region11: #{attention_forward.7} parent=1 // pred_check_branch
      %20 = sbr.rel (0) target = $region13
    $region12: #{attention_forward.7} parent=1 // pred_region
      _
    $region13: #{attention_forward.7} parent=1 // pred_fallthru
      _
    // Predicated region
    $region14: #{attention_forward.7} parent=1 // pred_check
      _
    $region15: #{attention_forward.7} parent=1 // pred_check_branch
      %22 = sbr.rel (0) target = $region17
    $region16: #{attention_forward.7} parent=1 // pred_region
      _
    $region17: #{attention_forward.7} parent=1 // pred_fallthru
      _
    // Predicated region
    $region18: #{attention_forward.7} parent=1 // pred_check
      _
    $region19: #{attention_forward.7} parent=1 // pred_check_branch
      %24 = sbr.rel (0) target = $region21
    $region20: #{attention_forward.7} parent=1 // pred_region
      _
    $region21: #{attention_forward.7} parent=1 // pred_fallthru
      _
    // Predicated region
    $region22: #{attention_forward.7} parent=1 // pred_check
      _
    $region23: #{attention_forward.7} parent=1 // pred_check_branch
      %26 = sbr.rel (0) target = $region25
    $region24: #{attention_forward.7} parent=1 // pred_region
      _
    $region25: #{attention_forward.7} parent=1 // pred_fallthru
      _
    // Predicated region
    $region26: #{attention_forward.7} parent=1 // pred_check
      _
    $region27: #{attention_forward.7} parent=1 // pred_check_branch
      %28 = sbr.rel (0) target = $region29
    $region28: #{attention_forward.7} parent=1 // pred_region
      _
    $region29: #{attention_forward.7} parent=1 // pred_fallthru
      _
    %v30 = vld [vmem:[%s3] sm:$0xf]
    %v31 = vld [vmem:[%s3 + $0x4] sm:$0xf]
    %v32 = vld [vmem:[%s3 + $0x8] sm:$0xf]
    %v33 = vld [vmem:[%s3 + $0xc] sm:$0xf]
    %v34 = vld [vmem:[%s4] sm:$0x1]
    %v35 = vld [vmem:[%s0] sm:$0xf]
    %v36 = vld [vmem:[%s0 + $0x4] sm:$0xf]
    %v37 = vld [vmem:[%s0 + $0x8] sm:$0xf]
    %v38 = vld [vmem:[%s0 + $0xc] sm:$0xf]
    %v39 = vld [vmem:[%s0 + $0x10] sm:$0xf]
    %v40 = vld [vmem:[%s0 + $0x14] sm:$0xf]
    %v41 = vld [vmem:[%s0 + $0x18] sm:$0xf]
    %v42 = vld [vmem:[%s0 + $0x1c] sm:$0xf]
    %v43 = vld [vmem:[%s0 + $0x20] sm:$0xf]
    %v44 = vld [vmem:[%s0 + $0x24] sm:$0xf]
    %v45 = vld [vmem:[%s0 + $0x28] sm:$0xf]
    %v46 = vld [vmem:[%s0 + $0x2c] sm:$0xf]
    %v47 = vld [vmem:[%s0 + $0x30] sm:$0xf]
    %v48 = vld [vmem:[%s0 + $0x34] sm:$0xf]
    %v49 = vld [vmem:[%s0 + $0x38] sm:$0xf]
    %v50 = vld [vmem:[%s0 + $0x3c] sm:$0xf]
    %v52 = vlaneseq
    %v53 = vshrl.u32 %v52, 7
    %v54 = vsub.s32 0, %v53
    %v55 = vrot.slane %v34, %v54
    %v73 = vunpack.c.l.b16 %v35
    %v74 = vunpack.c.l.b16 %v36
    %v75 = vunpack.c.l.b16 %v37
    %v76 = vunpack.c.l.b16 %v38
    %v77 = vunpack.c.l.b16 %v39
    %v78 = vunpack.c.l.b16 %v40
    %v79 = vunpack.c.l.b16 %v41
    %v80 = vunpack.c.l.b16 %v42
    %v81 = vunpack.c.l.b16 %v43
    %v82 = vunpack.c.l.b16 %v44
    %v83 = vunpack.c.l.b16 %v45
    %v84 = vunpack.c.l.b16 %v46
    %v85 = vunpack.c.l.b16 %v47
    %v86 = vunpack.c.l.b16 %v48
    %v87 = vunpack.c.l.b16 %v49
    %v88 = vunpack.c.l.b16 %v50
    %v89 = vpack.c.b16 %v74, %v73
    %v90 = vpack.c.b16 %v76, %v75
    %v91 = vpack.c.b16 %v78, %v77
    %v92 = vpack.c.b16 %v80, %v79
    %v93 = vpack.c.b16 %v82, %v81
    %v94 = vpack.c.b16 %v84, %v83
    %v95 = vpack.c.b16 %v86, %v85
    %v96 = vpack.c.b16 %v88, %v87
    %v101 = vunpack.c.l.b16 %v30
    %v102 = vunpack.c.l.b16 %v31
    %v103 = vunpack.c.l.b16 %v32
    %v104 = vunpack.c.l.b16 %v33
    %v105 = vpack.c.b16 %v102, %v101
    %v106 = vpack.c.b16 %v104, %v103
    %vm109 = vcmask 261120
    %v111 = vsel %vm109, %v89, 0
    %v114 = vsel %vm109, %v90, 0
    %v117 = vsel %vm109, %v91, 0
    %v120 = vsel %vm109, %v92, 0
    %v123 = vsel %vm109, %v93, 0
    %v126 = vsel %vm109, %v94, 0
    %v129 = vsel %vm109, %v95, 0
    %v132 = vsel %vm109, %v96, 0
    %134 = vmatprep.subr.bf16.mxu0 0
    %135 = vmatpush1.bf16.msra.mxu0 0
    %136 = vmatprep.subr.bf16.mxu0 0
    %137 = vmatpush1.bf16.msra.mxu0 0
    %138 = vmatprep.subr.bf16.mxu0 0
    %139 = vmatpush1.bf16.msra.mxu0 0
    %140 = vmatprep.subr.bf16.mxu0 0
    %141 = vmatpush1.bf16.msra.mxu0 0
    %142 = vmatprep.subr.bf16.mxu0 0
    %143 = vmatpush1.bf16.msra.mxu0 0
    %144 = vmatprep.subr.bf16.mxu0 0
    %145 = vmatpush1.bf16.msra.mxu0 0
    %146 = vmatprep.subr.bf16.mxu0 0
    %147 = vmatpush1.bf16.msra.mxu0 %v106
    %148 = vmatprep.subr.bf16.mxu0 0
    %149 = vmatpush1.bf16.msra.mxu0 %v105
    %150 = vmatprep.subr.bf16.mxu0 0
    %151 = vmatpush2.bf16.msra.mxu0 0
    %152 = vmatprep.subr.bf16.mxu0 0
    %153 = vmatpush2.bf16.msra.mxu0 0
    %154 = vmatprep.subr.bf16.mxu0 0
    %155 = vmatpush2.bf16.msra.mxu0 0
    %156 = vmatprep.subr.bf16.mxu0 0
    %157 = vmatpush2.bf16.msra.mxu0 0
    %158 = vmatprep.subr.bf16.mxu0 0
    %159 = vmatpush2.bf16.msra.mxu0 0
    %160 = vmatprep.subr.bf16.mxu0 0
    %161 = vmatpush2.bf16.msra.mxu0 0
    %162 = vmatprep.subr.bf16.mxu0 0
    %163 = vmatpush2.bf16.msra.mxu0 0
    %164 = vmatprep.subr.bf16.mxu0 0
    %165 = vmatpush2.bf16.msra.mxu0 0
    %166 = vmatprep.mubr.bf16.mxu0 0
    %167 = vmatmul.mubr.bf16.gmra.mxu0 %v111
    %v168 = vpop.f32.mrf.mxu0
    %v169 = vadd.f32 %v55, %v168
    %v170 = vpop.f32.mrf.mxu0
    %v171 = vpop.f32.mrf.mxu0
    %v172 = vadd.f32 %v55, %v171
    %v173 = vpop.f32.mrf.mxu0
    %174 = vmatprep.mubr.bf16.mxu0 0
    %175 = vmatmul.mubr.bf16.gmra.mxu0 %v114
    %v176 = vpop.f32.mrf.mxu0
    %v177 = vadd.f32 %v55, %v176
    %v178 = vpop.f32.mrf.mxu0
    %v179 = vpop.f32.mrf.mxu0
    %v180 = vadd.f32 %v55, %v179
    %v181 = vpop.f32.mrf.mxu0
    %182 = vmatprep.mubr.bf16.mxu0 0
    %183 = vmatmul.mubr.bf16.gmra.mxu0 %v117
    %v184 = vpop.f32.mrf.mxu0
    %v185 = vadd.f32 %v55, %v184
    %v186 = vpop.f32.mrf.mxu0
    %v187 = vpop.f32.mrf.mxu0
    %v188 = vadd.f32 %v55, %v187
    %v189 = vpop.f32.mrf.mxu0
    %190 = vmatprep.mubr.bf16.mxu0 0
    %191 = vmatmul.mubr.bf16.gmra.mxu0 %v120
    %v192 = vpop.f32.mrf.mxu0
    %v193 = vadd.f32 %v55, %v192
    %v194 = vpop.f32.mrf.mxu0
    %v195 = vpop.f32.mrf.mxu0
    %v196 = vadd.f32 %v55, %v195
    %v197 = vpop.f32.mrf.mxu0
    %198 = vmatprep.mubr.bf16.mxu0 0
    %199 = vmatmul.mubr.bf16.gmra.mxu0 %v123
    %v200 = vpop.f32.mrf.mxu0
    %v201 = vadd.f32 %v55, %v200
    %v202 = vpop.f32.mrf.mxu0
    %v203 = vpop.f32.mrf.mxu0
    %v204 = vadd.f32 %v55, %v203
    %v205 = vpop.f32.mrf.mxu0
    %206 = vmatprep.mubr.bf16.mxu0 0
    %207 = vmatmul.mubr.bf16.gmra.mxu0 %v126
    %v208 = vpop.f32.mrf.mxu0
    %v209 = vadd.f32 %v55, %v208
    %v210 = vpop.f32.mrf.mxu0
    %v211 = vpop.f32.mrf.mxu0
    %v212 = vadd.f32 %v55, %v211
    %v213 = vpop.f32.mrf.mxu0
    %214 = vmatprep.mubr.bf16.mxu0 0
    %215 = vmatmul.mubr.bf16.gmra.mxu0 %v129
    %v216 = vpop.f32.mrf.mxu0
    %v217 = vadd.f32 %v55, %v216
    %v218 = vpop.f32.mrf.mxu0
    %v219 = vpop.f32.mrf.mxu0
    %v220 = vadd.f32 %v55, %v219
    %v221 = vpop.f32.mrf.mxu0
    %222 = vmatprep.mubr.bf16.mxu0 0
    %223 = vmatmul.mubr.bf16.gmra.mxu0 %v132
    %v224 = vpop.f32.mrf.mxu0
    %v225 = vadd.f32 %v55, %v224
    %v226 = vpop.f32.mrf.mxu0
    %v227 = vpop.f32.mrf.mxu0
    %v228 = vadd.f32 %v55, %v227
    %v229 = vpop.f32.mrf.mxu0
    %230 = vdwg.mxu0
    %231 = vst.msk [vmem:[%s7] sm:$0xff] %vm109, %v169
    %232 = vst.msk [vmem:[%s7 + $0x8] sm:$0xff] %vm109, %v172
    %233 = vst.msk [vmem:[%s7 + $0x10] sm:$0xff] %vm109, %v177
    %234 = vst.msk [vmem:[%s7 + $0x18] sm:$0xff] %vm109, %v180
    %235 = vst.msk [vmem:[%s7 + $0x20] sm:$0xff] %vm109, %v185
    %236 = vst.msk [vmem:[%s7 + $0x28] sm:$0xff] %vm109, %v188
    %237 = vst.msk [vmem:[%s7 + $0x30] sm:$0xff] %vm109, %v193
    %238 = vst.msk [vmem:[%s7 + $0x38] sm:$0xff] %vm109, %v196
    %239 = vst.msk [vmem:[%s7 + $0x40] sm:$0xff] %vm109, %v201
    %240 = vst.msk [vmem:[%s7 + $0x48] sm:$0xff] %vm109, %v204
    %241 = vst.msk [vmem:[%s7 + $0x50] sm:$0xff] %vm109, %v209
    %242 = vst.msk [vmem:[%s7 + $0x58] sm:$0xff] %vm109, %v212
    %243 = vst.msk [vmem:[%s7 + $0x60] sm:$0xff] %vm109, %v217
    %244 = vst.msk [vmem:[%s7 + $0x68] sm:$0xff] %vm109, %v220
    %245 = vst.msk [vmem:[%s7 + $0x70] sm:$0xff] %vm109, %v225
    %246 = vst.msk [vmem:[%s7 + $0x78] sm:$0xff] %vm109, %v228
    %v247 = vld [vmem:[%s1] sm:$0xf]
    %v248 = vld [vmem:[%s1 + $0x4] sm:$0xf]
    %v251 = vunpack.c.l.b16 %v247
    %v252 = vunpack.c.l.b16 %v248
    %v253 = vpack.c.b16 %v252, %v251
    %v255 = vsel %vm109, %v253, 0
    %257 = vmatprep.subr.bf16.mxu0 0
    %258 = vmatpush1.bf16.msra.mxu0 0
    %259 = vmatprep.subr.bf16.mxu0 0
    %260 = vmatpush1.bf16.msra.mxu0 0
    %261 = vmatprep.subr.bf16.mxu0 0
    %262 = vmatpush1.bf16.msra.mxu0 0
    %263 = vmatprep.subr.bf16.mxu0 0
    %264 = vmatpush1.bf16.msra.mxu0 0
    %265 = vmatprep.subr.bf16.mxu0 0
    %266 = vmatpush1.bf16.msra.mxu0 0
    %267 = vmatprep.subr.bf16.mxu0 0
    %268 = vmatpush1.bf16.msra.mxu0 0
    %269 = vmatprep.subr.bf16.mxu0 0
    %270 = vmatpush1.bf16.msra.mxu0 %v106
    %271 = vmatprep.subr.bf16.mxu0 0
    %272 = vmatpush1.bf16.msra.mxu0 %v105
    %273 = vmatprep.subr.bf16.mxu0 0
    %274 = vmatpush2.bf16.msra.mxu0 0
    %275 = vmatprep.subr.bf16.mxu0 0
    %276 = vmatpush2.bf16.msra.mxu0 0
    %277 = vmatprep.subr.bf16.mxu0 0
    %278 = vmatpush2.bf16.msra.mxu0 0
    %279 = vmatprep.subr.bf16.mxu0 0
    %280 = vmatpush2.bf16.msra.mxu0 0
    %281 = vmatprep.subr.bf16.mxu0 0
    %282 = vmatpush2.bf16.msra.mxu0 0
    %283 = vmatprep.subr.bf16.mxu0 0
    %284 = vmatpush2.bf16.msra.mxu0 0
    %285 = vmatprep.subr.bf16.mxu0 0
    %286 = vmatpush2.bf16.msra.mxu0 0
    %287 = vmatprep.subr.bf16.mxu0 0
    %288 = vmatpush2.bf16.msra.mxu0 0
    %289 = vmatprep.mubr.bf16.mxu0 0
    %290 = vmatmul.mubr.bf16.gmra.mxu0 %v255
    %v291 = vpop.f32.mrf.mxu0
    %v292 = vadd.f32 %v55, %v291
    %v293 = vpop.f32.mrf.mxu0
    %v294 = vpop.f32.mrf.mxu0
    %v295 = vadd.f32 %v55, %v294
    %v296 = vpop.f32.mrf.mxu0
    %297 = vdwg.mxu0
    %v298 = vld [vmem:[%s2] sm:$0xf]
    %v299 = vld [vmem:[%s2 + $0x4] sm:$0xf]
    %v300 = vld [vmem:[%s5] sm:$0xf]
    %v301 = vld [vmem:[%s5 + $0x4] sm:$0xf]
    %v302 = vld [vmem:[%s5 + $0x8] sm:$0xf]
    %v303 = vld [vmem:[%s5 + $0xc] sm:$0xf]
    %v304 = vld [vmem:[%s5 + $0x10] sm:$0xf]
    %v305 = vld [vmem:[%s5 + $0x14] sm:$0xf]
    %v306 = vld [vmem:[%s5 + $0x18] sm:$0xf]
    %v307 = vld [vmem:[%s5 + $0x1c] sm:$0xf]
    %v308 = vld [vmem:[%s6] sm:$0x1]
    %v310 = vlaneseq
    %v311 = vshrl.u32 %v310, 7
    %v312 = vsub.s32 0, %v311
    %v313 = vrot.slane %v308, %v312
    %v317 = vunpack.c.l.b16 %v298
    %v318 = vunpack.c.l.b16 %v299
    %v319 = vpack.c.b16 %v318, %v317
    %v328 = vunpack.c.l.b16 %v300
    %v329 = vunpack.c.l.b16 %v301
    %v330 = vunpack.c.l.b16 %v302
    %v331 = vunpack.c.l.b16 %v303
    %v332 = vunpack.c.l.b16 %v304
    %v333 = vunpack.c.l.b16 %v305
    %v334 = vunpack.c.l.b16 %v306
    %v335 = vunpack.c.l.b16 %v307
    %v336 = vpack.c.b16 %v329, %v328
    %v337 = vpack.c.b16 %v331, %v330
    %v338 = vpack.c.b16 %v333, %v332
    %v339 = vpack.c.b16 %v335, %v334
    %vm344 = vcmask 523264
    %v346 = vsel %vm344, %v319, 0
    %348 = vmatprep.subr.bf16.mxu0 0
    %349 = vmatpush1.bf16.msra.mxu0 0
    %350 = vmatprep.subr.bf16.mxu0 0
    %351 = vmatpush1.bf16.msra.mxu0 0
    %352 = vmatprep.subr.bf16.mxu0 0
    %353 = vmatpush1.bf16.msra.mxu0 0
    %354 = vmatprep.subr.bf16.mxu0 0
    %355 = vmatpush1.bf16.msra.mxu0 0
    %356 = vmatprep.subr.bf16.mxu0 0
    %357 = vmatpush1.bf16.msra.mxu0 %v339
    %358 = vmatprep.subr.bf16.mxu0 0
    %359 = vmatpush1.bf16.msra.mxu0 %v338
    %360 = vmatprep.subr.bf16.mxu0 0
    %361 = vmatpush1.bf16.msra.mxu0 %v337
    %362 = vmatprep.subr.bf16.mxu0 0
    %363 = vmatpush1.bf16.msra.mxu0 %v336
    %364 = vmatprep.subr.bf16.mxu0 0
    %365 = vmatpush2.bf16.msra.mxu0 0
    %366 = vmatprep.subr.bf16.mxu0 0
    %367 = vmatpush2.bf16.msra.mxu0 0
    %368 = vmatprep.subr.bf16.mxu0 0
    %369 = vmatpush2.bf16.msra.mxu0 0
    %370 = vmatprep.subr.bf16.mxu0 0
    %371 = vmatpush2.bf16.msra.mxu0 0
    %372 = vmatprep.subr.bf16.mxu0 0
    %373 = vmatpush2.bf16.msra.mxu0 0
    %374 = vmatprep.subr.bf16.mxu0 0
    %375 = vmatpush2.bf16.msra.mxu0 0
    %376 = vmatprep.subr.bf16.mxu0 0
    %377 = vmatpush2.bf16.msra.mxu0 0
    %378 = vmatprep.subr.bf16.mxu0 0
    %379 = vmatpush2.bf16.msra.mxu0 0
    %380 = vmatprep.mubr.bf16.mxu0 0
    %381 = vmatmul.mubr.bf16.gmra.mxu0 %v346
    %v382 = vpop.f32.mrf.mxu0
    %v383 = vadd.f32 %v313, %v382
    %v384 = vpop.f32.mrf.mxu0
    %v385 = vpop.f32.mrf.mxu0
    %v386 = vadd.f32 %v313, %v385
    %v387 = vpop.f32.mrf.mxu0
    %388 = vdwg.mxu0
    %v389 = vadd.f32 %v292, %v383
    %v390 = vadd.f32 %v295, %v386
    %391 = vst.msk [vmem:[#allocation2] sm:$0xff] %vm109, %v389
    %392 = vst.msk [vmem:[#allocation2 + $0x8] sm:$0xff] %vm109, %v390
    // Predicated region
    $region30: #{attention_forward.7} parent=1 // pred_check
      _
    $region31: #{attention_forward.7} parent=1 // pred_check_branch
      %394 = sbr.rel (0) target = $region33
    $region32: #{attention_forward.7} parent=1 // pred_region
      _
    $region33: #{attention_forward.7} parent=1 // pred_fallthru
      _
    // Predicated region
    $region34: #{attention_forward.7} parent=1 // pred_check
      _
    $region35: #{attention_forward.7} parent=1 // pred_check_branch
      %396 = sbr.rel (0) target = $region37
    $region36: #{attention_forward.7} parent=1 // pred_region
      %s398 = ssub.s32 256, 256
      %399 = vsyncadd [#allocation3], %s398
      %s400 = sshll.u32 [#allocation2], 4
      %s401 = int_to_ptr.vmem [resolvable:$true] %s400
      %406 = dma.vmem_to_hbm [thread:$0]  %s401, 256, %s8, [#allocation3], 128, 128, 8
    $region37: #{attention_forward.7} parent=1 // pred_fallthru
      _
    // Predicated region
    $region38: #{attention_forward.7} parent=1 // pred_check
      _
    $region39: #{attention_forward.7} parent=1 // pred_check_branch
      %408 = sbr.rel (0) target = $region41
    $region40: #{attention_forward.7} parent=1 // pred_region
      _
    $region41: #{attention_forward.7} parent=1 // pred_fallthru
      _
    // Predicated region
    $region42: #{attention_forward.7} parent=1 // pred_check
      _
    $region43: #{attention_forward.7} parent=1 // pred_check_branch
      %410 = sbr.rel (0) target = $region45
    $region44: #{attention_forward.7} parent=1 // pred_region
      %411 = dma.done [#allocation3], 256
    $region45: #{attention_forward.7} parent=1 // pred_fallthru
      _
    %412 = vsyncpa [#allocation3], 1

// kernel: attention_forward.6
$region0: #{attention_forward.6}
  #allocation0 [shape = 'u32[]', space=smem, size = 0x4, offset = 0x4, fixed_abs, tag = 'smem constant byte address 0x4 - core index']
  #allocation1 [shape = 'u32[144,128]{1,0:T(1,128)}', space=vmem, size = 0x12000, scoped, tag = 'internal scratch']
  %s0 = inlined_call_operand.vmem [shape: f32[2,4,8,16], index: 0, kind: input, shape index: {}]
  %s1 = inlined_call_operand.vmem [shape: f32[2,4,32,16], index: 1, kind: input, shape index: {}]
  %s2 = inlined_call_operand.vmem [shape: f32[2,4,8,32], index: 2, kind: output, shape index: {0}]
  %s3 = inlined_call_operand.vmem [shape: f32[2,4,8,32], index: 3, kind: output, shape index: {1}]
  %4 = xla_tuple %s2, %s3
  %s5 = sld [smem:[#allocation0]]
  $region49: #{attention_forward.6} parent=0
    _
  %s7 = ssub.s32 1, %s5
  %s8 = scalar_select 0, %s7, %s5
  loop: start=0, step=1, limit=4
  $region2: #{attention_forward.6} parent=0 // loop_pre_header
    _
  $region3: #{attention_forward.6} parent=0 // loop_header
    %s10 = sphi 0, %s14
    %p11 = scmp.ge.s32.totalorder %s10, 4
    %s20 = sphi 0, %s22
    %s23 = sphi 0, %s20
    %s24 = sphi 0, %s23
    %s40 = sphi 0, %s24
    %s46 = sphi 0, %s48
    %s49 = sphi 0, %s46
    %s50 = sphi 0, %s49
    %s66 = sphi 0, %s50
    %s72 = sphi 0, %s74
    %s75 = sphi 0, %s72
    %s76 = sphi 0, %s75
    %s92 = sphi 0, %s76
    %s98 = sphi 0, %s100
    %s101 = sphi 0, %s98
    %s102 = sphi 0, %s101
    %s118 = sphi 0, %s102
  $region4: #{attention_forward.6} parent=0 // loop_header_branch
    %13 = sbr.rel (%p11) target = $region8
  $region5: #{attention_forward.6} parent=0 // loop_body
    %s15 = ssub.s32 %s10, 1
    %s16 = ssub.s32 %s10, 2
    %s17 = sadd.s32 %s10, 1
    %s18 = ssub.s32 %s10, %s17
    %p19 = scmp.eq.s32.totalorder %s18, 0
    %s21 = sadd.s32 %s20, 1
    %s22 = scalar_select %p19, %s20, %s21
    %p25 = pneg %p19
    %p26 = scmp.eq.s32.totalorder %s10, 1
    %p27 = por %p25, %p26
    %p28 = scmp.ne.s32.totalorder %s20, %s23
    %p29 = scmp.eq.s32.totalorder %s10, 0
    %p30 = por %p28, %p29
    %p31 = scmp.ne.s32.totalorder %s20, %s23
    %p32 = scmp.eq.s32.totalorder %s15, 1
    %p33 = por %p31, %p32
    %p34 = scmp.ne.s32.totalorder %s23, %s24
    %p35 = scmp.eq.s32.totalorder %s15, 0
    %p36 = por %p34, %p35
    %p37 = scmp.ne.s32.totalorder %s23, %s24
    %p38 = scmp.eq.s32.totalorder %s16, 1
    %p39 = por %p37, %p38
    %p41 = scmp.ne.s32.totalorder %s24, %s40
    %p42 = scmp.eq.s32.totalorder %s16, 0
    %p43 = por %p41, %p42
    %s44 = ssub.s32 %s10, %s17
    %p45 = scmp.eq.s32.totalorder %s44, 0
    %s47 = sadd.s32 %s46, 1
    %s48 = scalar_select %p45, %s46, %s47
    %p51 = pneg %p45
    %p52 = scmp.eq.s32.totalorder %s10, 1
    %p53 = por %p51, %p52
    %p54 = scmp.ne.s32.totalorder %s46, %s49
    %p55 = scmp.eq.s32.totalorder %s10, 0
    %p56 = por %p54, %p55
    %p57 = scmp.ne.s32.totalorder %s46, %s49
    %p58 = scmp.eq.s32.totalorder %s15, 1
    %p59 = por %p57, %p58
    %p60 = scmp.ne.s32.totalorder %s49, %s50
    %p61 = scmp.eq.s32.totalorder %s15, 0
    %p62 = por %p60, %p61
    %p63 = scmp.ne.s32.totalorder %s49, %s50
    %p64 = scmp.eq.s32.totalorder %s16, 1
    %p65 = por %p63, %p64
    %p67 = scmp.ne.s32.totalorder %s50, %s66
    %p68 = scmp.eq.s32.totalorder %s16, 0
    %p69 = por %p67, %p68
    %s70 = ssub.s32 %s10, %s17
    %p71 = scmp.eq.s32.totalorder %s70, 0
    %s73 = sadd.s32 %s72, 1
    %s74 = scalar_select %p71, %s72, %s73
    %p77 = pneg %p71
    %p78 = scmp.eq.s32.totalorder %s10, 1
    %p79 = por %p77, %p78
    %p80 = scmp.ne.s32.totalorder %s72, %s75
    %p81 = scmp.eq.s32.totalorder %s10, 0
    %p82 = por %p80, %p81
    %p83 = scmp.ne.s32.totalorder %s72, %s75
    %p84 = scmp.eq.s32.totalorder %s15, 1
    %p85 = por %p83, %p84
    %p86 = scmp.ne.s32.totalorder %s75, %s76
    %p87 = scmp.eq.s32.totalorder %s15, 0
    %p88 = por %p86, %p87
    %p89 = scmp.ne.s32.totalorder %s75, %s76
    %p90 = scmp.eq.s32.totalorder %s16, 1
    %p91 = por %p89, %p90
    %p93 = scmp.ne.s32.totalorder %s76, %s92
    %p94 = scmp.eq.s32.totalorder %s16, 0
    %p95 = por %p93, %p94
    %s96 = ssub.s32 %s10, %s17
    %p97 = scmp.eq.s32.totalorder %s96, 0
    %s99 = sadd.s32 %s98, 1
    %s100 = scalar_select %p97, %s98, %s99
    %p103 = pneg %p97
    %p104 = scmp.eq.s32.totalorder %s10, 1
    %p105 = por %p103, %p104
    %p106 = scmp.ne.s32.totalorder %s98, %s101
    %p107 = scmp.eq.s32.totalorder %s10, 0
    %p108 = por %p106, %p107
    %p109 = scmp.ne.s32.totalorder %s98, %s101
    %p110 = scmp.eq.s32.totalorder %s15, 1
    %p111 = por %p109, %p110
    %p112 = scmp.ne.s32.totalorder %s101, %s102
    %p113 = scmp.eq.s32.totalorder %s15, 0
    %p114 = por %p112, %p113
    %p115 = scmp.ne.s32.totalorder %s101, %s102
    %p116 = scmp.eq.s32.totalorder %s16, 1
    %p117 = por %p115, %p116
    %p119 = scmp.ne.s32.totalorder %s102, %s118
    %p120 = scmp.eq.s32.totalorder %s16, 0
    %p121 = por %p119, %p120
    %p122 = scmp.le.s32.totalorder 1, %s10
    %p123 = scmp.lt.s32.totalorder %s10, 3
    %p124 = pnand %p122, %p123
    %p125 = pneg %p124
    // Predicated region
    $region9: #{attention_forward.6} parent=5 // pred_check
      _
    $region10: #{attention_forward.6} parent=5 // pred_check_branch
      %127 = sbr.rel (%p124) target = $region12
    $region11: #{attention_forward.6} parent=5 // pred_region
      %s128 = ssub.s32 %s10, 1
    $region12: #{attention_forward.6} parent=5 // pred_fallthru
      _
    %p129 = scmp.lt.s32.totalorder %s10, 2
    // Predicated region
    $region13: #{attention_forward.6} parent=5 // pred_check
      %p130 = pneg %p129
    $region14: #{attention_forward.6} parent=5 // pred_check_branch
      %132 = sbr.rel (%p130) target = $region16
    $region15: #{attention_forward.6} parent=5 // pred_region
      // Predicated region
      $region17: #{attention_forward.6} parent=15 // pred_check
        %p133 = pneg %p30
      $region18: #{attention_forward.6} parent=15 // pred_check_branch
        %135 = sbr.rel (%p133) target = $region20
      $region19: #{attention_forward.6} parent=15 // pred_region
        %p136 = scmp.lt.s32.totalorder %s10, 1
        %s137 = scalar_select %p136, %s10, 1
        %s138 = smul.addr %s137, 4
        %s139 = smul.addr %s138, 8
        %s140 = scalar_lea.vmem %s0, %s139
      $region20: #{attention_forward.6} parent=15 // pred_fallthru
        _
      // Predicated region
      $region21: #{attention_forward.6} parent=15 // pred_check
        %p141 = pneg %p56
      $region22: #{attention_forward.6} parent=15 // pred_check_branch
        %143 = sbr.rel (%p141) target = $region24
      $region23: #{attention_forward.6} parent=15 // pred_region
        %p144 = scmp.lt.s32.totalorder %s10, 1
        %s145 = scalar_select %p144, %s10, 1
        %s146 = smul.addr %s145, 16
        %s147 = smul.addr %s146, 8
        %s148 = scalar_lea.vmem %s1, %s147
      $region24: #{attention_forward.6} parent=15 // pred_fallthru
        _
    $region16: #{attention_forward.6} parent=5 // pred_fallthru
      _
    %p149 = scmp.le.s32.totalorder 1, %s10
    %p150 = scmp.lt.s32.totalorder %s10, 3
    %p151 = pnand %p149, %p150
    %p152 = pneg %p151
    // Predicated region
    $region25: #{attention_forward.6} parent=5 // pred_check
      _
    $region26: #{attention_forward.6} parent=5 // pred_check_branch
      %154 = sbr.rel (%p151) target = $region28
    $region27: #{attention_forward.6} parent=5 // pred_region
      %s155 = ssub.s32 %s10, 1
      %p156 = scmp.lt.s32.totalorder %s15, 1
      %s157 = scalar_select %p156, %s15, 1
      %s158 = smul.addr %s157, 4
      %s159 = smul.addr %s158, 8
      %s160 = scalar_lea.vmem %s0, %s159
      %p161 = pneg %p36
      %p162 = pneg %p33
      %p163 = scmp.lt.s32.totalorder %s15, 1
      %s164 = scalar_select %p163, %s15, 1
      %s165 = smul.addr %s164, 16
      %s166 = smul.addr %s165, 8
      %s167 = scalar_lea.vmem %s1, %s166
      %p168 = pneg %p62
      %p169 = pneg %p59
      %p170 = pneg %p88
      %p171 = pneg %p85
      %p172 = scmp.lt.s32.totalorder %s15, 1
      %s173 = scalar_select %p172, %s15, 1
      %s174 = smul.addr %s173, 4
      %s175 = smul.addr %s174, 8
      %s176 = scalar_lea.vmem %s2, %s175
      %p177 = pneg %p114
      %p178 = pneg %p111
      %p179 = scmp.lt.s32.totalorder %s15, 1
      %s180 = scalar_select %p179, %s15, 1
      %s181 = smul.addr %s180, 4
      %s182 = smul.addr %s181, 8
      %s183 = scalar_lea.vmem %s3, %s182
      %p184 = scmp.lt.s32.totalorder %s15, 1
      %s185 = scalar_select %p184, %s15, 1
      %s186 = smul.addr %s185, 4
      %s187 = smul.addr %s186, 8
      %s188 = scalar_lea.vmem %s0, %s187
      %p189 = scmp.lt.s32.totalorder %s15, 1
      %s190 = scalar_select %p189, %s15, 1
      %s191 = smul.addr %s190, 16
      %s192 = smul.addr %s191, 8
      %s193 = scalar_lea.vmem %s1, %s192
      %p194 = scmp.lt.s32.totalorder %s15, 1
      %s195 = scalar_select %p194, %s15, 1
      %s196 = smul.addr %s195, 4
      %s197 = smul.addr %s196, 8
      %s198 = scalar_lea.vmem %s2, %s197
      %p199 = scmp.lt.s32.totalorder %s15, 1
      %s200 = scalar_select %p199, %s15, 1
      %s201 = smul.addr %s200, 4
      %s202 = smul.addr %s201, 8
      %s203 = scalar_lea.vmem %s3, %s202
      %v204 = vld [vmem:[%s188] sm:$0xff]
      %v205 = vld [vmem:[%s188 + $0x8] sm:$0xff]
      %v206 = vld [vmem:[%s188 + $0x10] sm:$0xff]
      %v207 = vld [vmem:[%s188 + $0x18] sm:$0xff]
      %v208 = vld [vmem:[%s193] sm:$0xff]
      %v209 = vld [vmem:[%s193 + $0x8] sm:$0xff]
      %v210 = vld [vmem:[%s193 + $0x10] sm:$0xff]
      %v211 = vld [vmem:[%s193 + $0x18] sm:$0xff]
      %v212 = vld [vmem:[%s193 + $0x20] sm:$0xff]
      %v213 = vld [vmem:[%s193 + $0x28] sm:$0xff]
      %v214 = vld [vmem:[%s193 + $0x30] sm:$0xff]
      %v215 = vld [vmem:[%s193 + $0x38] sm:$0xff]
      %v216 = vld [vmem:[%s193 + $0x40] sm:$0xff]
      %v217 = vld [vmem:[%s193 + $0x48] sm:$0xff]
      %v218 = vld [vmem:[%s193 + $0x50] sm:$0xff]
      %v219 = vld [vmem:[%s193 + $0x58] sm:$0xff]
      %v220 = vld [vmem:[%s193 + $0x60] sm:$0xff]
      %v221 = vld [vmem:[%s193 + $0x68] sm:$0xff]
      %v222 = vld [vmem:[%s193 + $0x70] sm:$0xff]
      %v223 = vld [vmem:[%s193 + $0x78] sm:$0xff]
      %vm224 = vcmask 130048
      %v226 = vsel %vm224, %v204, 0
      %v229 = vsel %vm224, %v208, 0
      %v232 = vsel %vm224, %v209, 0
      %v235 = vsel %vm224, %v210, 0
      %v238 = vsel %vm224, %v211, 0
      %240 = vmatprep.subr.mxu0 0.0
      %241 = vmatpush1.xpose.msra.mxu0 0.0
      %242 = vmatprep.subr.mxu0 0.0
      %243 = vmatpush1.xpose.msra.mxu0 0.0
      %244 = vmatprep.subr.mxu0 0.0
      %245 = vmatpush1.xpose.msra.mxu0 0.0
      %246 = vmatprep.subr.mxu0 0.0
      %247 = vmatpush1.xpose.msra.mxu0 0.0
      %248 = vmatprep.subr.mxu0 0.0
      %249 = vmatpush1.xpose.msra.mxu0 0.0
      %250 = vmatprep.subr.mxu0 0.0
      %251 = vmatpush1.xpose.msra.mxu0 0.0
      %252 = vmatprep.subr.mxu0 0.0
      %253 = vmatpush1.xpose.msra.mxu0 0.0
      %254 = vmatprep.subr.mxu0 0.0
      %255 = vmatpush1.xpose.msra.mxu0 0.0
      %256 = vmatprep.subr.mxu0 0.0
      %257 = vmatpush1.xpose.msra.mxu0 0.0
      %258 = vmatprep.subr.mxu0 0.0
      %259 = vmatpush1.xpose.msra.mxu0 0.0
      %260 = vmatprep.subr.mxu0 0.0
      %261 = vmatpush1.xpose.msra.mxu0 0.0
      %262 = vmatprep.subr.mxu0 0.0
      %263 = vmatpush1.xpose.msra.mxu0 0.0
      %264 = vmatprep.subr.mxu0 0.0
      %265 = vmatpush1.xpose.msra.mxu0 %v238
      %266 = vmatprep.subr.mxu0 0.0
      %267 = vmatpush1.xpose.msra.mxu0 %v235
      %268 = vmatprep.subr.mxu0 0.0
      %269 = vmatpush1.xpose.msra.mxu0 %v232
      %270 = vmatprep.subr.mxu0 0.0
      %271 = vmatpush1.xpose.msra.mxu0 %v229
      %272 = vmatprep.subr.mxu0 0.0
      %273 = vmatpush2.xpose.msra.mxu0 0.0
      %274 = vmatprep.subr.mxu0 0.0
      %275 = vmatpush2.xpose.msra.mxu0 0.0
      %276 = vmatprep.subr.mxu0 0.0
      %277 = vmatpush2.xpose.msra.mxu0 0.0
      %278 = vmatprep.subr.mxu0 0.0
      %279 = vmatpush2.xpose.msra.mxu0 0.0
      %280 = vmatprep.subr.mxu0 0.0
      %281 = vmatpush2.xpose.msra.mxu0 0.0
      %282 = vmatprep.subr.mxu0 0.0
      %283 = vmatpush2.xpose.msra.mxu0 0.0
      %284 = vmatprep.subr.mxu0 0.0
      %285 = vmatpush2.xpose.msra.mxu0 0.0
      %286 = vmatprep.subr.mxu0 0.0
      %287 = vmatpush2.xpose.msra.mxu0 0.0
      %288 = vmatprep.subr.mxu0 0.0
      %289 = vmatpush2.xpose.msra.mxu0 0.0
      %290 = vmatprep.subr.mxu0 0.0
      %291 = vmatpush2.xpose.msra.mxu0 0.0
      %292 = vmatprep.subr.mxu0 0.0
      %293 = vmatpush2.xpose.msra.mxu0 0.0
      %294 = vmatprep.subr.mxu0 0.0
      %295 = vmatpush2.xpose.msra.mxu0 0.0
      %296 = vmatprep.subr.mxu0 0.0
      %297 = vmatpush2.xpose.msra.mxu0 0.0
      %298 = vmatprep.subr.mxu0 0.0
      %299 = vmatpush2.xpose.msra.mxu0 0.0
      %300 = vmatprep.subr.mxu0 0.0
      %301 = vmatpush2.xpose.msra.mxu0 0.0
      %302 = vmatprep.subr.mxu0 0.0
      %303 = vmatpush2.xpose.msra.mxu0 0.0
      %304 = vmatprep.mubr.f32.mxu0 0.0
      %305 = vmatmul.mubr.f32.gmra.mxu0 %v226
      %v306 = vpop.f32.mrf.mxu0
      %v307 = vadd.f32 0.0, %v306
      %v308 = vpop.f32.mrf.mxu0
      %309 = vdwg.mxu0
      %v311 = vsel %vm224, %v205, 0
      %v314 = vsel %vm224, %v212, 0
      %v317 = vsel %vm224, %v213, 0
      %v320 = vsel %vm224, %v214, 0
      %v323 = vsel %vm224, %v215, 0
      %325 = vmatprep.subr.mxu0 0.0
      %326 = vmatpush1.xpose.msra.mxu0 0.0
      %327 = vmatprep.subr.mxu0 0.0
      %328 = vmatpush1.xpose.msra.mxu0 0.0
      %329 = vmatprep.subr.mxu0 0.0
      %330 = vmatpush1.xpose.msra.mxu0 0.0
      %331 = vmatprep.subr.mxu0 0.0
      %332 = vmatpush1.xpose.msra.mxu0 0.0
      %333 = vmatprep.subr.mxu0 0.0
      %334 = vmatpush1.xpose.msra.mxu0 0.0
      %335 = vmatprep.subr.mxu0 0.0
      %336 = vmatpush1.xpose.msra.mxu0 0.0
      %337 = vmatprep.subr.mxu0 0.0
      %338 = vmatpush1.xpose.msra.mxu0 0.0
      %339 = vmatprep.subr.mxu0 0.0
      %340 = vmatpush1.xpose.msra.mxu0 0.0
      %341 = vmatprep.subr.mxu0 0.0
      %342 = vmatpush1.xpose.msra.mxu0 0.0
      %343 = vmatprep.subr.mxu0 0.0
      %344 = vmatpush1.xpose.msra.mxu0 0.0
      %345 = vmatprep.subr.mxu0 0.0
      %346 = vmatpush1.xpose.msra.mxu0 0.0
      %347 = vmatprep.subr.mxu0 0.0
      %348 = vmatpush1.xpose.msra.mxu0 0.0
      %349 = vmatprep.subr.mxu0 0.0
      %350 = vmatpush1.xpose.msra.mxu0 %v323
      %351 = vmatprep.subr.mxu0 0.0
      %352 = vmatpush1.xpose.msra.mxu0 %v320
      %353 = vmatprep.subr.mxu0 0.0
      %354 = vmatpush1.xpose.msra.mxu0 %v317
      %355 = vmatprep.subr.mxu0 0.0
      %356 = vmatpush1.xpose.msra.mxu0 %v314
      %357 = vmatprep.subr.mxu0 0.0
      %358 = vmatpush2.xpose.msra.mxu0 0.0
      %359 = vmatprep.subr.mxu0 0.0
      %360 = vmatpush2.xpose.msra.mxu0 0.0
      %361 = vmatprep.subr.mxu0 0.0
      %362 = vmatpush2.xpose.msra.mxu0 0.0
      %363 = vmatprep.subr.mxu0 0.0
      %364 = vmatpush2.xpose.msra.mxu0 0.0
      %365 = vmatprep.subr.mxu0 0.0
      %366 = vmatpush2.xpose.msra.mxu0 0.0
      %367 = vmatprep.subr.mxu0 0.0
      %368 = vmatpush2.xpose.msra.mxu0 0.0
      %369 = vmatprep.subr.mxu0 0.0
      %370 = vmatpush2.xpose.msra.mxu0 0.0
      %371 = vmatprep.subr.mxu0 0.0
      %372 = vmatpush2.xpose.msra.mxu0 0.0
      %373 = vmatprep.subr.mxu0 0.0
      %374 = vmatpush2.xpose.msra.mxu0 0.0
      %375 = vmatprep.subr.mxu0 0.0
      %376 = vmatpush2.xpose.msra.mxu0 0.0
      %377 = vmatprep.subr.mxu0 0.0
      %378 = vmatpush2.xpose.msra.mxu0 0.0
      %379 = vmatprep.subr.mxu0 0.0
      %380 = vmatpush2.xpose.msra.mxu0 0.0
      %381 = vmatprep.subr.mxu0 0.0
      %382 = vmatpush2.xpose.msra.mxu0 0.0
      %383 = vmatprep.subr.mxu0 0.0
      %384 = vmatpush2.xpose.msra.mxu0 0.0
      %385 = vmatprep.subr.mxu0 0.0
      %386 = vmatpush2.xpose.msra.mxu0 0.0
      %387 = vmatprep.subr.mxu0 0.0
      %388 = vmatpush2.xpose.msra.mxu0 0.0
      %389 = vmatprep.mubr.f32.mxu0 0.0
      %390 = vmatmul.mubr.f32.gmra.mxu0 %v311
      %v391 = vpop.f32.mrf.mxu0
      %v392 = vadd.f32 0.0, %v391
      %v393 = vpop.f32.mrf.mxu0
      %394 = vdwg.mxu0
      %v396 = vsel %vm224, %v206, 0
      %v399 = vsel %vm224, %v216, 0
      %v402 = vsel %vm224, %v217, 0
      %v405 = vsel %vm224, %v218, 0
      %v408 = vsel %vm224, %v219, 0
      %410 = vmatprep.subr.mxu0 0.0
      %411 = vmatpush1.xpose.msra.mxu0 0.0
      %412 = vmatprep.subr.mxu0 0.0
      %413 = vmatpush1.xpose.msra.mxu0 0.0
      %414 = vmatprep.subr.mxu0 0.0
      %415 = vmatpush1.xpose.msra.mxu0 0.0
      %416 = vmatprep.subr.mxu0 0.0
      %417 = vmatpush1.xpose.msra.mxu0 0.0
      %418 = vmatprep.subr.mxu0 0.0
      %419 = vmatpush1.xpose.msra.mxu0 0.0
      %420 = vmatprep.subr.mxu0 0.0
      %421 = vmatpush1.xpose.msra.mxu0 0.0
      %422 = vmatprep.subr.mxu0 0.0
      %423 = vmatpush1.xpose.msra.mxu0 0.0
      %424 = vmatprep.subr.mxu0 0.0
      %425 = vmatpush1.xpose.msra.mxu0 0.0
      %426 = vmatprep.subr.mxu0 0.0
      %427 = vmatpush1.xpose.msra.mxu0 0.0
      %428 = vmatprep.subr.mxu0 0.0
      %429 = vmatpush1.xpose.msra.mxu0 0.0
      %430 = vmatprep.subr.mxu0 0.0
      %431 = vmatpush1.xpose.msra.mxu0 0.0
      %432 = vmatprep.subr.mxu0 0.0
      %433 = vmatpush1.xpose.msra.mxu0 0.0
      %434 = vmatprep.subr.mxu0 0.0
      %435 = vmatpush1.xpose.msra.mxu0 %v408
      %436 = vmatprep.subr.mxu0 0.0
      %437 = vmatpush1.xpose.msra.mxu0 %v405
      %438 = vmatprep.subr.mxu0 0.0
      %439 = vmatpush1.xpose.msra.mxu0 %v402
      %440 = vmatprep.subr.mxu0 0.0
      %441 = vmatpush1.xpose.msra.mxu0 %v399
      %442 = vmatprep.subr.mxu0 0.0
      %443 = vmatpush2.xpose.msra.mxu0 0.0
      %444 = vmatprep.subr.mxu0 0.0
      %445 = vmatpush2.xpose.msra.mxu0 0.0
      %446 = vmatprep.subr.mxu0 0.0
      %447 = vmatpush2.xpose.msra.mxu0 0.0
      %448 = vmatprep.subr.mxu0 0.0
      %449 = vmatpush2.xpose.msra.mxu0 0.0
      %450 = vmatprep.subr.mxu0 0.0
      %451 = vmatpush2.xpose.msra.mxu0 0.0
      %452 = vmatprep.subr.mxu0 0.0
      %453 = vmatpush2.xpose.msra.mxu0 0.0
      %454 = vmatprep.subr.mxu0 0.0
      %455 = vmatpush2.xpose.msra.mxu0 0.0
      %456 = vmatprep.subr.mxu0 0.0
      %457 = vmatpush2.xpose.msra.mxu0 0.0
      %458 = vmatprep.subr.mxu0 0.0
      %459 = vmatpush2.xpose.msra.mxu0 0.0
      %460 = vmatprep.subr.mxu0 0.0
      %461 = vmatpush2.xpose.msra.mxu0 0.0
      %462 = vmatprep.subr.mxu0 0.0
      %463 = vmatpush2.xpose.msra.mxu0 0.0
      %464 = vmatprep.subr.mxu0 0.0
      %465 = vmatpush2.xpose.msra.mxu0 0.0
      %466 = vmatprep.subr.mxu0 0.0
      %467 = vmatpush2.xpose.msra.mxu0 0.0
      %468 = vmatprep.subr.mxu0 0.0
      %469 = vmatpush2.xpose.msra.mxu0 0.0
      %470 = vmatprep.subr.mxu0 0.0
      %471 = vmatpush2.xpose.msra.mxu0 0.0
      %472 = vmatprep.subr.mxu0 0.0
      %473 = vmatpush2.xpose.msra.mxu0 0.0
      %474 = vmatprep.mubr.f32.mxu0 0.0
      %475 = vmatmul.mubr.f32.gmra.mxu0 %v396
      %v476 = vpop.f32.mrf.mxu0
      %v477 = vadd.f32 0.0, %v476
      %v478 = vpop.f32.mrf.mxu0
      %479 = vdwg.mxu0
      %v481 = vsel %vm224, %v207, 0
      %v484 = vsel %vm224, %v220, 0
      %v487 = vsel %vm224, %v221, 0
      %v490 = vsel %vm224, %v222, 0
      %v493 = vsel %vm224, %v223, 0
      %495 = vmatprep.subr.mxu0 0.0
      %496 = vmatpush1.xpose.msra.mxu0 0.0
      %497 = vmatprep.subr.mxu0 0.0
      %498 = vmatpush1.xpose.msra.mxu0 0.0
      %499 = vmatprep.subr.mxu0 0.0
      %500 = vmatpush1.xpose.msra.mxu0 0.0
      %501 = vmatprep.subr.mxu0 0.0
      %502 = vmatpush1.xpose.msra.mxu0 0.0
      %503 = vmatprep.subr.mxu0 0.0
      %504 = vmatpush1.xpose.msra.mxu0 0.0
      %505 = vmatprep.subr.mxu0 0.0
      %506 = vmatpush1.xpose.msra.mxu0 0.0
      %507 = vmatprep.subr.mxu0 0.0
      %508 = vmatpush1.xpose.msra.mxu0 0.0
      %509 = vmatprep.subr.mxu0 0.0
      %510 = vmatpush1.xpose.msra.mxu0 0.0
      %511 = vmatprep.subr.mxu0 0.0
      %512 = vmatpush1.xpose.msra.mxu0 0.0
      %513 = vmatprep.subr.mxu0 0.0
      %514 = vmatpush1.xpose.msra.mxu0 0.0
      %515 = vmatprep.subr.mxu0 0.0
      %516 = vmatpush1.xpose.msra.mxu0 0.0
      %517 = vmatprep.subr.mxu0 0.0
      %518 = vmatpush1.xpose.msra.mxu0 0.0
      %519 = vmatprep.subr.mxu0 0.0
      %520 = vmatpush1.xpose.msra.mxu0 %v493
      %521 = vmatprep.subr.mxu0 0.0
      %522 = vmatpush1.xpose.msra.mxu0 %v490
      %523 = vmatprep.subr.mxu0 0.0
      %524 = vmatpush1.xpose.msra.mxu0 %v487
      %525 = vmatprep.subr.mxu0 0.0
      %526 = vmatpush1.xpose.msra.mxu0 %v484
      %527 = vmatprep.subr.mxu0 0.0
      %528 = vmatpush2.xpose.msra.mxu0 0.0
      %529 = vmatprep.subr.mxu0 0.0
      %530 = vmatpush2.xpose.msra.mxu0 0.0
      %531 = vmatprep.subr.mxu0 0.0
      %532 = vmatpush2.xpose.msra.mxu0 0.0
      %533 = vmatprep.subr.mxu0 0.0
      %534 = vmatpush2.xpose.msra.mxu0 0.0
      %535 = vmatprep.subr.mxu0 0.0
      %536 = vmatpush2.xpose.msra.mxu0 0.0
      %537 = vmatprep.subr.mxu0 0.0
      %538 = vmatpush2.xpose.msra.mxu0 0.0
      %539 = vmatprep.subr.mxu0 0.0
      %540 = vmatpush2.xpose.msra.mxu0 0.0
      %541 = vmatprep.subr.mxu0 0.0
      %542 = vmatpush2.xpose.msra.mxu0 0.0
      %543 = vmatprep.subr.mxu0 0.0
      %544 = vmatpush2.xpose.msra.mxu0 0.0
      %545 = vmatprep.subr.mxu0 0.0
      %546 = vmatpush2.xpose.msra.mxu0 0.0
      %547 = vmatprep.subr.mxu0 0.0
      %548 = vmatpush2.xpose.msra.mxu0 0.0
      %549 = vmatprep.subr.mxu0 0.0
      %550 = vmatpush2.xpose.msra.mxu0 0.0
      %551 = vmatprep.subr.mxu0 0.0
      %552 = vmatpush2.xpose.msra.mxu0 0.0
      %553 = vmatprep.subr.mxu0 0.0
      %554 = vmatpush2.xpose.msra.mxu0 0.0
      %555 = vmatprep.subr.mxu0 0.0
      %556 = vmatpush2.xpose.msra.mxu0 0.0
      %557 = vmatprep.subr.mxu0 0.0
      %558 = vmatpush2.xpose.msra.mxu0 0.0
      %559 = vmatprep.mubr.f32.mxu0 0.0
      %560 = vmatmul.mubr.f32.gmra.mxu0 %v481
      %v561 = vpop.f32.mrf.mxu0
      %v562 = vadd.f32 0.0, %v561
      %v563 = vpop.f32.mrf.mxu0
      %564 = vdwg.mxu0
      %vm565 = vcmask 261120
      %566 = vst.msk [vmem:[%s198] sm:$0xff] %vm565, %v307
      %567 = vst.msk [vmem:[%s198 + $0x8] sm:$0xff] %vm565, %v392
      %568 = vst.msk [vmem:[%s198 + $0x10] sm:$0xff] %vm565, %v477
      %569 = vst.msk [vmem:[%s198 + $0x18] sm:$0xff] %vm565, %v562
      %v570 = vmul.f32 %v307, 0.25
      %v571 = vmul.f32 %v392, 0.25
      %v572 = vmul.f32 %v477, 0.25
      %v573 = vmul.f32 %v562, 0.25
      %v574 = vsel %vm565, %v570, -inf
      %575 = vmax.xlane.f32.xlu0 %v574
      %v576 = vpop.xlane.xlu0 %575
      %v577 = vsel %vm565, %v571, -inf
      %578 = vmax.xlane.f32.xlu0 %v577
      %v579 = vpop.xlane.xlu0 %578
      %v580 = vsel %vm565, %v572, -inf
      %581 = vmax.xlane.f32.xlu0 %v580
      %v582 = vpop.xlane.xlu0 %581
      %v583 = vsel %vm565, %v573, -inf
      %584 = vmax.xlane.f32.xlu0 %v583
      %v585 = vpop.xlane.xlu0 %584
      %v586 = vsub.f32 %v570, %v576
      %v587 = vsub.f32 %v571, %v579
      %v588 = vsub.f32 %v572, %v582
      %v589 = vsub.f32 %v573, %v585
      %v590 = vmul.f32 %v586, 1.442695
      %v591 = vpow.pop %v590
      %v592 = vmul.f32 %v587, 1.442695
      %v593 = vpow.pop %v592
      %v594 = vmul.f32 %v588, 1.442695
      %v595 = vpow.pop %v594
      %v596 = vmul.f32 %v589, 1.442695
      %v597 = vpow.pop %v596
      %v598 = vsel %vm565, %v591, 0.0
      %599 = vadd.xlane.f32.xlu0 %v598
      %v600 = vpop.xlane.xlu0 %599
      %v601 = vsel %vm565, %v593, 0.0
      %602 = vadd.xlane.f32.xlu0 %v601
      %v603 = vpop.xlane.xlu0 %602
      %v604 = vsel %vm565, %v595, 0.0
      %605 = vadd.xlane.f32.xlu0 %v604
      %v606 = vpop.xlane.xlu0 %605
      %v607 = vsel %vm565, %v597, 0.0
      %608 = vadd.xlane.f32.xlu0 %v607
      %v609 = vpop.xlane.xlu0 %608
      %v610 = vrcp.pop %v600
      %v611 = vrcp.pop %v603
      %v612 = vrcp.pop %v606
      %v613 = vrcp.pop %v609
      %v614 = vmul.f32 %v591, %v610
      %v615 = vmul.f32 %v593, %v611
      %v616 = vmul.f32 %v595, %v612
      %v617 = vmul.f32 %v597, %v613
      %618 = vst.msk [vmem:[%s203] sm:$0xff] %vm565, %v614
      %619 = vst.msk [vmem:[%s203 + $0x8] sm:$0xff] %vm565, %v615
      %620 = vst.msk [vmem:[%s203 + $0x10] sm:$0xff] %vm565, %v616
      %621 = vst.msk [vmem:[%s203 + $0x18] sm:$0xff] %vm565, %v617
      %p622 = scmp.lt.s32.totalorder %s15, 1
      %s623 = scalar_select %p622, %s15, 1
      %s624 = smul.addr %s623, 4
      %s625 = smul.addr %s624, 8
      %s626 = scalar_lea.vmem %s2, %s625
      %p627 = scmp.lt.s32.totalorder %s15, 1
      %s628 = scalar_select %p627, %s15, 1
      %s629 = smul.addr %s628, 4
      %s630 = smul.addr %s629, 8
      %s631 = scalar_lea.vmem %s3, %s630
      // Predicated region
      $region29: #{attention_forward.6} parent=27 // pred_check
        %p632 = pneg %p85
      $region30: #{attention_forward.6} parent=27 // pred_check_branch
        %634 = sbr.rel (%p632) target = $region32
      $region31: #{attention_forward.6} parent=27 // pred_region
        _
      $region32: #{attention_forward.6} parent=27 // pred_fallthru
        _
      // Predicated region
      $region33: #{attention_forward.6} parent=27 // pred_check
        %p635 = pneg %p111
      $region34: #{attention_forward.6} parent=27 // pred_check_branch
        %637 = sbr.rel (%p635) target = $region36
      $region35: #{attention_forward.6} parent=27 // pred_region
        _
      $region36: #{attention_forward.6} parent=27 // pred_fallthru
        _
    $region28: #{attention_forward.6} parent=5 // pred_fallthru
      _
    %p638 = scmp.le.s32.totalorder 2, %s10
    // Predicated region
    $region37: #{attention_forward.6} parent=5 // pred_check
      %p639 = pneg %p638
    $region38: #{attention_forward.6} parent=5 // pred_check_branch
      %641 = sbr.rel (%p639) target = $region40
    $region39: #{attention_forward.6} parent=5 // pred_region
      %s642 = ssub.s32 %s10, 2
      // Predicated region
      $region41: #{attention_forward.6} parent=39 // pred_check
        %p643 = pneg %p91
      $region42: #{attention_forward.6} parent=39 // pred_check_branch
        %645 = sbr.rel (%p643) target = $region44
      $region43: #{attention_forward.6} parent=39 // pred_region
        %p646 = scmp.lt.s32.totalorder %s16, 1
        %s647 = scalar_select %p646, %s16, 1
        %s648 = smul.addr %s647, 4
        %s649 = smul.addr %s648, 8
        %s650 = scalar_lea.vmem %s2, %s649
      $region44: #{attention_forward.6} parent=39 // pred_fallthru
        _
      // Predicated region
      $region45: #{attention_forward.6} parent=39 // pred_check
        %p651 = pneg %p117
      $region46: #{attention_forward.6} parent=39 // pred_check_branch
        %653 = sbr.rel (%p651) target = $region48
      $region47: #{attention_forward.6} parent=39 // pred_region
        %p654 = scmp.lt.s32.totalorder %s16, 1
        %s655 = scalar_select %p654, %s16, 1
        %s656 = smul.addr %s655, 4
        %s657 = smul.addr %s656, 8
        %s658 = scalar_lea.vmem %s3, %s657
      $region48: #{attention_forward.6} parent=39 // pred_fallthru
        _
    $region40: #{attention_forward.6} parent=5 // pred_fallthru
      _
  $region6: #{attention_forward.6} parent=0 // loop_footer
    %s14 = sadd.s32 1, %s10
  $region7: #{attention_forward.6} parent=0 // loop_footer_branch
    %9 = sbr.rel target = $region3
  $region8: #{attention_forward.6} parent=0 // loop_exit
    _

</llo_original>
